<compile_context>
chip_gen: v6e
topology: v6e:2x2x1
jax: 0.10.0
libtpu: 0.0.40
codegen_flags: <defaults>
</compile_context>

<pallas_src>
import functools

import jax
import jax.numpy as jnp
from jax.experimental import pallas as pl
from jax.experimental.pallas import tpu as pltpu

EMBED_DIM = 256      # embed_dim
VISION_FEAT = 2048   # vision_proj in_features (timm backbone output dim)
TEXT_HIDDEN = 768    # text_proj in_features (DistilBERT hidden size)
TEMP = 0.01          # default temp
CYLAMBDA_1 = 0.25    # CyCLIP in-modal weight
CYLAMBDA_2 = 0.25    # CyCLIP cross-modal weight
EPS = 1e-12          # F.normalize eps


def _pick_tk():
    """Tile along the 2048-dim backbone/hidden axis, chosen per generation."""
    try:
        cap = pltpu.get_tpu_info().vmem_capacity_bytes
    except Exception:
        cap = None
    # v7x (64 MiB VMEM/TC, ~3.2 TB/s HBM): grid-step overhead dominates the
    # weight stream -> single-step grid with the full weights resident.
    if cap is not None and cap <= 64 * 1024 * 1024:
        return VISION_FEAT
    # v5e/v6e: 2 steps so the second weight DMA overlaps step-0 MXU work.
    return VISION_FEAT // 2


def _vmem_limit_bytes(b, chw, seq_len, tk):
    """Scoped-VMEM limit derived from the actual buffer footprint (+2x headroom)."""
    bf16, f32 = 2, 4
    resident = (b * chw * bf16                       # x
                + VISION_FEAT * f32                  # b_backbone (kt, tk)
                + EMBED_DIM * f32                    # b_vis_proj
                + b * seq_len * TEXT_HIDDEN * bf16   # token_emb
                + b * seq_len * f32                  # attention_mask
                + TEXT_HIDDEN * EMBED_DIM * bf16     # w_txt_proj
                + EMBED_DIM * f32                    # b_txt_proj
                + 2 * b * EMBED_DIM * f32)           # acc + txt scratch
    streamed = 2 * (chw * tk * bf16 + tk * EMBED_DIM * bf16)  # double-buffered
    return int(min(max(2 * (resident + streamed), 8 << 20), 40 << 20))


# ---------------------------------------------------------------------------
# Fused kernel: vision tower (streamed) + text tower (step 0) -> CyCLIP loss
# ---------------------------------------------------------------------------
def clip_fused_kernel(x_ref, wb_ref, bb_ref, wp_ref, bp_ref,
                      emb_ref, mask_ref, wt_ref, bt_ref,
                      loss_ref, acc_ref, txt_ref, *, temp, lam1, lam2):
    j = pl.program_id(0)

    @pl.when(j == 0)
    def _init_and_text():
        acc_ref[...] = jnp.zeros_like(acc_ref)

        # ---- text tower, run once at step 0 so it overlaps the weight stream --
        # TODO(synk): pretrained DistilBertModel replaced by attention-masked mean
        # pooling of token embeddings standing in for last_hidden_state[:, 0, :].
        emb = emb_ref[...].astype(jnp.float32)                        # (B, L, 768)
        mask = mask_ref[...]                                          # (B, L)
        msum = jnp.sum(emb * mask[:, :, None], axis=1)                # (B, 768)
        denom = jnp.maximum(jnp.sum(mask, axis=1, keepdims=True), 1.0)
        pooled = (msum / denom).astype(jnp.bfloat16)
        e_t = jnp.dot(pooled, wt_ref[...],
                      preferred_element_type=jnp.float32) + bt_ref[...]
        inv_nt = jax.lax.rsqrt(
            jnp.maximum(jnp.sum(e_t * e_t, axis=-1, keepdims=True), EPS * EPS))
        txt_ref[...] = e_t * inv_nt       # text_feat = F.normalize(text_proj(.))

    # ---- vision tower, streamed over the 2048-dim hidden axis ----
    # TODO(synk): pretrained timm visual encoder replaced by flatten+Linear+ReLU
    # producing the 2048-dim features that vision_proj expects.
    h = jnp.dot(x_ref[...], wb_ref[...],                # (B,CHW)bf16 @ (CHW,TK)bf16
                preferred_element_type=jnp.float32)
    bias_tile = bb_ref[pl.ds(j, 1), :]                  # (1, TK) resident slice
    h = jnp.maximum(h + bias_tile, 0.0)                 # ReLU, (B, TK) f32
    # vision_proj partial sum over the hidden axis (this grid axis = reduction)
    acc_ref[...] += jnp.dot(h.astype(jnp.bfloat16), wp_ref[...],
                            preferred_element_type=jnp.float32)

    @pl.when(j == pl.num_programs(0) - 1)
    def _loss():
        # image_feat = F.normalize(vision_proj(backbone(x)), dim=-1)
        e_i = acc_ref[...] + bp_ref[...]                              # (B, 256)
        inv_ni = jax.lax.rsqrt(
            jnp.maximum(jnp.sum(e_i * e_i, axis=-1, keepdims=True), EPS * EPS))
        img = e_i * inv_ni                                            # == e / max(||e||, eps)
        txt = txt_ref[...]                                            # (B, 256)

        # ---- CyCLIP loss ----
        bsz = img.shape[0]
        inv_t = 1.0 / temp
        img_b = img.astype(jnp.bfloat16)                              # bf16 operands,
        txt_b = txt.astype(jnp.bfloat16)                              # f32 accumulation
        contract = (((1,), (1,)), ((), ()))                           # A @ B.T
        sim_it = jax.lax.dot_general(img_b, txt_b, contract,          # unscaled (B,B)
                                     preferred_element_type=jnp.float32)
        sim_ii = jax.lax.dot_general(img_b, img_b, contract,
                                     preferred_element_type=jnp.float32)
        sim_tt = jax.lax.dot_general(txt_b, txt_b, contract,
                                     preferred_element_type=jnp.float32)
        logits = sim_it * inv_t                                       # sim_it / temp

        # diagonal directly from the feature vectors (no BxB eye / iota)
        diag = jnp.sum(img * txt, axis=-1, keepdims=True) * inv_t     # (B, 1)

        # CE(sim_it, arange) uses row-wise logsumexp; CE(sim_ti, arange) uses the
        # column-wise logsumexp of the SAME matrix (sim_ti == sim_it.T) -> one
        # fewer BxB matmul than the reference, numerically identical.
        m_r = jnp.max(logits, axis=1, keepdims=True)
        lse_r = m_r + jnp.log(jnp.sum(jnp.exp(logits - m_r), axis=1, keepdims=True))
        m_c = jnp.max(logits, axis=0, keepdims=True)
        lse_c = m_c + jnp.log(jnp.sum(jnp.exp(logits - m_c), axis=0, keepdims=True))
        contrastive = 0.5 * (jnp.mean(lse_r) + jnp.mean(lse_c)) - jnp.mean(diag)

        # cyclic terms on UNSCALED similarities: the reference's temp**2 factor
        # cancels the 1/temp**2 of its scaled logits, so this is exact.
        inmodal = jnp.mean((sim_ii - sim_tt) ** 2) * float(bsz)
        crossmodal = jnp.mean((sim_it - sim_it.T) ** 2) * float(bsz)

        loss_ref[0, 0] = contrastive + lam1 * inmodal + lam2 * crossmodal


def clip_forward(x_flat, token_emb, attention_mask, params, *, temp):
    b, chw = x_flat.shape
    seq_len = token_emb.shape[1]
    tk = _pick_tk()
    kt = VISION_FEAT // tk
    # full backbone bias resident as (kt, tk); row j = bias for hidden slice j
    b_backbone = params["b_backbone"].reshape(kt, tk)

    kernel = functools.partial(clip_fused_kernel, temp=temp,
                               lam1=CYLAMBDA_1, lam2=CYLAMBDA_2)
    loss = pl.pallas_call(
        kernel,
        out_shape=jax.ShapeDtypeStruct((1, 1), jnp.float32),
        grid_spec=pltpu.PrefetchScalarGridSpec(
            num_scalar_prefetch=0,
            grid=(kt,),
            in_specs=[
                pl.BlockSpec((b, chw), lambda j: (0, 0)),               # x, resident
                pl.BlockSpec((chw, tk), lambda j: (0, j)),              # w_backbone, streamed
                pl.BlockSpec((kt, tk), lambda j: (0, 0)),               # b_backbone, resident
                pl.BlockSpec((tk, EMBED_DIM), lambda j: (j, 0)),        # w_vis_proj, streamed
                pl.BlockSpec((1, EMBED_DIM), lambda j: (0, 0)),         # b_vis_proj, resident
                pl.BlockSpec((b, seq_len, TEXT_HIDDEN), lambda j: (0, 0, 0)),  # token_emb (bf16)
                pl.BlockSpec((b, seq_len), lambda j: (0, 0)),           # attention_mask
                pl.BlockSpec((TEXT_HIDDEN, EMBED_DIM), lambda j: (0, 0)),      # w_txt_proj
                pl.BlockSpec((1, EMBED_DIM), lambda j: (0, 0)),         # b_txt_proj
            ],
            out_specs=pl.BlockSpec(memory_space=pltpu.MemorySpace.SMEM),  # scalar loss
            scratch_shapes=[pltpu.VMEM((b, EMBED_DIM), jnp.float32),      # vision_proj acc
                            pltpu.VMEM((b, EMBED_DIM), jnp.float32)],     # text_feat
        ),
        compiler_params=pltpu.CompilerParams(
            dimension_semantics=("arbitrary",),   # reduction axis (accumulator)
            vmem_limit_bytes=_vmem_limit_bytes(b, chw, seq_len, tk),
        ),
    )(x_flat,
      params["w_backbone"], b_backbone,
      params["w_vis_proj"], params["b_vis_proj"],
      token_emb, attention_mask,
      params["w_txt_proj"], params["b_txt_proj"])
    return loss[0, 0]


# ---------------------------------------------------------------------------
# CLIP module (ita_type='cyclip', learnable_temp=False)
# ---------------------------------------------------------------------------
class CLIPPallas:
    def __init__(self, key, image_flat_dim, vocab_size,
                 embed_dim=EMBED_DIM, temp=TEMP):
        ks = jax.random.split(key, 4)

        def linear(k, fan_in, fan_out):
            bound = 1.0 / float(fan_in) ** 0.5
            kw, kb = jax.random.split(k)
            w = jax.random.uniform(kw, (fan_in, fan_out), jnp.float32, -bound, bound)
            b = jax.random.uniform(kb, (1, fan_out), jnp.float32, -bound, bound)
            # weights streamed as bf16 (MXU-native, half the HBM bytes); f32 biases
            return w.astype(jnp.bfloat16), b

        self.params = {}
        # backbone stub (stands in for timm encoder -> 2048)
        self.params["w_backbone"], self.params["b_backbone"] = linear(
            ks[0], image_flat_dim, VISION_FEAT)
        # vision_proj = nn.Linear(2048, embed_dim)
        self.params["w_vis_proj"], self.params["b_vis_proj"] = linear(
            ks[1], VISION_FEAT, embed_dim)
        # token embedding table (stands in for DistilBERT embeddings), bf16
        self.params["emb_table"] = (
            jax.random.normal(ks[2], (vocab_size, TEXT_HIDDEN), jnp.float32) * 0.02
        ).astype(jnp.bfloat16)
        # text_proj = nn.Linear(768, embed_dim)
        self.params["w_txt_proj"], self.params["b_txt_proj"] = linear(
            ks[3], TEXT_HIDDEN, embed_dim)
        self.temp = temp
        # learnable_temp=False by default -> no image_temp/text_temp parameters.

    def __call__(self, image, input_ids, attention_mask,
                 idx=None, text_idx=None, epoch=0):
        b = image.shape[0]
        # glue: NCHW -> (B, C*H*W) row-major flatten; bf16 feeds the bf16 MXU path
        x_flat = image.reshape(b, -1).astype(jnp.bfloat16)
        # glue: embedding lookup (gather) for the text-encoder stub.  Left in XLA:
        # negligible HBM traffic at this L; at CLIP-scale L move it in-kernel via
        # a PrefetchScalarGridSpec row gather.
        token_emb = self.params["emb_table"][input_ids]               # (B, L, 768) bf16
        # ita_type == 'cyclip'  (idx / text_idx / epoch unused on this path)
        return clip_forward(x_flat, token_emb,
                            attention_mask.astype(jnp.float32),
                            self.params, temp=self.temp)


if __name__ == "__main__":
    key = jax.random.PRNGKey(0)
    k_model, k_img, k_ids, k_idx = jax.random.split(key, 4)

    B, C, H, W = 8, 4, 16, 16
    L, VOCAB = 8, 512

    model = CLIPPallas(k_model, image_flat_dim=C * H * W, vocab_size=VOCAB)

    image = jax.random.normal(k_img, (B, C, H, W), jnp.float32)       # NCHW
    input_ids = jax.random.randint(k_ids, (B, L), 0, VOCAB, jnp.int32)
    attention_mask = jnp.ones((B, L), jnp.int32)
    idx = jnp.arange(B, dtype=jnp.int32)
    text_idx = jnp.arange(B, dtype=jnp.int32)

    loss = model(image, input_ids, attention_mask, idx, text_idx, epoch=0)
    loss = jax.block_until_ready(loss)
    assert loss.shape == () and jnp.isfinite(loss)
    print("KERNEL_OK")
</pallas_src>

<mosaic_0001>
module attributes {stable_mosaic.version = 11 : i64} {
  func.func @clip_fused_kernel(%arg0: i32, %arg1: memref<8x1024xbf16, #tpu.memory_space<vmem>>, %arg2: memref<1024x1024xbf16, #tpu.memory_space<vmem>>, %arg3: memref<2x1024xf32, #tpu.memory_space<vmem>>, %arg4: memref<1024x256xbf16, #tpu.memory_space<vmem>>, %arg5: memref<1x256xf32, #tpu.memory_space<vmem>>, %arg6: memref<8x8x768xbf16, #tpu.memory_space<vmem>>, %arg7: memref<8x8xf32, #tpu.memory_space<vmem>>, %arg8: memref<768x256xbf16, #tpu.memory_space<vmem>>, %arg9: memref<1x256xf32, #tpu.memory_space<vmem>>, %arg10: memref<1x1xf32, #tpu.memory_space<smem>>, %arg11: memref<8x256xf32, #tpu.memory_space<vmem>>, %arg12: memref<8x256xf32, #tpu.memory_space<vmem>>) attributes {dimension_semantics = [#tpu.dimension_semantics<arbitrary>], iteration_bounds = array<i64: 2>, scalar_prefetch = 0 : i64, scratch_operands = 2 : i64, tpu.core_type = #tpu.core_type<tc>, window_params = [{pipeline_mode = #tpu.pipeline_mode<synchronous>, transform_indices = @transform_0, window_bounds = array<i64: 8, 1024>}, {transform_indices = @transform_1, window_bounds = array<i64: 1024, 1024>}, {pipeline_mode = #tpu.pipeline_mode<synchronous>, transform_indices = @transform_2, window_bounds = array<i64: 2, 1024>}, {transform_indices = @transform_3, window_bounds = array<i64: 1024, 256>}, {pipeline_mode = #tpu.pipeline_mode<synchronous>, transform_indices = @transform_4, window_bounds = array<i64: 1, 256>}, {pipeline_mode = #tpu.pipeline_mode<synchronous>, transform_indices = @transform_5, window_bounds = array<i64: 8, 8, 768>}, {pipeline_mode = #tpu.pipeline_mode<synchronous>, transform_indices = @transform_6, window_bounds = array<i64: 8, 8>}, {pipeline_mode = #tpu.pipeline_mode<synchronous>, transform_indices = @transform_7, window_bounds = array<i64: 768, 256>}, {pipeline_mode = #tpu.pipeline_mode<synchronous>, transform_indices = @transform_8, window_bounds = array<i64: 1, 256>}, {transform_indices = @transform_9, window_bounds = array<i64: 1, 1>}]} {
    %c0_i32 = arith.constant 0 : i32
    %0 = arith.cmpi eq, %arg0, %c0_i32 : i32
    %1 = arith.extui %0 : i1 to i32
    %c0_i32_0 = arith.constant 0 : i32
    %2 = arith.cmpi ne, %1, %c0_i32_0 : i32
    scf.if %2 {
      %cst_14 = arith.constant 0.000000e+00 : f32
      %21 = vector.broadcast %cst_14 : f32 to vector<8x256xf32>
      %c0_15 = arith.constant 0 : index
      %c0_16 = arith.constant 0 : index
      %22 = vector.load %arg11[%c0_15, %c0_16] : memref<8x256xf32, #tpu.memory_space<vmem>>, vector<8x256xf32>
      tpu.vector_store %arg11[%c0_15, %c0_16], %21 {strides = array<i32>} : memref<8x256xf32, #tpu.memory_space<vmem>>, vector<8x256xf32>,
      %c0_17 = arith.constant 0 : index
      %c0_18 = arith.constant 0 : index
      %c0_19 = arith.constant 0 : index
      %23 = vector.load %arg6[%c0_17, %c0_18, %c0_19] : memref<8x8x768xbf16, #tpu.memory_space<vmem>>, vector<8x8x768xbf16>
      %24 = arith.extf %23 : vector<8x8x768xbf16> to vector<8x8x768xf32>
      %c0_20 = arith.constant 0 : index
      %c0_21 = arith.constant 0 : index
      %25 = vector.load %arg7[%c0_20, %c0_21] : memref<8x8xf32, #tpu.memory_space<vmem>>, vector<8x8xf32>
      %26 = vector.shape_cast %25 : vector<8x8xf32> to vector<8x8x1xf32>
      %27 = vector.broadcast %26 : vector<8x8x1xf32> to vector<8x8x768xf32>
      %28 = arith.mulf %24, %27 : vector<8x8x768xf32>
      %cst_22 = arith.constant dense<0.000000e+00> : vector<8x768xf32>
      %29 = vector.multi_reduction <add>, %28, %cst_22 [1] : vector<8x8x768xf32> to vector<8x768xf32>
      %cst_23 = arith.constant dense<0.000000e+00> : vector<8xf32>
      %30 = vector.multi_reduction <add>, %25, %cst_23 [1] : vector<8x8xf32> to vector<8xf32>
      %31 = vector.shape_cast %30 : vector<8xf32> to vector<8x1xf32>
      %cst_24 = arith.constant 1.000000e+00 : f32
      %32 = vector.broadcast %cst_24 : f32 to vector<8x1xf32>
      %33 = arith.maximumf %31, %32 : vector<8x1xf32>
      %34 = vector.broadcast %33 : vector<8x1xf32> to vector<8x768xf32>
      %35 = arith.divf %29, %34 : vector<8x768xf32>
      %36 = arith.truncf %35 : vector<8x768xf32> to vector<8x768xbf16>
      %c0_25 = arith.constant 0 : index
      %c0_26 = arith.constant 0 : index
      %37 = vector.load %arg8[%c0_25, %c0_26] : memref<768x256xbf16, #tpu.memory_space<vmem>>, vector<768x256xbf16>
      %cst_27 = arith.constant dense<0.000000e+00> : vector<8x256xf32>
      %38 = tpu.matmul %36, %37, %cst_27 {dimension_numbers = #tpu.dot_dimension_numbers<[1], [0], [0], [1], [0, 0, 1, 1], [], []>} : vector<8x768xbf16>, vector<768x256xbf16>, vector<8x256xf32> -> vector<8x256xf32>
      %c0_28 = arith.constant 0 : index
      %c0_29 = arith.constant 0 : index
      %39 = vector.load %arg9[%c0_28, %c0_29] : memref<1x256xf32, #tpu.memory_space<vmem>>, vector<1x256xf32>
      %40 = vector.broadcast %39 : vector<1x256xf32> to vector<8x256xf32>
      %41 = arith.addf %38, %40 : vector<8x256xf32>
      %42 = arith.mulf %41, %41 : vector<8x256xf32>
      %cst_30 = arith.constant dense<0.000000e+00> : vector<8xf32>
      %43 = vector.multi_reduction <add>, %42, %cst_30 [1] : vector<8x256xf32> to vector<8xf32>
      %44 = vector.shape_cast %43 : vector<8xf32> to vector<8x1xf32>
      %cst_31 = arith.constant 1.000000e-24 : f32
      %45 = vector.broadcast %cst_31 : f32 to vector<8x1xf32>
      %46 = arith.maximumf %44, %45 : vector<8x1xf32>
      %47 = math.rsqrt %46 : vector<8x1xf32>
      %48 = vector.broadcast %47 : vector<8x1xf32> to vector<8x256xf32>
      %49 = arith.mulf %41, %48 : vector<8x256xf32>
      %c0_32 = arith.constant 0 : index
      %c0_33 = arith.constant 0 : index
      %50 = vector.load %arg12[%c0_32, %c0_33] : memref<8x256xf32, #tpu.memory_space<vmem>>, vector<8x256xf32>
      tpu.vector_store %arg12[%c0_32, %c0_33], %49 {strides = array<i32>} : memref<8x256xf32, #tpu.memory_space<vmem>>, vector<8x256xf32>,
    } else {
    }
    %c0 = arith.constant 0 : index
    %c0_1 = arith.constant 0 : index
    %3 = vector.load %arg1[%c0, %c0_1] : memref<8x1024xbf16, #tpu.memory_space<vmem>>, vector<8x1024xbf16>
    %c0_2 = arith.constant 0 : index
    %c0_3 = arith.constant 0 : index
    %4 = vector.load %arg2[%c0_2, %c0_3] : memref<1024x1024xbf16, #tpu.memory_space<vmem>>, vector<1024x1024xbf16>
    %cst = arith.constant dense<0.000000e+00> : vector<8x1024xf32>
    %5 = tpu.matmul %3, %4, %cst {dimension_numbers = #tpu.dot_dimension_numbers<[1], [0], [0], [1], [0, 0, 1, 1], [], []>} : vector<8x1024xbf16>, vector<1024x1024xbf16>, vector<8x1024xf32> -> vector<8x1024xf32>
    %6 = arith.index_cast %arg0 : i32 to index
    %c0_4 = arith.constant 0 : index
    %7 = vector.load %arg3[%6, %c0_4] : memref<2x1024xf32, #tpu.memory_space<vmem>>, vector<1x1024xf32>
    %8 = vector.broadcast %7 : vector<1x1024xf32> to vector<8x1024xf32>
    %9 = arith.addf %5, %8 : vector<8x1024xf32>
    %cst_5 = arith.constant 0.000000e+00 : f32
    %10 = vector.broadcast %cst_5 : f32 to vector<8x1024xf32>
    %11 = arith.maximumf %9, %10 : vector<8x1024xf32>
    %c0_6 = arith.constant 0 : index
    %c0_7 = arith.constant 0 : index
    %12 = vector.load %arg11[%c0_6, %c0_7] : memref<8x256xf32, #tpu.memory_space<vmem>>, vector<8x256xf32>
    %13 = arith.truncf %11 : vector<8x1024xf32> to vector<8x1024xbf16>
    %c0_8 = arith.constant 0 : index
    %c0_9 = arith.constant 0 : index
    %14 = vector.load %arg4[%c0_8, %c0_9] : memref<1024x256xbf16, #tpu.memory_space<vmem>>, vector<1024x256xbf16>
    %cst_10 = arith.constant dense<0.000000e+00> : vector<8x256xf32>
    %15 = tpu.matmul %13, %14, %cst_10 {dimension_numbers = #tpu.dot_dimension_numbers<[1], [0], [0], [1], [0, 0, 1, 1], [], []>} : vector<8x1024xbf16>, vector<1024x256xbf16>, vector<8x256xf32> -> vector<8x256xf32>
    %16 = arith.addf %12, %15 : vector<8x256xf32>
    %c0_11 = arith.constant 0 : index
    %c0_12 = arith.constant 0 : index
    %17 = vector.load %arg11[%c0_11, %c0_12] : memref<8x256xf32, #tpu.memory_space<vmem>>, vector<8x256xf32>
    tpu.vector_store %arg11[%c0_11, %c0_12], %16 {strides = array<i32>} : memref<8x256xf32, #tpu.memory_space<vmem>>, vector<8x256xf32>,
    %c1_i32 = arith.constant 1 : i32
    %18 = arith.cmpi eq, %arg0, %c1_i32 : i32
    %19 = arith.extui %18 : i1 to i32
    %c0_i32_13 = arith.constant 0 : i32
    %20 = arith.cmpi ne, %19, %c0_i32_13 : i32
    scf.if %20 {
      %c0_14 = arith.constant 0 : index
      %c0_15 = arith.constant 0 : index
      %21 = vector.load %arg11[%c0_14, %c0_15] : memref<8x256xf32, #tpu.memory_space<vmem>>, vector<8x256xf32>
      %c0_16 = arith.constant 0 : index
      %c0_17 = arith.constant 0 : index
      %22 = vector.load %arg5[%c0_16, %c0_17] : memref<1x256xf32, #tpu.memory_space<vmem>>, vector<1x256xf32>
      %23 = vector.broadcast %22 : vector<1x256xf32> to vector<8x256xf32>
      %24 = arith.addf %21, %23 : vector<8x256xf32>
      %25 = arith.mulf %24, %24 : vector<8x256xf32>
      %cst_18 = arith.constant dense<0.000000e+00> : vector<8xf32>
      %26 = vector.multi_reduction <add>, %25, %cst_18 [1] : vector<8x256xf32> to vector<8xf32>
      %27 = vector.shape_cast %26 : vector<8xf32> to vector<8x1xf32>
      %cst_19 = arith.constant 1.000000e-24 : f32
      %28 = vector.broadcast %cst_19 : f32 to vector<8x1xf32>
      %29 = arith.maximumf %27, %28 : vector<8x1xf32>
      %30 = math.rsqrt %29 : vector<8x1xf32>
      %31 = vector.broadcast %30 : vector<8x1xf32> to vector<8x256xf32>
      %32 = arith.mulf %24, %31 : vector<8x256xf32>
      %c0_20 = arith.constant 0 : index
      %c0_21 = arith.constant 0 : index
      %33 = vector.load %arg12[%c0_20, %c0_21] : memref<8x256xf32, #tpu.memory_space<vmem>>, vector<8x256xf32>
      %34 = arith.truncf %32 : vector<8x256xf32> to vector<8x256xbf16>
      %35 = arith.truncf %33 : vector<8x256xf32> to vector<8x256xbf16>
      %cst_22 = arith.constant dense<0.000000e+00> : vector<8x8xf32>
      %36 = tpu.matmul %34, %35, %cst_22 {dimension_numbers = #tpu.dot_dimension_numbers<[1], [1], [0], [0], [0, 0, 1, 0], [], []>} : vector<8x256xbf16>, vector<8x256xbf16>, vector<8x8xf32> -> vector<8x8xf32>
      %cst_23 = arith.constant dense<0.000000e+00> : vector<8x8xf32>
      %37 = tpu.matmul %34, %34, %cst_23 {dimension_numbers = #tpu.dot_dimension_numbers<[1], [1], [0], [0], [0, 0, 1, 0], [], []>} : vector<8x256xbf16>, vector<8x256xbf16>, vector<8x8xf32> -> vector<8x8xf32>
      %cst_24 = arith.constant dense<0.000000e+00> : vector<8x8xf32>
      %38 = tpu.matmul %35, %35, %cst_24 {dimension_numbers = #tpu.dot_dimension_numbers<[1], [1], [0], [0], [0, 0, 1, 0], [], []>} : vector<8x256xbf16>, vector<8x256xbf16>, vector<8x8xf32> -> vector<8x8xf32>
      %cst_25 = arith.constant 1.000000e+02 : f32
      %39 = vector.broadcast %cst_25 : f32 to vector<8x8xf32>
      %40 = arith.mulf %36, %39 : vector<8x8xf32>
      %41 = arith.mulf %32, %33 : vector<8x256xf32>
      %cst_26 = arith.constant dense<0.000000e+00> : vector<8xf32>
      %42 = vector.multi_reduction <add>, %41, %cst_26 [1] : vector<8x256xf32> to vector<8xf32>
      %43 = vector.shape_cast %42 : vector<8xf32> to vector<8x1xf32>
      %cst_27 = arith.constant 1.000000e+02 : f32
      %44 = vector.broadcast %cst_27 : f32 to vector<8x1xf32>
      %45 = arith.mulf %43, %44 : vector<8x1xf32>
      %cst_28 = arith.constant dense<0xFF800000> : vector<8xf32>
      %46 = vector.multi_reduction <maximumf>, %40, %cst_28 [1] : vector<8x8xf32> to vector<8xf32>
      %47 = vector.shape_cast %46 : vector<8xf32> to vector<8x1xf32>
      %48 = vector.broadcast %47 : vector<8x1xf32> to vector<8x8xf32>
      %49 = arith.subf %40, %48 : vector<8x8xf32>
      %50 = math.exp %49 : vector<8x8xf32>
      %cst_29 = arith.constant dense<0.000000e+00> : vector<8xf32>
      %51 = vector.multi_reduction <add>, %50, %cst_29 [1] : vector<8x8xf32> to vector<8xf32>
      %52 = vector.shape_cast %51 : vector<8xf32> to vector<8x1xf32>
      %53 = math.log %52 : vector<8x1xf32>
      %54 = arith.addf %47, %53 : vector<8x1xf32>
      %cst_30 = arith.constant dense<0xFF800000> : vector<8xf32>
      %55 = vector.multi_reduction <maximumf>, %40, %cst_30 [0] : vector<8x8xf32> to vector<8xf32>
      %56 = vector.shape_cast %55 : vector<8xf32> to vector<1x8xf32>
      %57 = vector.broadcast %56 : vector<1x8xf32> to vector<8x8xf32>
      %58 = arith.subf %40, %57 : vector<8x8xf32>
      %59 = math.exp %58 : vector<8x8xf32>
      %cst_31 = arith.constant dense<0.000000e+00> : vector<8xf32>
      %60 = vector.multi_reduction <add>, %59, %cst_31 [0] : vector<8x8xf32> to vector<8xf32>
      %61 = vector.shape_cast %60 : vector<8xf32> to vector<1x8xf32>
      %62 = math.log %61 : vector<1x8xf32>
      %63 = arith.addf %56, %62 : vector<1x8xf32>
      %64 = vector.shape_cast %54 : vector<8x1xf32> to vector<1x8x1xf32>
      %cst_32 = arith.constant dense<0.000000e+00> : vector<1xf32>
      %65 = vector.multi_reduction <add>, %64, %cst_32 [1, 2] : vector<1x8x1xf32> to vector<1xf32>
      %66 = vector.shape_cast %65 : vector<1xf32> to vector<1x1x1xf32>
      %67 = vector.extract %66[0, 0, 0] : f32 from vector<1x1x1xf32>
      %cst_33 = arith.constant 8.000000e+00 : f32
      %68 = arith.divf %67, %cst_33 : f32
      %69 = vector.shape_cast %63 : vector<1x8xf32> to vector<1x1x8xf32>
      %cst_34 = arith.constant dense<0.000000e+00> : vector<1xf32>
      %70 = vector.multi_reduction <add>, %69, %cst_34 [1, 2] : vector<1x1x8xf32> to vector<1xf32>
      %71 = vector.shape_cast %70 : vector<1xf32> to vector<1x1x1xf32>
      %72 = vector.extract %71[0, 0, 0] : f32 from vector<1x1x1xf32>
      %cst_35 = arith.constant 8.000000e+00 : f32
      %73 = arith.divf %72, %cst_35 : f32
      %74 = arith.addf %68, %73 : f32
      %cst_36 = arith.constant 5.000000e-01 : f32
      %75 = arith.mulf %cst_36, %74 : f32
      %76 = vector.shape_cast %45 : vector<8x1xf32> to vector<1x8x1xf32>
      %cst_37 = arith.constant dense<0.000000e+00> : vector<1xf32>
      %77 = vector.multi_reduction <add>, %76, %cst_37 [1, 2] : vector<1x8x1xf32> to vector<1xf32>
      %78 = vector.shape_cast %77 : vector<1xf32> to vector<1x1x1xf32>
      %79 = vector.extract %78[0, 0, 0] : f32 from vector<1x1x1xf32>
      %cst_38 = arith.constant 8.000000e+00 : f32
      %80 = arith.divf %79, %cst_38 : f32
      %81 = arith.subf %75, %80 : f32
      %82 = arith.subf %37, %38 : vector<8x8xf32>
      %83 = arith.mulf %82, %82 : vector<8x8xf32>
      %84 = vector.shape_cast %83 : vector<8x8xf32> to vector<1x8x8xf32>
      %cst_39 = arith.constant dense<0.000000e+00> : vector<1xf32>
      %85 = vector.multi_reduction <add>, %84, %cst_39 [1, 2] : vector<1x8x8xf32> to vector<1xf32>
      %86 = vector.shape_cast %85 : vector<1xf32> to vector<1x1x1xf32>
      %87 = vector.extract %86[0, 0, 0] : f32 from vector<1x1x1xf32>
      %cst_40 = arith.constant 6.400000e+01 : f32
      %88 = arith.divf %87, %cst_40 : f32
      %cst_41 = arith.constant 8.000000e+00 : f32
      %89 = arith.mulf %88, %cst_41 : f32
      %90 = tpu.transpose %36, [1, 0] : vector<8x8xf32> -> vector<8x8xf32>
      %91 = arith.subf %36, %90 : vector<8x8xf32>
      %92 = arith.mulf %91, %91 : vector<8x8xf32>
      %93 = vector.shape_cast %92 : vector<8x8xf32> to vector<1x8x8xf32>
      %cst_42 = arith.constant dense<0.000000e+00> : vector<1xf32>
      %94 = vector.multi_reduction <add>, %93, %cst_42 [1, 2] : vector<1x8x8xf32> to vector<1xf32>
      %95 = vector.shape_cast %94 : vector<1xf32> to vector<1x1x1xf32>
      %96 = vector.extract %95[0, 0, 0] : f32 from vector<1x1x1xf32>
      %cst_43 = arith.constant 6.400000e+01 : f32
      %97 = arith.divf %96, %cst_43 : f32
      %cst_44 = arith.constant 8.000000e+00 : f32
      %98 = arith.mulf %97, %cst_44 : f32
      %cst_45 = arith.constant 2.500000e-01 : f32
      %99 = arith.mulf %cst_45, %89 : f32
      %100 = arith.addf %81, %99 : f32
      %cst_46 = arith.constant 2.500000e-01 : f32
      %101 = arith.mulf %cst_46, %98 : f32
      %102 = arith.addf %100, %101 : f32
      %c0_47 = arith.constant 0 : index
      %c0_48 = arith.constant 0 : index
      %103 = memref.load %arg10[%c0_47, %c0_48] : memref<1x1xf32, #tpu.memory_space<smem>>
      memref.store %102, %arg10[%c0_47, %c0_48] : memref<1x1xf32, #tpu.memory_space<smem>>
    } else {
    }
    return
  }
  func.func @transform_0(%arg0: i32) -> (i32, i32) {
    %c0_i32 = arith.constant 0 : i32
    %c0_i32_0 = arith.constant 0 : i32
    %c0_i32_1 = arith.constant 0 : i32
    return %c0_i32, %c0_i32_0 : i32, i32
  }
  func.func @transform_1(%arg0: i32) -> (i32, i32) {
    %c0_i32 = arith.constant 0 : i32
    %c0_i32_0 = arith.constant 0 : i32
    return %c0_i32, %arg0 : i32, i32
  }
  func.func @transform_2(%arg0: i32) -> (i32, i32) {
    %c0_i32 = arith.constant 0 : i32
    %c0_i32_0 = arith.constant 0 : i32
    %c0_i32_1 = arith.constant 0 : i32
    return %c0_i32, %c0_i32_0 : i32, i32
  }
  func.func @transform_3(%arg0: i32) -> (i32, i32) {
    %c0_i32 = arith.constant 0 : i32
    %c0_i32_0 = arith.constant 0 : i32
    return %arg0, %c0_i32 : i32, i32
  }
  func.func @transform_4(%arg0: i32) -> (i32, i32) {
    %c0_i32 = arith.constant 0 : i32
    %c0_i32_0 = arith.constant 0 : i32
    %c0_i32_1 = arith.constant 0 : i32
    return %c0_i32, %c0_i32_0 : i32, i32
  }
  func.func @transform_5(%arg0: i32) -> (i32, i32, i32) {
    %c0_i32 = arith.constant 0 : i32
    %c0_i32_0 = arith.constant 0 : i32
    %c0_i32_1 = arith.constant 0 : i32
    %c0_i32_2 = arith.constant 0 : i32
    return %c0_i32, %c0_i32_0, %c0_i32_1 : i32, i32, i32
  }
  func.func @transform_6(%arg0: i32) -> (i32, i32) {
    %c0_i32 = arith.constant 0 : i32
    %c0_i32_0 = arith.constant 0 : i32
    %c0_i32_1 = arith.constant 0 : i32
    return %c0_i32, %c0_i32_0 : i32, i32
  }
  func.func @transform_7(%arg0: i32) -> (i32, i32) {
    %c0_i32 = arith.constant 0 : i32
    %c0_i32_0 = arith.constant 0 : i32
    %c0_i32_1 = arith.constant 0 : i32
    return %c0_i32, %c0_i32_0 : i32, i32
  }
  func.func @transform_8(%arg0: i32) -> (i32, i32) {
    %c0_i32 = arith.constant 0 : i32
    %c0_i32_0 = arith.constant 0 : i32
    %c0_i32_1 = arith.constant 0 : i32
    return %c0_i32, %c0_i32_0 : i32, i32
  }
  func.func @transform_9(%arg0: i32) -> (i32, i32) {
    %c0_i32 = arith.constant 0 : i32
    %c0_i32_0 = arith.constant 0 : i32
    %c0_i32_1 = arith.constant 0 : i32
    return %c0_i32, %c0_i32_0 : i32, i32
  }
}

</mosaic_0001>

<llo_original>
// kernel: tpu_custom_call.1
$region0: #{tpu_custom_call.1}
  #allocation0 [shape = 'u32[]', space=smem, size = 0x4, offset = 0x4, fixed_abs, tag = 'smem constant byte address 0x4 - core index']
  #allocation1 [shape = 'u32[144,128]{1,0:T(1,128)}', space=vmem, size = 0x12000, scoped, tag = 'internal scratch']
  #allocation2 [shape = 'f32[8,256]{1,0:T(8,128)}', space=vmem, size = 0x2000, scoped, tag = 'scratch operand']
  #allocation3 [shape = 'f32[8,256]{1,0:T(8,128)}', space=vmem, size = 0x2000, scoped, tag = 'scratch operand']
  %s0 = inlined_call_operand.hbm [shape: bf16[8,1024], index: 0, kind: input, shape index: {}]
  %s1 = inlined_call_operand.hbm [shape: bf16[1024,2048], index: 1, kind: input, shape index: {}]
  %s2 = inlined_call_operand.hbm [shape: f32[2,1024], index: 2, kind: input, shape index: {}]
  %s3 = inlined_call_operand.hbm [shape: bf16[2048,256], index: 3, kind: input, shape index: {}]
  %s4 = inlined_call_operand.hbm [shape: f32[1,256], index: 4, kind: input, shape index: {}]
  %s5 = inlined_call_operand.hbm [shape: bf16[8,8,768], index: 5, kind: input, shape index: {}]
  %s6 = inlined_call_operand.hbm [shape: f32[8,8], index: 6, kind: input, shape index: {}]
  %s7 = inlined_call_operand.hbm [shape: bf16[768,256], index: 7, kind: input, shape index: {}]
  %s8 = inlined_call_operand.hbm [shape: f32[1,256], index: 8, kind: input, shape index: {}]
  %s9 = inlined_call_operand.hbm [shape: f32[1,1], index: 9, kind: output, shape index: {}]
  %s10 = sld [smem:[#allocation0]]
  $region113: #{tpu_custom_call.1} parent=0
    _
  %s12 = ssub.s32 1, %s10
  %s13 = scalar_select 0, %s12, %s10
  $region1: #{tpu_custom_call.1} parent=0
    #allocation4 [shape = 'u8[16384]{0}', space=vmem, size = 0x4000, scoped, tag = 'input window, operand 0, single buffered']
    #allocation5 [shape = 's32[2]{0}', space=sflag, size = 0x8, scoped, tag = 'scoped memory for tpu_custom_call.1']
    #allocation6 [shape = 's32[2]{0}', space=sflag, size = 0x8, scoped, tag = 'scoped memory for tpu_custom_call.1']
    #allocation7 [shape = 'u8[4194304]{0}', space=vmem, size = 0x400000, scoped, tag = 'input window, operand 1']
    #allocation8 [shape = 's32[2]{0}', space=sflag, size = 0x8, scoped, tag = 'scoped memory for tpu_custom_call.1']
    #allocation9 [shape = 'u8[8192]{0}', space=vmem, size = 0x2000, scoped, tag = 'input window, operand 2, single buffered']
    #allocation10 [shape = 'u8[1048576]{0}', space=vmem, size = 0x100000, scoped, tag = 'input window, operand 3']
    #allocation11 [shape = 's32[2]{0}', space=sflag, size = 0x8, scoped, tag = 'scoped memory for tpu_custom_call.1']
    #allocation12 [shape = 'u8[1024]{0}', space=vmem, size = 0x400, scoped, tag = 'input window, operand 4, single buffered']
    #allocation13 [shape = 'u8[98304]{0}', space=vmem, size = 0x18000, scoped, tag = 'input window, operand 5, single buffered']
    #allocation14 [shape = 's32[1]{0}', space=sflag, size = 0x4, scoped, tag = 'scoped memory for tpu_custom_call.1']
    #allocation15 [shape = 'u8[4096]{0}', space=vmem, size = 0x1000, scoped, tag = 'input window, operand 6, single buffered']
    #allocation16 [shape = 'u8[393216]{0}', space=vmem, size = 0x60000, scoped, tag = 'input window, operand 7, single buffered']
    #allocation17 [shape = 's32[1]{0}', space=sflag, size = 0x4, scoped, tag = 'scoped memory for tpu_custom_call.1']
    #allocation18 [shape = 'u8[1024]{0}', space=vmem, size = 0x400, scoped, tag = 'input window, operand 8, single buffered']
    #allocation19 [shape = 'u8[512]{0}', space=smem, size = 0x200, scoped, tag = 'output window, operand 0, single buffered']
    %14 = vsyncpa [#allocation5], 0
    %15 = vsyncpa [#allocation8], 0
    %s16 = scalar_lea.sflag [#allocation8], 1
    %17 = vsyncpa %s16, 0
    %18 = vsyncpa [#allocation11], 0
    %s19 = scalar_lea.sflag [#allocation11], 1
    %20 = vsyncpa %s19, 0
    %21 = vsyncpa [#allocation14], 0
    %22 = vsyncpa [#allocation17], 0
    %23 = vsyncpa [#allocation6], 0
    loop: start=0, step=1, limit=4
    $region2: #{tpu_custom_call.1} parent=1 // loop_pre_header
      _
    $region3: #{tpu_custom_call.1} parent=1 // loop_header
      %s25 = sphi 0, %s29
      %p26 = scmp.ge.s32.totalorder %s25, 4
      %s33 = sphi 0, %s33
      %s35 = sphi 0, %s33
      %s36 = sphi 0, %s35
      %s50 = sphi 0, %s36
      %s56 = sphi 0, %s58
      %s59 = sphi 0, %s56
      %s60 = sphi 0, %s59
      %s76 = sphi 0, %s60
      %s80 = sphi 0, %s80
      %s82 = sphi 0, %s80
      %s83 = sphi 0, %s82
      %s97 = sphi 0, %s83
      %s103 = sphi 0, %s105
      %s106 = sphi 0, %s103
      %s107 = sphi 0, %s106
      %s123 = sphi 0, %s107
      %s127 = sphi 0, %s127
      %s129 = sphi 0, %s127
      %s130 = sphi 0, %s129
      %s144 = sphi 0, %s130
      %s148 = sphi 0, %s148
      %s150 = sphi 0, %s148
      %s151 = sphi 0, %s150
      %s165 = sphi 0, %s151
      %s169 = sphi 0, %s169
      %s171 = sphi 0, %s169
      %s172 = sphi 0, %s171
      %s186 = sphi 0, %s172
      %s190 = sphi 0, %s190
      %s192 = sphi 0, %s190
      %s193 = sphi 0, %s192
      %s207 = sphi 0, %s193
      %s211 = sphi 0, %s211
      %s213 = sphi 0, %s211
      %s214 = sphi 0, %s213
      %s228 = sphi 0, %s214
      %s232 = sphi 0, %s232
      %s234 = sphi 0, %s232
      %s235 = sphi 0, %s234
      %s249 = sphi 0, %s235
    $region4: #{tpu_custom_call.1} parent=1 // loop_header_branch
      %28 = sbr.rel (%p26) target = $region8
    $region5: #{tpu_custom_call.1} parent=1 // loop_body
      %s30 = ssub.s32 %s25, 1
      %s31 = ssub.s32 %s25, 2
      %s32 = sadd.s32 %s25, 1
      %s34 = sadd.s32 %s33, 1
      %p37 = scmp.eq.s32.totalorder %s25, 1
      %p38 = scmp.ne.s32.totalorder %s33, %s35
      %p39 = scmp.eq.s32.totalorder %s25, 0
      %p40 = por %p38, %p39
      %p41 = scmp.ne.s32.totalorder %s33, %s35
      %p42 = scmp.eq.s32.totalorder %s30, 1
      %p43 = por %p41, %p42
      %p44 = scmp.ne.s32.totalorder %s35, %s36
      %p45 = scmp.eq.s32.totalorder %s30, 0
      %p46 = por %p44, %p45
      %p47 = scmp.ne.s32.totalorder %s35, %s36
      %p48 = scmp.eq.s32.totalorder %s31, 1
      %p49 = por %p47, %p48
      %p51 = scmp.ne.s32.totalorder %s36, %s50
      %p52 = scmp.eq.s32.totalorder %s31, 0
      %p53 = por %p51, %p52
      %s54 = ssub.s32 %s25, %s32
      %p55 = scmp.eq.s32.totalorder %s54, 0
      %s57 = sadd.s32 %s56, 1
      %s58 = scalar_select %p55, %s56, %s57
      %p61 = pneg %p55
      %p62 = scmp.eq.s32.totalorder %s25, 1
      %p63 = por %p61, %p62
      %p64 = scmp.ne.s32.totalorder %s56, %s59
      %p65 = scmp.eq.s32.totalorder %s25, 0
      %p66 = por %p64, %p65
      %p67 = scmp.ne.s32.totalorder %s56, %s59
      %p68 = scmp.eq.s32.totalorder %s30, 1
      %p69 = por %p67, %p68
      %p70 = scmp.ne.s32.totalorder %s59, %s60
      %p71 = scmp.eq.s32.totalorder %s30, 0
      %p72 = por %p70, %p71
      %p73 = scmp.ne.s32.totalorder %s59, %s60
      %p74 = scmp.eq.s32.totalorder %s31, 1
      %p75 = por %p73, %p74
      %p77 = scmp.ne.s32.totalorder %s60, %s76
      %p78 = scmp.eq.s32.totalorder %s31, 0
      %p79 = por %p77, %p78
      %s81 = sadd.s32 %s80, 1
      %p84 = scmp.eq.s32.totalorder %s25, 1
      %p85 = scmp.ne.s32.totalorder %s80, %s82
      %p86 = scmp.eq.s32.totalorder %s25, 0
      %p87 = por %p85, %p86
      %p88 = scmp.ne.s32.totalorder %s80, %s82
      %p89 = scmp.eq.s32.totalorder %s30, 1
      %p90 = por %p88, %p89
      %p91 = scmp.ne.s32.totalorder %s82, %s83
      %p92 = scmp.eq.s32.totalorder %s30, 0
      %p93 = por %p91, %p92
      %p94 = scmp.ne.s32.totalorder %s82, %s83
      %p95 = scmp.eq.s32.totalorder %s31, 1
      %p96 = por %p94, %p95
      %p98 = scmp.ne.s32.totalorder %s83, %s97
      %p99 = scmp.eq.s32.totalorder %s31, 0
      %p100 = por %p98, %p99
      %s101 = ssub.s32 %s25, %s32
      %p102 = scmp.eq.s32.totalorder %s101, 0
      %s104 = sadd.s32 %s103, 1
      %s105 = scalar_select %p102, %s103, %s104
      %p108 = pneg %p102
      %p109 = scmp.eq.s32.totalorder %s25, 1
      %p110 = por %p108, %p109
      %p111 = scmp.ne.s32.totalorder %s103, %s106
      %p112 = scmp.eq.s32.totalorder %s25, 0
      %p113 = por %p111, %p112
      %p114 = scmp.ne.s32.totalorder %s103, %s106
      %p115 = scmp.eq.s32.totalorder %s30, 1
      %p116 = por %p114, %p115
      %p117 = scmp.ne.s32.totalorder %s106, %s107
      %p118 = scmp.eq.s32.totalorder %s30, 0
      %p119 = por %p117, %p118
      %p120 = scmp.ne.s32.totalorder %s106, %s107
      %p121 = scmp.eq.s32.totalorder %s31, 1
      %p122 = por %p120, %p121
      %p124 = scmp.ne.s32.totalorder %s107, %s123
      %p125 = scmp.eq.s32.totalorder %s31, 0
      %p126 = por %p124, %p125
      %s128 = sadd.s32 %s127, 1
      %p131 = scmp.eq.s32.totalorder %s25, 1
      %p132 = scmp.ne.s32.totalorder %s127, %s129
      %p133 = scmp.eq.s32.totalorder %s25, 0
      %p134 = por %p132, %p133
      %p135 = scmp.ne.s32.totalorder %s127, %s129
      %p136 = scmp.eq.s32.totalorder %s30, 1
      %p137 = por %p135, %p136
      %p138 = scmp.ne.s32.totalorder %s129, %s130
      %p139 = scmp.eq.s32.totalorder %s30, 0
      %p140 = por %p138, %p139
      %p141 = scmp.ne.s32.totalorder %s129, %s130
      %p142 = scmp.eq.s32.totalorder %s31, 1
      %p143 = por %p141, %p142
      %p145 = scmp.ne.s32.totalorder %s130, %s144
      %p146 = scmp.eq.s32.totalorder %s31, 0
      %p147 = por %p145, %p146
      %s149 = sadd.s32 %s148, 1
      %p152 = scmp.eq.s32.totalorder %s25, 1
      %p153 = scmp.ne.s32.totalorder %s148, %s150
      %p154 = scmp.eq.s32.totalorder %s25, 0
      %p155 = por %p153, %p154
      %p156 = scmp.ne.s32.totalorder %s148, %s150
      %p157 = scmp.eq.s32.totalorder %s30, 1
      %p158 = por %p156, %p157
      %p159 = scmp.ne.s32.totalorder %s150, %s151
      %p160 = scmp.eq.s32.totalorder %s30, 0
      %p161 = por %p159, %p160
      %p162 = scmp.ne.s32.totalorder %s150, %s151
      %p163 = scmp.eq.s32.totalorder %s31, 1
      %p164 = por %p162, %p163
      %p166 = scmp.ne.s32.totalorder %s151, %s165
      %p167 = scmp.eq.s32.totalorder %s31, 0
      %p168 = por %p166, %p167
      %s170 = sadd.s32 %s169, 1
      %p173 = scmp.eq.s32.totalorder %s25, 1
      %p174 = scmp.ne.s32.totalorder %s169, %s171
      %p175 = scmp.eq.s32.totalorder %s25, 0
      %p176 = por %p174, %p175
      %p177 = scmp.ne.s32.totalorder %s169, %s171
      %p178 = scmp.eq.s32.totalorder %s30, 1
      %p179 = por %p177, %p178
      %p180 = scmp.ne.s32.totalorder %s171, %s172
      %p181 = scmp.eq.s32.totalorder %s30, 0
      %p182 = por %p180, %p181
      %p183 = scmp.ne.s32.totalorder %s171, %s172
      %p184 = scmp.eq.s32.totalorder %s31, 1
      %p185 = por %p183, %p184
      %p187 = scmp.ne.s32.totalorder %s172, %s186
      %p188 = scmp.eq.s32.totalorder %s31, 0
      %p189 = por %p187, %p188
      %s191 = sadd.s32 %s190, 1
      %p194 = scmp.eq.s32.totalorder %s25, 1
      %p195 = scmp.ne.s32.totalorder %s190, %s192
      %p196 = scmp.eq.s32.totalorder %s25, 0
      %p197 = por %p195, %p196
      %p198 = scmp.ne.s32.totalorder %s190, %s192
      %p199 = scmp.eq.s32.totalorder %s30, 1
      %p200 = por %p198, %p199
      %p201 = scmp.ne.s32.totalorder %s192, %s193
      %p202 = scmp.eq.s32.totalorder %s30, 0
      %p203 = por %p201, %p202
      %p204 = scmp.ne.s32.totalorder %s192, %s193
      %p205 = scmp.eq.s32.totalorder %s31, 1
      %p206 = por %p204, %p205
      %p208 = scmp.ne.s32.totalorder %s193, %s207
      %p209 = scmp.eq.s32.totalorder %s31, 0
      %p210 = por %p208, %p209
      %s212 = sadd.s32 %s211, 1
      %p215 = scmp.eq.s32.totalorder %s25, 1
      %p216 = scmp.ne.s32.totalorder %s211, %s213
      %p217 = scmp.eq.s32.totalorder %s25, 0
      %p218 = por %p216, %p217
      %p219 = scmp.ne.s32.totalorder %s211, %s213
      %p220 = scmp.eq.s32.totalorder %s30, 1
      %p221 = por %p219, %p220
      %p222 = scmp.ne.s32.totalorder %s213, %s214
      %p223 = scmp.eq.s32.totalorder %s30, 0
      %p224 = por %p222, %p223
      %p225 = scmp.ne.s32.totalorder %s213, %s214
      %p226 = scmp.eq.s32.totalorder %s31, 1
      %p227 = por %p225, %p226
      %p229 = scmp.ne.s32.totalorder %s214, %s228
      %p230 = scmp.eq.s32.totalorder %s31, 0
      %p231 = por %p229, %p230
      %s233 = sadd.s32 %s232, 1
      %p236 = scmp.eq.s32.totalorder %s25, 1
      %p237 = scmp.ne.s32.totalorder %s232, %s234
      %p238 = scmp.eq.s32.totalorder %s25, 0
      %p239 = por %p237, %p238
      %p240 = scmp.ne.s32.totalorder %s232, %s234
      %p241 = scmp.eq.s32.totalorder %s30, 1
      %p242 = por %p240, %p241
      %p243 = scmp.ne.s32.totalorder %s234, %s235
      %p244 = scmp.eq.s32.totalorder %s30, 0
      %p245 = por %p243, %p244
      %p246 = scmp.ne.s32.totalorder %s234, %s235
      %p247 = scmp.eq.s32.totalorder %s31, 1
      %p248 = por %p246, %p247
      %p250 = scmp.ne.s32.totalorder %s235, %s249
      %p251 = scmp.eq.s32.totalorder %s31, 0
      %p252 = por %p250, %p251
      %p253 = scmp.le.s32.totalorder 1, %s25
      %p254 = scmp.lt.s32.totalorder %s25, 3
      %p255 = pnand %p253, %p254
      %p256 = pneg %p255
      // Predicated region
      $region9: #{tpu_custom_call.1} parent=5 // pred_check
        _
      $region10: #{tpu_custom_call.1} parent=5 // pred_check_branch
        %258 = sbr.rel (%p255) target = $region12
      $region11: #{tpu_custom_call.1} parent=5 // pred_region
        %s259 = ssub.s32 %s25, 1
        // Predicated region
        $region13: #{tpu_custom_call.1} parent=11 // pred_check
          %p260 = pneg %p46
        $region14: #{tpu_custom_call.1} parent=11 // pred_check_branch
          %262 = sbr.rel (%p260) target = $region16
        $region15: #{tpu_custom_call.1} parent=11 // pred_region
          %s264 = ssub.s32 512, 512
          %265 = vsyncadd [#allocation5], %s264
          %s267 = sshll.u32 [#allocation4], 4
          %s268 = int_to_ptr.vmem [resolvable:$true] %s267
          %270 = dma.hbm_to_vmem [thread:$0]  %s0, 512, %s268, [#allocation5]
        $region16: #{tpu_custom_call.1} parent=11 // pred_fallthru
          _
        // Predicated region
        $region17: #{tpu_custom_call.1} parent=11 // pred_check
          %p271 = pneg %p93
        $region18: #{tpu_custom_call.1} parent=11 // pred_check_branch
          %273 = sbr.rel (%p271) target = $region20
        $region19: #{tpu_custom_call.1} parent=11 // pred_region
          %s275 = ssub.s32 256, 256
          %276 = vsyncadd [#allocation8], %s275
          %s278 = sshll.u32 [#allocation9], 4
          %s279 = int_to_ptr.vmem [resolvable:$true] %s278
          %281 = dma.hbm_to_vmem [thread:$0]  %s2, 256, %s279, [#allocation8]
        $region20: #{tpu_custom_call.1} parent=11 // pred_fallthru
          _
        // Predicated region
        $region21: #{tpu_custom_call.1} parent=11 // pred_check
          %p282 = pneg %p140
        $region22: #{tpu_custom_call.1} parent=11 // pred_check_branch
          %284 = sbr.rel (%p282) target = $region24
        $region23: #{tpu_custom_call.1} parent=11 // pred_region
          %s286 = ssub.s32 32, 32
          %287 = vsyncadd [#allocation11], %s286
          %s289 = sshll.u32 [#allocation12], 4
          %s290 = int_to_ptr.vmem [resolvable:$true] %s289
          %292 = dma.hbm_to_vmem [thread:$0]  %s4, 32, %s290, [#allocation11]
        $region24: #{tpu_custom_call.1} parent=11 // pred_fallthru
          _
        // Predicated region
        $region25: #{tpu_custom_call.1} parent=11 // pred_check
          %p293 = pneg %p161
        $region26: #{tpu_custom_call.1} parent=11 // pred_check_branch
          %295 = sbr.rel (%p293) target = $region28
        $region27: #{tpu_custom_call.1} parent=11 // pred_region
          %s297 = ssub.s32 3072, 3072
          %298 = vsyncadd [#allocation14], %s297
          %s299 = sshll.u32 [#allocation13], 4
          %s300 = int_to_ptr.vmem [resolvable:$true] %s299
          %305 = dma.hbm_to_vmem [thread:$0]  %s5, 3072, %s300, [#allocation14], 384, 384, 24
        $region28: #{tpu_custom_call.1} parent=11 // pred_fallthru
          _
        // Predicated region
        $region29: #{tpu_custom_call.1} parent=11 // pred_check
          %p306 = pneg %p182
        $region30: #{tpu_custom_call.1} parent=11 // pred_check_branch
          %308 = sbr.rel (%p306) target = $region32
        $region31: #{tpu_custom_call.1} parent=11 // pred_region
          %s310 = ssub.s32 128, 128
          %311 = vsyncadd [#allocation14], %s310
          %s313 = sshll.u32 [#allocation15], 4
          %s314 = int_to_ptr.vmem [resolvable:$true] %s313
          %316 = dma.hbm_to_vmem [thread:$0]  %s6, 128, %s314, [#allocation14]
        $region32: #{tpu_custom_call.1} parent=11 // pred_fallthru
          _
        // Predicated region
        $region33: #{tpu_custom_call.1} parent=11 // pred_check
          %p317 = pneg %p203
        $region34: #{tpu_custom_call.1} parent=11 // pred_check_branch
          %319 = sbr.rel (%p317) target = $region36
        $region35: #{tpu_custom_call.1} parent=11 // pred_region
          %s321 = ssub.s32 12288, 12288
          %322 = vsyncadd [#allocation17], %s321
          %s323 = sshll.u32 [#allocation16], 4
          %s324 = int_to_ptr.vmem [resolvable:$true] %s323
          %329 = dma.hbm_to_vmem [thread:$0]  %s7, 12288, %s324, [#allocation17], 128, 128, 8
        $region36: #{tpu_custom_call.1} parent=11 // pred_fallthru
          _
        // Predicated region
        $region37: #{tpu_custom_call.1} parent=11 // pred_check
          %p330 = pneg %p224
        $region38: #{tpu_custom_call.1} parent=11 // pred_check_branch
          %332 = sbr.rel (%p330) target = $region40
        $region39: #{tpu_custom_call.1} parent=11 // pred_region
          %s334 = ssub.s32 32, 32
          %335 = vsyncadd [#allocation17], %s334
          %s337 = sshll.u32 [#allocation18], 4
          %s338 = int_to_ptr.vmem [resolvable:$true] %s337
          %340 = dma.hbm_to_vmem [thread:$0]  %s8, 32, %s338, [#allocation17]
        $region40: #{tpu_custom_call.1} parent=11 // pred_fallthru
          _
      $region12: #{tpu_custom_call.1} parent=5 // pred_fallthru
        _
      %p341 = scmp.lt.s32.totalorder %s25, 2
      // Predicated region
      $region41: #{tpu_custom_call.1} parent=5 // pred_check
        %p342 = pneg %p341
      $region42: #{tpu_custom_call.1} parent=5 // pred_check_branch
        %344 = sbr.rel (%p342) target = $region44
      $region43: #{tpu_custom_call.1} parent=5 // pred_region
        // Predicated region
        $region45: #{tpu_custom_call.1} parent=43 // pred_check
          %p345 = pneg %p66
        $region46: #{tpu_custom_call.1} parent=43 // pred_check_branch
          %347 = sbr.rel (%p345) target = $region48
        $region47: #{tpu_custom_call.1} parent=43 // pred_region
          %s348 = sand.u32 %s25, 1
          %s349 = scalar_lea.sflag [#allocation8], %s348
          %s350 = sand.u32 %s56, 1
          %s351 = smul.addr %s350, 4096
          %s352 = scalar_lea.vmem [#allocation7], %s351
          %s353 = smul.u32 8, %s25
          %s355 = ssub.s32 65536, 65536
          %356 = vsyncadd %s349, %s355
          %s357 = smul.addr %s353, 64
          %s358 = scalar_lea.hbm %s1, %s357
          %s359 = sshll.u32 %s352, 4
          %s360 = int_to_ptr.vmem [resolvable:$true] %s359
          %365 = dma.hbm_to_vmem [thread:$0]  %s358, 65536, %s360, %s349, 1024, 512, 32
        $region48: #{tpu_custom_call.1} parent=43 // pred_fallthru
          _
        // Predicated region
        $region49: #{tpu_custom_call.1} parent=43 // pred_check
          %p366 = pneg %p113
        $region50: #{tpu_custom_call.1} parent=43 // pred_check_branch
          %368 = sbr.rel (%p366) target = $region52
        $region51: #{tpu_custom_call.1} parent=43 // pred_region
          %s369 = sand.u32 %s25, 1
          %s370 = scalar_lea.sflag [#allocation11], %s369
          %s371 = sand.u32 %s103, 1
          %s372 = smul.addr %s371, 1024
          %s373 = scalar_lea.vmem [#allocation10], %s372
          %s374 = smul.u32 128, %s25
          %s376 = ssub.s32 16384, 16384
          %377 = vsyncadd %s370, %s376
          %s378 = smul.addr %s374, 2
          %s379 = smul.addr %s378, 64
          %s380 = scalar_lea.hbm %s3, %s379
          %s381 = sshll.u32 %s373, 4
          %s382 = int_to_ptr.vmem [resolvable:$true] %s381
          %387 = dma.hbm_to_vmem [thread:$0]  %s380, 16384, %s382, %s370, 128, 128, 8
        $region52: #{tpu_custom_call.1} parent=43 // pred_fallthru
          _
      $region44: #{tpu_custom_call.1} parent=5 // pred_fallthru
        _
      %p388 = scmp.le.s32.totalorder 1, %s25
      %p389 = scmp.lt.s32.totalorder %s25, 3
      %p390 = pnand %p388, %p389
      %p391 = pneg %p390
      // Predicated region
      $region53: #{tpu_custom_call.1} parent=5 // pred_check
        _
      $region54: #{tpu_custom_call.1} parent=5 // pred_check_branch
        %393 = sbr.rel (%p390) target = $region56
      $region55: #{tpu_custom_call.1} parent=5 // pred_region
        %s394 = ssub.s32 %s25, 1
        // Predicated region
        $region57: #{tpu_custom_call.1} parent=55 // pred_check
          %p395 = pneg %p46
        $region58: #{tpu_custom_call.1} parent=55 // pred_check_branch
          %397 = sbr.rel (%p395) target = $region60
        $region59: #{tpu_custom_call.1} parent=55 // pred_region
          %398 = dma.done [#allocation5], 512
        $region60: #{tpu_custom_call.1} parent=55 // pred_fallthru
          _
        %s399 = sand.u32 %s30, 1
        %s400 = scalar_lea.sflag [#allocation8], %s399
        %s401 = sand.u32 %s59, 1
        %s402 = smul.addr %s401, 4096
        %s403 = scalar_lea.vmem [#allocation7], %s402
        // Predicated region
        $region61: #{tpu_custom_call.1} parent=55 // pred_check
          %p404 = pneg %p72
        $region62: #{tpu_custom_call.1} parent=55 // pred_check_branch
          %406 = sbr.rel (%p404) target = $region64
        $region63: #{tpu_custom_call.1} parent=55 // pred_region
          %407 = dma.done %s400, 65536
        $region64: #{tpu_custom_call.1} parent=55 // pred_fallthru
          _
        // Predicated region
        $region65: #{tpu_custom_call.1} parent=55 // pred_check
          %p408 = pneg %p93
        $region66: #{tpu_custom_call.1} parent=55 // pred_check_branch
          %410 = sbr.rel (%p408) target = $region68
        $region67: #{tpu_custom_call.1} parent=55 // pred_region
          %411 = dma.done [#allocation8], 256
        $region68: #{tpu_custom_call.1} parent=55 // pred_fallthru
          _
        %s412 = sand.u32 %s30, 1
        %s413 = scalar_lea.sflag [#allocation11], %s412
        %s414 = sand.u32 %s106, 1
        %s415 = smul.addr %s414, 1024
        %s416 = scalar_lea.vmem [#allocation10], %s415
        // Predicated region
        $region69: #{tpu_custom_call.1} parent=55 // pred_check
          %p417 = pneg %p119
        $region70: #{tpu_custom_call.1} parent=55 // pred_check_branch
          %419 = sbr.rel (%p417) target = $region72
        $region71: #{tpu_custom_call.1} parent=55 // pred_region
          %420 = dma.done %s413, 16384
        $region72: #{tpu_custom_call.1} parent=55 // pred_fallthru
          _
        // Predicated region
        $region73: #{tpu_custom_call.1} parent=55 // pred_check
          %p421 = pneg %p140
        $region74: #{tpu_custom_call.1} parent=55 // pred_check_branch
          %423 = sbr.rel (%p421) target = $region76
        $region75: #{tpu_custom_call.1} parent=55 // pred_region
          %424 = dma.done [#allocation11], 32
        $region76: #{tpu_custom_call.1} parent=55 // pred_fallthru
          _
        // Predicated region
        $region77: #{tpu_custom_call.1} parent=55 // pred_check
          %p425 = pneg %p161
        $region78: #{tpu_custom_call.1} parent=55 // pred_check_branch
          %427 = sbr.rel (%p425) target = $region80
        $region79: #{tpu_custom_call.1} parent=55 // pred_region
          %428 = dma.done [#allocation14], 3072
        $region80: #{tpu_custom_call.1} parent=55 // pred_fallthru
          _
        // Predicated region
        $region81: #{tpu_custom_call.1} parent=55 // pred_check
          %p429 = pneg %p182
        $region82: #{tpu_custom_call.1} parent=55 // pred_check_branch
          %431 = sbr.rel (%p429) target = $region84
        $region83: #{tpu_custom_call.1} parent=55 // pred_region
          %432 = dma.done [#allocation14], 128
        $region84: #{tpu_custom_call.1} parent=55 // pred_fallthru
          _
        // Predicated region
        $region85: #{tpu_custom_call.1} parent=55 // pred_check
          %p433 = pneg %p203
        $region86: #{tpu_custom_call.1} parent=55 // pred_check_branch
          %435 = sbr.rel (%p433) target = $region88
        $region87: #{tpu_custom_call.1} parent=55 // pred_region
          %436 = dma.done [#allocation17], 12288
        $region88: #{tpu_custom_call.1} parent=55 // pred_fallthru
          _
        // Predicated region
        $region89: #{tpu_custom_call.1} parent=55 // pred_check
          %p437 = pneg %p224
        $region90: #{tpu_custom_call.1} parent=55 // pred_check_branch
          %439 = sbr.rel (%p437) target = $region92
        $region91: #{tpu_custom_call.1} parent=55 // pred_region
          %440 = dma.done [#allocation17], 32
        $region92: #{tpu_custom_call.1} parent=55 // pred_fallthru
          _
        %p441 = pneg %p46
        %p442 = pneg %p43
        %s443 = sand.u32 %s30, 1
        %s444 = scalar_lea.sflag [#allocation8], %s443
        %s445 = sand.u32 %s59, 1
        %s446 = smul.addr %s445, 4096
        %s447 = scalar_lea.vmem [#allocation7], %s446
        %p448 = pneg %p72
        %p449 = pneg %p69
        %p450 = pneg %p93
        %p451 = pneg %p90
        %s452 = sand.u32 %s30, 1
        %s453 = scalar_lea.sflag [#allocation11], %s452
        %s454 = sand.u32 %s106, 1
        %s455 = smul.addr %s454, 1024
        %s456 = scalar_lea.vmem [#allocation10], %s455
        %p457 = pneg %p119
        %p458 = pneg %p116
        %p459 = pneg %p140
        %p460 = pneg %p137
        %p461 = pneg %p161
        %p462 = pneg %p158
        %p463 = pneg %p182
        %p464 = pneg %p179
        %p465 = pneg %p203
        %p466 = pneg %p200
        %p467 = pneg %p224
        %p468 = pneg %p221
        %p469 = pneg %p245
        %p470 = pneg %p242
        %s471 = smul.u32 8, %s30
        %s472 = smul.u32 128, %s30
        %p474 = scmp.eq.s32.totalorder %s30, 0
        // Predicated region
        $region93: #{tpu_custom_call.1} parent=55 // pred_check
          %p475 = pneg %p474
        $region94: #{tpu_custom_call.1} parent=55 // pred_check_branch
          %477 = sbr.rel (%p475) target = $region96
        $region95: #{tpu_custom_call.1} parent=55 // pred_region
          %478 = vst [vmem:[#allocation2] sm:$0xff] 0.0
          %479 = vst [vmem:[#allocation2 + $0x8] sm:$0xff] 0.0
          %v480 = vld [vmem:[#allocation13] sm:$0xff]
          %v481 = vld [vmem:[#allocation13 + $0x8] sm:$0xff]
          %v482 = vld [vmem:[#allocation13 + $0x10] sm:$0xff]
          %v483 = vld [vmem:[#allocation13 + $0x18] sm:$0xff]
          %v484 = vld [vmem:[#allocation13 + $0x20] sm:$0xff]
          %v485 = vld [vmem:[#allocation13 + $0x28] sm:$0xff]
          %v486 = vld [vmem:[#allocation13 + $0x30] sm:$0xff]
          %v487 = vld [vmem:[#allocation13 + $0x38] sm:$0xff]
          %v488 = vld [vmem:[#allocation13 + $0x40] sm:$0xff]
          %v489 = vld [vmem:[#allocation13 + $0x48] sm:$0xff]
          %v490 = vld [vmem:[#allocation13 + $0x50] sm:$0xff]
          %v491 = vld [vmem:[#allocation13 + $0x58] sm:$0xff]
          %v492 = vld [vmem:[#allocation13 + $0x60] sm:$0xff]
          %v493 = vld [vmem:[#allocation13 + $0x68] sm:$0xff]
          %v494 = vld [vmem:[#allocation13 + $0x70] sm:$0xff]
          %v495 = vld [vmem:[#allocation13 + $0x78] sm:$0xff]
          %v496 = vld [vmem:[#allocation13 + $0x80] sm:$0xff]
          %v497 = vld [vmem:[#allocation13 + $0x88] sm:$0xff]
          %v498 = vld [vmem:[#allocation13 + $0x90] sm:$0xff]
          %v499 = vld [vmem:[#allocation13 + $0x98] sm:$0xff]
          %v500 = vld [vmem:[#allocation13 + $0xa0] sm:$0xff]
          %v501 = vld [vmem:[#allocation13 + $0xa8] sm:$0xff]
          %v502 = vld [vmem:[#allocation13 + $0xb0] sm:$0xff]
          %v503 = vld [vmem:[#allocation13 + $0xb8] sm:$0xff]
          %v504 = vunpack.c.l.bf16 %v480
          %v505 = vunpack.c.h.bf16 %v480
          %v506 = vunpack.c.l.bf16 %v481
          %v507 = vunpack.c.h.bf16 %v481
          %v508 = vunpack.c.l.bf16 %v482
          %v509 = vunpack.c.h.bf16 %v482
          %v510 = vunpack.c.l.bf16 %v483
          %v511 = vunpack.c.h.bf16 %v483
          %v512 = vunpack.c.l.bf16 %v484
          %v513 = vunpack.c.h.bf16 %v484
          %v514 = vunpack.c.l.bf16 %v485
          %v515 = vunpack.c.h.bf16 %v485
          %v516 = vunpack.c.l.bf16 %v486
          %v517 = vunpack.c.h.bf16 %v486
          %v518 = vunpack.c.l.bf16 %v487
          %v519 = vunpack.c.h.bf16 %v487
          %v520 = vunpack.c.l.bf16 %v488
          %v521 = vunpack.c.h.bf16 %v488
          %v522 = vunpack.c.l.bf16 %v489
          %v523 = vunpack.c.h.bf16 %v489
          %v524 = vunpack.c.l.bf16 %v490
          %v525 = vunpack.c.h.bf16 %v490
          %v526 = vunpack.c.l.bf16 %v491
          %v527 = vunpack.c.h.bf16 %v491
          %v528 = vunpack.c.l.bf16 %v492
          %v529 = vunpack.c.h.bf16 %v492
          %v530 = vunpack.c.l.bf16 %v493
          %v531 = vunpack.c.h.bf16 %v493
          %v532 = vunpack.c.l.bf16 %v494
          %v533 = vunpack.c.h.bf16 %v494
          %v534 = vunpack.c.l.bf16 %v495
          %v535 = vunpack.c.h.bf16 %v495
          %v536 = vunpack.c.l.bf16 %v496
          %v537 = vunpack.c.h.bf16 %v496
          %v538 = vunpack.c.l.bf16 %v497
          %v539 = vunpack.c.h.bf16 %v497
          %v540 = vunpack.c.l.bf16 %v498
          %v541 = vunpack.c.h.bf16 %v498
          %v542 = vunpack.c.l.bf16 %v499
          %v543 = vunpack.c.h.bf16 %v499
          %v544 = vunpack.c.l.bf16 %v500
          %v545 = vunpack.c.h.bf16 %v500
          %v546 = vunpack.c.l.bf16 %v501
          %v547 = vunpack.c.h.bf16 %v501
          %v548 = vunpack.c.l.bf16 %v502
          %v549 = vunpack.c.h.bf16 %v502
          %v550 = vunpack.c.l.bf16 %v503
          %v551 = vunpack.c.h.bf16 %v503
          %v552 = vld [vmem:[#allocation15] sm:$0xff]
          %v553 = vlaneseq
          %v554 = vshrl.u32 %v553, 7
          %v555 = vsub.s32 0, %v554
          %v556 = vrot.slane %v552, %v555
          %558 = vbcast.lane.b32.xlu0 %v556, 256
          %v559 = vpop.permute.xlu0 %558
          %v560 = vlaneseq
          %v561 = vshrl.u32 %v560, 7
          %v562 = vsub.s32 1, %v561
          %v563 = vrot.slane %v552, %v562
          %565 = vbcast.lane.b32.xlu0 %v563, 256
          %v566 = vpop.permute.xlu0 %565
          %v567 = vlaneseq
          %v568 = vshrl.u32 %v567, 7
          %v569 = vsub.s32 2, %v568
          %v570 = vrot.slane %v552, %v569
          %572 = vbcast.lane.b32.xlu0 %v570, 256
          %v573 = vpop.permute.xlu0 %572
          %v574 = vlaneseq
          %v575 = vshrl.u32 %v574, 7
          %v576 = vsub.s32 3, %v575
          %v577 = vrot.slane %v552, %v576
          %579 = vbcast.lane.b32.xlu0 %v577, 256
          %v580 = vpop.permute.xlu0 %579
          %v581 = vlaneseq
          %v582 = vshrl.u32 %v581, 7
          %v583 = vsub.s32 4, %v582
          %v584 = vrot.slane %v552, %v583
          %586 = vbcast.lane.b32.xlu0 %v584, 256
          %v587 = vpop.permute.xlu0 %586
          %v588 = vlaneseq
          %v589 = vshrl.u32 %v588, 7
          %v590 = vsub.s32 5, %v589
          %v591 = vrot.slane %v552, %v590
          %593 = vbcast.lane.b32.xlu0 %v591, 256
          %v594 = vpop.permute.xlu0 %593
          %v595 = vlaneseq
          %v596 = vshrl.u32 %v595, 7
          %v597 = vsub.s32 6, %v596
          %v598 = vrot.slane %v552, %v597
          %600 = vbcast.lane.b32.xlu0 %v598, 256
          %v601 = vpop.permute.xlu0 %600
          %v602 = vlaneseq
          %v603 = vshrl.u32 %v602, 7
          %v604 = vsub.s32 7, %v603
          %v605 = vrot.slane %v552, %v604
          %607 = vbcast.lane.b32.xlu0 %v605, 256
          %v608 = vpop.permute.xlu0 %607
          %v609 = vmul.f32 %v504, %v559
          %v610 = vmul.f32 %v505, %v559
          %v611 = vmul.f32 %v506, %v559
          %v612 = vmul.f32 %v507, %v559
          %v613 = vmul.f32 %v508, %v559
          %v614 = vmul.f32 %v509, %v559
          %v615 = vmul.f32 %v510, %v566
          %v616 = vmul.f32 %v511, %v566
          %v617 = vmul.f32 %v512, %v566
          %v618 = vmul.f32 %v513, %v566
          %v619 = vmul.f32 %v514, %v566
          %v620 = vmul.f32 %v515, %v566
          %v621 = vmul.f32 %v516, %v573
          %v622 = vmul.f32 %v517, %v573
          %v623 = vmul.f32 %v518, %v573
          %v624 = vmul.f32 %v519, %v573
          %v625 = vmul.f32 %v520, %v573
          %v626 = vmul.f32 %v521, %v573
          %v627 = vmul.f32 %v522, %v580
          %v628 = vmul.f32 %v523, %v580
          %v629 = vmul.f32 %v524, %v580
          %v630 = vmul.f32 %v525, %v580
          %v631 = vmul.f32 %v526, %v580
          %v632 = vmul.f32 %v527, %v580
          %v633 = vmul.f32 %v528, %v587
          %v634 = vmul.f32 %v529, %v587
          %v635 = vmul.f32 %v530, %v587
          %v636 = vmul.f32 %v531, %v587
          %v637 = vmul.f32 %v532, %v587
          %v638 = vmul.f32 %v533, %v587
          %v639 = vmul.f32 %v534, %v594
          %v640 = vmul.f32 %v535, %v594
          %v641 = vmul.f32 %v536, %v594
          %v642 = vmul.f32 %v537, %v594
          %v643 = vmul.f32 %v538, %v594
          %v644 = vmul.f32 %v539, %v594
          %v645 = vmul.f32 %v540, %v601
          %v646 = vmul.f32 %v541, %v601
          %v647 = vmul.f32 %v542, %v601
          %v648 = vmul.f32 %v543, %v601
          %v649 = vmul.f32 %v544, %v601
          %v650 = vmul.f32 %v545, %v601
          %v651 = vmul.f32 %v546, %v608
          %v652 = vmul.f32 %v547, %v608
          %v653 = vmul.f32 %v548, %v608
          %v654 = vmul.f32 %v549, %v608
          %v655 = vmul.f32 %v550, %v608
          %v656 = vmul.f32 %v551, %v608
          %v657 = vrot.slane %v609, 4
          %v658 = vadd.f32 %v609, %v657
          %v659 = vrot.slane %v658, 2
          %v660 = vadd.f32 %v658, %v659
          %v661 = vrot.slane %v660, 1
          %v662 = vadd.f32 %v660, %v661
          %v663 = vrot.slane %v610, 4
          %v664 = vadd.f32 %v610, %v663
          %v665 = vrot.slane %v664, 2
          %v666 = vadd.f32 %v664, %v665
          %v667 = vrot.slane %v666, 1
          %v668 = vadd.f32 %v666, %v667
          %v669 = vrot.slane %v611, 4
          %v670 = vadd.f32 %v611, %v669
          %v671 = vrot.slane %v670, 2
          %v672 = vadd.f32 %v670, %v671
          %v673 = vrot.slane %v672, 1
          %v674 = vadd.f32 %v672, %v673
          %v675 = vrot.slane %v612, 4
          %v676 = vadd.f32 %v612, %v675
          %v677 = vrot.slane %v676, 2
          %v678 = vadd.f32 %v676, %v677
          %v679 = vrot.slane %v678, 1
          %v680 = vadd.f32 %v678, %v679
          %v681 = vrot.slane %v613, 4
          %v682 = vadd.f32 %v613, %v681
          %v683 = vrot.slane %v682, 2
          %v684 = vadd.f32 %v682, %v683
          %v685 = vrot.slane %v684, 1
          %v686 = vadd.f32 %v684, %v685
          %v687 = vrot.slane %v614, 4
          %v688 = vadd.f32 %v614, %v687
          %v689 = vrot.slane %v688, 2
          %v690 = vadd.f32 %v688, %v689
          %v691 = vrot.slane %v690, 1
          %v692 = vadd.f32 %v690, %v691
          %v693 = vrot.slane %v615, 4
          %v694 = vadd.f32 %v615, %v693
          %v695 = vrot.slane %v694, 2
          %v696 = vadd.f32 %v694, %v695
          %v697 = vrot.slane %v696, 1
          %v698 = vadd.f32 %v696, %v697
          %v699 = vrot.slane %v616, 4
          %v700 = vadd.f32 %v616, %v699
          %v701 = vrot.slane %v700, 2
          %v702 = vadd.f32 %v700, %v701
          %v703 = vrot.slane %v702, 1
          %v704 = vadd.f32 %v702, %v703
          %v705 = vrot.slane %v617, 4
          %v706 = vadd.f32 %v617, %v705
          %v707 = vrot.slane %v706, 2
          %v708 = vadd.f32 %v706, %v707
          %v709 = vrot.slane %v708, 1
          %v710 = vadd.f32 %v708, %v709
          %v711 = vrot.slane %v618, 4
          %v712 = vadd.f32 %v618, %v711
          %v713 = vrot.slane %v712, 2
          %v714 = vadd.f32 %v712, %v713
          %v715 = vrot.slane %v714, 1
          %v716 = vadd.f32 %v714, %v715
          %v717 = vrot.slane %v619, 4
          %v718 = vadd.f32 %v619, %v717
          %v719 = vrot.slane %v718, 2
          %v720 = vadd.f32 %v718, %v719
          %v721 = vrot.slane %v720, 1
          %v722 = vadd.f32 %v720, %v721
          %v723 = vrot.slane %v620, 4
          %v724 = vadd.f32 %v620, %v723
          %v725 = vrot.slane %v724, 2
          %v726 = vadd.f32 %v724, %v725
          %v727 = vrot.slane %v726, 1
          %v728 = vadd.f32 %v726, %v727
          %v729 = vrot.slane %v621, 4
          %v730 = vadd.f32 %v621, %v729
          %v731 = vrot.slane %v730, 2
          %v732 = vadd.f32 %v730, %v731
          %v733 = vrot.slane %v732, 1
          %v734 = vadd.f32 %v732, %v733
          %v735 = vrot.slane %v622, 4
          %v736 = vadd.f32 %v622, %v735
          %v737 = vrot.slane %v736, 2
          %v738 = vadd.f32 %v736, %v737
          %v739 = vrot.slane %v738, 1
          %v740 = vadd.f32 %v738, %v739
          %v741 = vrot.slane %v623, 4
          %v742 = vadd.f32 %v623, %v741
          %v743 = vrot.slane %v742, 2
          %v744 = vadd.f32 %v742, %v743
          %v745 = vrot.slane %v744, 1
          %v746 = vadd.f32 %v744, %v745
          %v747 = vrot.slane %v624, 4
          %v748 = vadd.f32 %v624, %v747
          %v749 = vrot.slane %v748, 2
          %v750 = vadd.f32 %v748, %v749
          %v751 = vrot.slane %v750, 1
          %v752 = vadd.f32 %v750, %v751
          %v753 = vrot.slane %v625, 4
          %v754 = vadd.f32 %v625, %v753
          %v755 = vrot.slane %v754, 2
          %v756 = vadd.f32 %v754, %v755
          %v757 = vrot.slane %v756, 1
          %v758 = vadd.f32 %v756, %v757
          %v759 = vrot.slane %v626, 4
          %v760 = vadd.f32 %v626, %v759
          %v761 = vrot.slane %v760, 2
          %v762 = vadd.f32 %v760, %v761
          %v763 = vrot.slane %v762, 1
          %v764 = vadd.f32 %v762, %v763
          %v765 = vrot.slane %v627, 4
          %v766 = vadd.f32 %v627, %v765
          %v767 = vrot.slane %v766, 2
          %v768 = vadd.f32 %v766, %v767
          %v769 = vrot.slane %v768, 1
          %v770 = vadd.f32 %v768, %v769
          %v771 = vrot.slane %v628, 4
          %v772 = vadd.f32 %v628, %v771
          %v773 = vrot.slane %v772, 2
          %v774 = vadd.f32 %v772, %v773
          %v775 = vrot.slane %v774, 1
          %v776 = vadd.f32 %v774, %v775
          %v777 = vrot.slane %v629, 4
          %v778 = vadd.f32 %v629, %v777
          %v779 = vrot.slane %v778, 2
          %v780 = vadd.f32 %v778, %v779
          %v781 = vrot.slane %v780, 1
          %v782 = vadd.f32 %v780, %v781
          %v783 = vrot.slane %v630, 4
          %v784 = vadd.f32 %v630, %v783
          %v785 = vrot.slane %v784, 2
          %v786 = vadd.f32 %v784, %v785
          %v787 = vrot.slane %v786, 1
          %v788 = vadd.f32 %v786, %v787
          %v789 = vrot.slane %v631, 4
          %v790 = vadd.f32 %v631, %v789
          %v791 = vrot.slane %v790, 2
          %v792 = vadd.f32 %v790, %v791
          %v793 = vrot.slane %v792, 1
          %v794 = vadd.f32 %v792, %v793
          %v795 = vrot.slane %v632, 4
          %v796 = vadd.f32 %v632, %v795
          %v797 = vrot.slane %v796, 2
          %v798 = vadd.f32 %v796, %v797
          %v799 = vrot.slane %v798, 1
          %v800 = vadd.f32 %v798, %v799
          %v801 = vrot.slane %v633, 4
          %v802 = vadd.f32 %v633, %v801
          %v803 = vrot.slane %v802, 2
          %v804 = vadd.f32 %v802, %v803
          %v805 = vrot.slane %v804, 1
          %v806 = vadd.f32 %v804, %v805
          %v807 = vrot.slane %v634, 4
          %v808 = vadd.f32 %v634, %v807
          %v809 = vrot.slane %v808, 2
          %v810 = vadd.f32 %v808, %v809
          %v811 = vrot.slane %v810, 1
          %v812 = vadd.f32 %v810, %v811
          %v813 = vrot.slane %v635, 4
          %v814 = vadd.f32 %v635, %v813
          %v815 = vrot.slane %v814, 2
          %v816 = vadd.f32 %v814, %v815
          %v817 = vrot.slane %v816, 1
          %v818 = vadd.f32 %v816, %v817
          %v819 = vrot.slane %v636, 4
          %v820 = vadd.f32 %v636, %v819
          %v821 = vrot.slane %v820, 2
          %v822 = vadd.f32 %v820, %v821
          %v823 = vrot.slane %v822, 1
          %v824 = vadd.f32 %v822, %v823
          %v825 = vrot.slane %v637, 4
          %v826 = vadd.f32 %v637, %v825
          %v827 = vrot.slane %v826, 2
          %v828 = vadd.f32 %v826, %v827
          %v829 = vrot.slane %v828, 1
          %v830 = vadd.f32 %v828, %v829
          %v831 = vrot.slane %v638, 4
          %v832 = vadd.f32 %v638, %v831
          %v833 = vrot.slane %v832, 2
          %v834 = vadd.f32 %v832, %v833
          %v835 = vrot.slane %v834, 1
          %v836 = vadd.f32 %v834, %v835
          %v837 = vrot.slane %v639, 4
          %v838 = vadd.f32 %v639, %v837
          %v839 = vrot.slane %v838, 2
          %v840 = vadd.f32 %v838, %v839
          %v841 = vrot.slane %v840, 1
          %v842 = vadd.f32 %v840, %v841
          %v843 = vrot.slane %v640, 4
          %v844 = vadd.f32 %v640, %v843
          %v845 = vrot.slane %v844, 2
          %v846 = vadd.f32 %v844, %v845
          %v847 = vrot.slane %v846, 1
          %v848 = vadd.f32 %v846, %v847
          %v849 = vrot.slane %v641, 4
          %v850 = vadd.f32 %v641, %v849
          %v851 = vrot.slane %v850, 2
          %v852 = vadd.f32 %v850, %v851
          %v853 = vrot.slane %v852, 1
          %v854 = vadd.f32 %v852, %v853
          %v855 = vrot.slane %v642, 4
          %v856 = vadd.f32 %v642, %v855
          %v857 = vrot.slane %v856, 2
          %v858 = vadd.f32 %v856, %v857
          %v859 = vrot.slane %v858, 1
          %v860 = vadd.f32 %v858, %v859
          %v861 = vrot.slane %v643, 4
          %v862 = vadd.f32 %v643, %v861
          %v863 = vrot.slane %v862, 2
          %v864 = vadd.f32 %v862, %v863
          %v865 = vrot.slane %v864, 1
          %v866 = vadd.f32 %v864, %v865
          %v867 = vrot.slane %v644, 4
          %v868 = vadd.f32 %v644, %v867
          %v869 = vrot.slane %v868, 2
          %v870 = vadd.f32 %v868, %v869
          %v871 = vrot.slane %v870, 1
          %v872 = vadd.f32 %v870, %v871
          %v873 = vrot.slane %v645, 4
          %v874 = vadd.f32 %v645, %v873
          %v875 = vrot.slane %v874, 2
          %v876 = vadd.f32 %v874, %v875
          %v877 = vrot.slane %v876, 1
          %v878 = vadd.f32 %v876, %v877
          %v879 = vrot.slane %v646, 4
          %v880 = vadd.f32 %v646, %v879
          %v881 = vrot.slane %v880, 2
          %v882 = vadd.f32 %v880, %v881
          %v883 = vrot.slane %v882, 1
          %v884 = vadd.f32 %v882, %v883
          %v885 = vrot.slane %v647, 4
          %v886 = vadd.f32 %v647, %v885
          %v887 = vrot.slane %v886, 2
          %v888 = vadd.f32 %v886, %v887
          %v889 = vrot.slane %v888, 1
          %v890 = vadd.f32 %v888, %v889
          %v891 = vrot.slane %v648, 4
          %v892 = vadd.f32 %v648, %v891
          %v893 = vrot.slane %v892, 2
          %v894 = vadd.f32 %v892, %v893
          %v895 = vrot.slane %v894, 1
          %v896 = vadd.f32 %v894, %v895
          %v897 = vrot.slane %v649, 4
          %v898 = vadd.f32 %v649, %v897
          %v899 = vrot.slane %v898, 2
          %v900 = vadd.f32 %v898, %v899
          %v901 = vrot.slane %v900, 1
          %v902 = vadd.f32 %v900, %v901
          %v903 = vrot.slane %v650, 4
          %v904 = vadd.f32 %v650, %v903
          %v905 = vrot.slane %v904, 2
          %v906 = vadd.f32 %v904, %v905
          %v907 = vrot.slane %v906, 1
          %v908 = vadd.f32 %v906, %v907
          %v909 = vrot.slane %v651, 4
          %v910 = vadd.f32 %v651, %v909
          %v911 = vrot.slane %v910, 2
          %v912 = vadd.f32 %v910, %v911
          %v913 = vrot.slane %v912, 1
          %v914 = vadd.f32 %v912, %v913
          %v915 = vrot.slane %v652, 4
          %v916 = vadd.f32 %v652, %v915
          %v917 = vrot.slane %v916, 2
          %v918 = vadd.f32 %v916, %v917
          %v919 = vrot.slane %v918, 1
          %v920 = vadd.f32 %v918, %v919
          %v921 = vrot.slane %v653, 4
          %v922 = vadd.f32 %v653, %v921
          %v923 = vrot.slane %v922, 2
          %v924 = vadd.f32 %v922, %v923
          %v925 = vrot.slane %v924, 1
          %v926 = vadd.f32 %v924, %v925
          %v927 = vrot.slane %v654, 4
          %v928 = vadd.f32 %v654, %v927
          %v929 = vrot.slane %v928, 2
          %v930 = vadd.f32 %v928, %v929
          %v931 = vrot.slane %v930, 1
          %v932 = vadd.f32 %v930, %v931
          %v933 = vrot.slane %v655, 4
          %v934 = vadd.f32 %v655, %v933
          %v935 = vrot.slane %v934, 2
          %v936 = vadd.f32 %v934, %v935
          %v937 = vrot.slane %v936, 1
          %v938 = vadd.f32 %v936, %v937
          %v939 = vrot.slane %v656, 4
          %v940 = vadd.f32 %v656, %v939
          %v941 = vrot.slane %v940, 2
          %v942 = vadd.f32 %v940, %v941
          %v943 = vrot.slane %v942, 1
          %v944 = vadd.f32 %v942, %v943
          %vm945 = vcmask 64512
          %v946 = vsel %vm945, %v552, 0.0
          %947 = vadd.xlane.f32.xlu0 %v946
          %v948 = vpop.xlane.xlu0 %947
          %v949 = vmax.f32 %v948, 1.0
          %v951 = vrot.slane %v949, 1
          %v952 = vrot.slane %v949, 2
          %v953 = vrot.slane %v949, 3
          %v954 = vrot.slane %v949, 4
          %v955 = vrot.slane %v949, 5
          %v956 = vrot.slane %v949, 6
          %v957 = vrot.slane %v949, 7
          %v966 = vrcp.pop %v949
          %v967 = vmul.f32 %v662, %v966
          %v968 = vmul.f32 %v668, %v966
          %v969 = vmul.f32 %v674, %v966
          %v970 = vmul.f32 %v680, %v966
          %v971 = vmul.f32 %v686, %v966
          %v972 = vmul.f32 %v692, %v966
          %v973 = vrcp.pop %v951
          %v974 = vmul.f32 %v698, %v973
          %v975 = vmul.f32 %v704, %v973
          %v976 = vmul.f32 %v710, %v973
          %v977 = vmul.f32 %v716, %v973
          %v978 = vmul.f32 %v722, %v973
          %v979 = vmul.f32 %v728, %v973
          %v980 = vrcp.pop %v952
          %v981 = vmul.f32 %v734, %v980
          %v982 = vmul.f32 %v740, %v980
          %v983 = vmul.f32 %v746, %v980
          %v984 = vmul.f32 %v752, %v980
          %v985 = vmul.f32 %v758, %v980
          %v986 = vmul.f32 %v764, %v980
          %v987 = vrcp.pop %v953
          %v988 = vmul.f32 %v770, %v987
          %v989 = vmul.f32 %v776, %v987
          %v990 = vmul.f32 %v782, %v987
          %v991 = vmul.f32 %v788, %v987
          %v992 = vmul.f32 %v794, %v987
          %v993 = vmul.f32 %v800, %v987
          %v994 = vrcp.pop %v954
          %v995 = vmul.f32 %v806, %v994
          %v996 = vmul.f32 %v812, %v994
          %v997 = vmul.f32 %v818, %v994
          %v998 = vmul.f32 %v824, %v994
          %v999 = vmul.f32 %v830, %v994
          %v1000 = vmul.f32 %v836, %v994
          %v1001 = vrcp.pop %v955
          %v1002 = vmul.f32 %v842, %v1001
          %v1003 = vmul.f32 %v848, %v1001
          %v1004 = vmul.f32 %v854, %v1001
          %v1005 = vmul.f32 %v860, %v1001
          %v1006 = vmul.f32 %v866, %v1001
          %v1007 = vmul.f32 %v872, %v1001
          %v1008 = vrcp.pop %v956
          %v1009 = vmul.f32 %v878, %v1008
          %v1010 = vmul.f32 %v884, %v1008
          %v1011 = vmul.f32 %v890, %v1008
          %v1012 = vmul.f32 %v896, %v1008
          %v1013 = vmul.f32 %v902, %v1008
          %v1014 = vmul.f32 %v908, %v1008
          %v1015 = vrcp.pop %v957
          %v1016 = vmul.f32 %v914, %v1015
          %v1017 = vmul.f32 %v920, %v1015
          %v1018 = vmul.f32 %v926, %v1015
          %v1019 = vmul.f32 %v932, %v1015
          %v1020 = vmul.f32 %v938, %v1015
          %v1021 = vmul.f32 %v944, %v1015
          %v1022 = vpack.c.bf16 %v967, %v967
          %v1023 = vpack.c.bf16 %v968, %v968
          %v1024 = vpack.c.bf16 %v969, %v969
          %v1025 = vpack.c.bf16 %v970, %v970
          %v1026 = vpack.c.bf16 %v971, %v971
          %v1027 = vpack.c.bf16 %v972, %v972
          %v1028 = vpack.c.bf16 %v974, %v974
          %v1029 = vpack.c.bf16 %v975, %v975
          %v1030 = vpack.c.bf16 %v976, %v976
          %v1031 = vpack.c.bf16 %v977, %v977
          %v1032 = vpack.c.bf16 %v978, %v978
          %v1033 = vpack.c.bf16 %v979, %v979
          %v1034 = vpack.c.bf16 %v981, %v981
          %v1035 = vpack.c.bf16 %v982, %v982
          %v1036 = vpack.c.bf16 %v983, %v983
          %v1037 = vpack.c.bf16 %v984, %v984
          %v1038 = vpack.c.bf16 %v985, %v985
          %v1039 = vpack.c.bf16 %v986, %v986
          %v1040 = vpack.c.bf16 %v988, %v988
          %v1041 = vpack.c.bf16 %v989, %v989
          %v1042 = vpack.c.bf16 %v990, %v990
          %v1043 = vpack.c.bf16 %v991, %v991
          %v1044 = vpack.c.bf16 %v992, %v992
          %v1045 = vpack.c.bf16 %v993, %v993
          %v1046 = vpack.c.bf16 %v995, %v995
          %v1047 = vpack.c.bf16 %v996, %v996
          %v1048 = vpack.c.bf16 %v997, %v997
          %v1049 = vpack.c.bf16 %v998, %v998
          %v1050 = vpack.c.bf16 %v999, %v999
          %v1051 = vpack.c.bf16 %v1000, %v1000
          %v1052 = vpack.c.bf16 %v1002, %v1002
          %v1053 = vpack.c.bf16 %v1003, %v1003
          %v1054 = vpack.c.bf16 %v1004, %v1004
          %v1055 = vpack.c.bf16 %v1005, %v1005
          %v1056 = vpack.c.bf16 %v1006, %v1006
          %v1057 = vpack.c.bf16 %v1007, %v1007
          %v1058 = vpack.c.bf16 %v1009, %v1009
          %v1059 = vpack.c.bf16 %v1010, %v1010
          %v1060 = vpack.c.bf16 %v1011, %v1011
          %v1061 = vpack.c.bf16 %v1012, %v1012
          %v1062 = vpack.c.bf16 %v1013, %v1013
          %v1063 = vpack.c.bf16 %v1014, %v1014
          %v1064 = vpack.c.bf16 %v1016, %v1016
          %v1065 = vpack.c.bf16 %v1017, %v1017
          %v1066 = vpack.c.bf16 %v1018, %v1018
          %v1067 = vpack.c.bf16 %v1019, %v1019
          %v1068 = vpack.c.bf16 %v1020, %v1020
          %v1069 = vpack.c.bf16 %v1021, %v1021
          %v1070 = vld [vmem:[#allocation16] sm:$0xff]
          %v1071 = vld [vmem:[#allocation16 + $0x8] sm:$0xff]
          %v1072 = vld [vmem:[#allocation16 + $0x10] sm:$0xff]
          %v1073 = vld [vmem:[#allocation16 + $0x18] sm:$0xff]
          %v1074 = vld [vmem:[#allocation16 + $0x20] sm:$0xff]
          %v1075 = vld [vmem:[#allocation16 + $0x28] sm:$0xff]
          %v1076 = vld [vmem:[#allocation16 + $0x30] sm:$0xff]
          %v1077 = vld [vmem:[#allocation16 + $0x38] sm:$0xff]
          %v1078 = vld [vmem:[#allocation16 + $0x40] sm:$0xff]
          %v1079 = vld [vmem:[#allocation16 + $0x48] sm:$0xff]
          %v1080 = vld [vmem:[#allocation16 + $0x50] sm:$0xff]
          %v1081 = vld [vmem:[#allocation16 + $0x58] sm:$0xff]
          %v1082 = vld [vmem:[#allocation16 + $0x60] sm:$0xff]
          %v1083 = vld [vmem:[#allocation16 + $0x68] sm:$0xff]
          %v1084 = vld [vmem:[#allocation16 + $0x70] sm:$0xff]
          %v1085 = vld [vmem:[#allocation16 + $0x78] sm:$0xff]
          %v1086 = vld [vmem:[#allocation16 + $0x80] sm:$0xff]
          %v1087 = vld [vmem:[#allocation16 + $0x88] sm:$0xff]
          %v1088 = vld [vmem:[#allocation16 + $0x90] sm:$0xff]
          %v1089 = vld [vmem:[#allocation16 + $0x98] sm:$0xff]
          %v1090 = vld [vmem:[#allocation16 + $0xa0] sm:$0xff]
          %v1091 = vld [vmem:[#allocation16 + $0xa8] sm:$0xff]
          %v1092 = vld [vmem:[#allocation16 + $0xb0] sm:$0xff]
          %v1093 = vld [vmem:[#allocation16 + $0xb8] sm:$0xff]
          %v1094 = vld [vmem:[#allocation16 + $0xc0] sm:$0xff]
          %v1095 = vld [vmem:[#allocation16 + $0xc8] sm:$0xff]
          %v1096 = vld [vmem:[#allocation16 + $0xd0] sm:$0xff]
          %v1097 = vld [vmem:[#allocation16 + $0xd8] sm:$0xff]
          %v1098 = vld [vmem:[#allocation16 + $0xe0] sm:$0xff]
          %v1099 = vld [vmem:[#allocation16 + $0xe8] sm:$0xff]
          %v1100 = vld [vmem:[#allocation16 + $0xf0] sm:$0xff]
          %v1101 = vld [vmem:[#allocation16 + $0xf8] sm:$0xff]
          %v1102 = vld [vmem:[#allocation16 + $0x100] sm:$0xff]
          %v1103 = vld [vmem:[#allocation16 + $0x108] sm:$0xff]
          %v1104 = vld [vmem:[#allocation16 + $0x110] sm:$0xff]
          %v1105 = vld [vmem:[#allocation16 + $0x118] sm:$0xff]
          %v1106 = vld [vmem:[#allocation16 + $0x120] sm:$0xff]
          %v1107 = vld [vmem:[#allocation16 + $0x128] sm:$0xff]
          %v1108 = vld [vmem:[#allocation16 + $0x130] sm:$0xff]
          %v1109 = vld [vmem:[#allocation16 + $0x138] sm:$0xff]
          %v1110 = vld [vmem:[#allocation16 + $0x140] sm:$0xff]
          %v1111 = vld [vmem:[#allocation16 + $0x148] sm:$0xff]
          %v1112 = vld [vmem:[#allocation16 + $0x150] sm:$0xff]
          %v1113 = vld [vmem:[#allocation16 + $0x158] sm:$0xff]
          %v1114 = vld [vmem:[#allocation16 + $0x160] sm:$0xff]
          %v1115 = vld [vmem:[#allocation16 + $0x168] sm:$0xff]
          %v1116 = vld [vmem:[#allocation16 + $0x170] sm:$0xff]
          %v1117 = vld [vmem:[#allocation16 + $0x178] sm:$0xff]
          %v1118 = vld [vmem:[#allocation16 + $0x180] sm:$0xff]
          %v1119 = vld [vmem:[#allocation16 + $0x188] sm:$0xff]
          %v1120 = vld [vmem:[#allocation16 + $0x190] sm:$0xff]
          %v1121 = vld [vmem:[#allocation16 + $0x198] sm:$0xff]
          %v1122 = vld [vmem:[#allocation16 + $0x1a0] sm:$0xff]
          %v1123 = vld [vmem:[#allocation16 + $0x1a8] sm:$0xff]
          %v1124 = vld [vmem:[#allocation16 + $0x1b0] sm:$0xff]
          %v1125 = vld [vmem:[#allocation16 + $0x1b8] sm:$0xff]
          %v1126 = vld [vmem:[#allocation16 + $0x1c0] sm:$0xff]
          %v1127 = vld [vmem:[#allocation16 + $0x1c8] sm:$0xff]
          %v1128 = vld [vmem:[#allocation16 + $0x1d0] sm:$0xff]
          %v1129 = vld [vmem:[#allocation16 + $0x1d8] sm:$0xff]
          %v1130 = vld [vmem:[#allocation16 + $0x1e0] sm:$0xff]
          %v1131 = vld [vmem:[#allocation16 + $0x1e8] sm:$0xff]
          %v1132 = vld [vmem:[#allocation16 + $0x1f0] sm:$0xff]
          %v1133 = vld [vmem:[#allocation16 + $0x1f8] sm:$0xff]
          %v1134 = vld [vmem:[#allocation16 + $0x200] sm:$0xff]
          %v1135 = vld [vmem:[#allocation16 + $0x208] sm:$0xff]
          %v1136 = vld [vmem:[#allocation16 + $0x210] sm:$0xff]
          %v1137 = vld [vmem:[#allocation16 + $0x218] sm:$0xff]
          %v1138 = vld [vmem:[#allocation16 + $0x220] sm:$0xff]
          %v1139 = vld [vmem:[#allocation16 + $0x228] sm:$0xff]
          %v1140 = vld [vmem:[#allocation16 + $0x230] sm:$0xff]
          %v1141 = vld [vmem:[#allocation16 + $0x238] sm:$0xff]
          %v1142 = vld [vmem:[#allocation16 + $0x240] sm:$0xff]
          %v1143 = vld [vmem:[#allocation16 + $0x248] sm:$0xff]
          %v1144 = vld [vmem:[#allocation16 + $0x250] sm:$0xff]
          %v1145 = vld [vmem:[#allocation16 + $0x258] sm:$0xff]
          %v1146 = vld [vmem:[#allocation16 + $0x260] sm:$0xff]
          %v1147 = vld [vmem:[#allocation16 + $0x268] sm:$0xff]
          %v1148 = vld [vmem:[#allocation16 + $0x270] sm:$0xff]
          %v1149 = vld [vmem:[#allocation16 + $0x278] sm:$0xff]
          %v1150 = vld [vmem:[#allocation16 + $0x280] sm:$0xff]
          %v1151 = vld [vmem:[#allocation16 + $0x288] sm:$0xff]
          %v1152 = vld [vmem:[#allocation16 + $0x290] sm:$0xff]
          %v1153 = vld [vmem:[#allocation16 + $0x298] sm:$0xff]
          %v1154 = vld [vmem:[#allocation16 + $0x2a0] sm:$0xff]
          %v1155 = vld [vmem:[#allocation16 + $0x2a8] sm:$0xff]
          %v1156 = vld [vmem:[#allocation16 + $0x2b0] sm:$0xff]
          %v1157 = vld [vmem:[#allocation16 + $0x2b8] sm:$0xff]
          %v1158 = vld [vmem:[#allocation16 + $0x2c0] sm:$0xff]
          %v1159 = vld [vmem:[#allocation16 + $0x2c8] sm:$0xff]
          %v1160 = vld [vmem:[#allocation16 + $0x2d0] sm:$0xff]
          %v1161 = vld [vmem:[#allocation16 + $0x2d8] sm:$0xff]
          %v1162 = vld [vmem:[#allocation16 + $0x2e0] sm:$0xff]
          %v1163 = vld [vmem:[#allocation16 + $0x2e8] sm:$0xff]
          %v1164 = vld [vmem:[#allocation16 + $0x2f0] sm:$0xff]
          %v1165 = vld [vmem:[#allocation16 + $0x2f8] sm:$0xff]
          %v1166 = vld [vmem:[#allocation18] sm:$0x3]
          %v1168 = vlaneseq
          %v1169 = vshrl.u32 %v1168, 7
          %v1170 = vsub.s32 0, %v1169
          %v1171 = vrot.slane %v1166, %v1170
          %v1172 = vlaneseq
          %v1173 = vshrl.u32 %v1172, 7
          %v1174 = vsub.s32 1, %v1173
          %v1175 = vrot.slane %v1166, %v1174
          %v1226 = vunpack.c.l.b16 %v1022
          %v1227 = vunpack.c.l.b16 %v1023
          %v1228 = vunpack.c.l.b16 %v1024
          %v1229 = vunpack.c.l.b16 %v1025
          %v1230 = vunpack.c.l.b16 %v1026
          %v1231 = vunpack.c.l.b16 %v1027
          %v1232 = vunpack.c.l.b16 %v1028
          %v1233 = vunpack.c.l.b16 %v1029
          %v1234 = vunpack.c.l.b16 %v1030
          %v1235 = vunpack.c.l.b16 %v1031
          %v1236 = vunpack.c.l.b16 %v1032
          %v1237 = vunpack.c.l.b16 %v1033
          %v1238 = vunpack.c.l.b16 %v1034
          %v1239 = vunpack.c.l.b16 %v1035
          %v1240 = vunpack.c.l.b16 %v1036
          %v1241 = vunpack.c.l.b16 %v1037
          %v1242 = vunpack.c.l.b16 %v1038
          %v1243 = vunpack.c.l.b16 %v1039
          %v1244 = vunpack.c.l.b16 %v1040
          %v1245 = vunpack.c.l.b16 %v1041
          %v1246 = vunpack.c.l.b16 %v1042
          %v1247 = vunpack.c.l.b16 %v1043
          %v1248 = vunpack.c.l.b16 %v1044
          %v1249 = vunpack.c.l.b16 %v1045
          %v1250 = vunpack.c.l.b16 %v1046
          %v1251 = vunpack.c.l.b16 %v1047
          %v1252 = vunpack.c.l.b16 %v1048
          %v1253 = vunpack.c.l.b16 %v1049
          %v1254 = vunpack.c.l.b16 %v1050
          %v1255 = vunpack.c.l.b16 %v1051
          %v1256 = vunpack.c.l.b16 %v1052
          %v1257 = vunpack.c.l.b16 %v1053
          %v1258 = vunpack.c.l.b16 %v1054
          %v1259 = vunpack.c.l.b16 %v1055
          %v1260 = vunpack.c.l.b16 %v1056
          %v1261 = vunpack.c.l.b16 %v1057
          %v1262 = vunpack.c.l.b16 %v1058
          %v1263 = vunpack.c.l.b16 %v1059
          %v1264 = vunpack.c.l.b16 %v1060
          %v1265 = vunpack.c.l.b16 %v1061
          %v1266 = vunpack.c.l.b16 %v1062
          %v1267 = vunpack.c.l.b16 %v1063
          %v1268 = vunpack.c.l.b16 %v1064
          %v1269 = vunpack.c.l.b16 %v1065
          %v1270 = vunpack.c.l.b16 %v1066
          %v1271 = vunpack.c.l.b16 %v1067
          %v1272 = vunpack.c.l.b16 %v1068
          %v1273 = vunpack.c.l.b16 %v1069
          %v1274 = vrot.slane %v1232, 7
          %vm1275 = vcmask 1041409
          %v1276 = vsel %vm1275, %v1274, %v1226
          %v1277 = vrot.slane %v1238, 6
          %vm1278 = vcmask 1042434
          %v1279 = vsel %vm1278, %v1277, %v1276
          %v1280 = vrot.slane %v1244, 5
          %vm1281 = vcmask 1043459
          %v1282 = vsel %vm1281, %v1280, %v1279
          %v1283 = vrot.slane %v1250, 4
          %vm1284 = vcmask 1044484
          %v1285 = vsel %vm1284, %v1283, %v1282
          %v1286 = vrot.slane %v1256, 3
          %vm1287 = vcmask 1045509
          %v1288 = vsel %vm1287, %v1286, %v1285
          %v1289 = vrot.slane %v1262, 2
          %vm1290 = vcmask 1046534
          %v1291 = vsel %vm1290, %v1289, %v1288
          %v1292 = vrot.slane %v1268, 1
          %vm1293 = vcmask 1047559
          %v1294 = vsel %vm1293, %v1292, %v1291
          %v1295 = vrot.slane %v1233, 7
          %v1296 = vsel %vm1275, %v1295, %v1227
          %v1297 = vrot.slane %v1239, 6
          %v1298 = vsel %vm1278, %v1297, %v1296
          %v1299 = vrot.slane %v1245, 5
          %v1300 = vsel %vm1281, %v1299, %v1298
          %v1301 = vrot.slane %v1251, 4
          %v1302 = vsel %vm1284, %v1301, %v1300
          %v1303 = vrot.slane %v1257, 3
          %v1304 = vsel %vm1287, %v1303, %v1302
          %v1305 = vrot.slane %v1263, 2
          %v1306 = vsel %vm1290, %v1305, %v1304
          %v1307 = vrot.slane %v1269, 1
          %v1308 = vsel %vm1293, %v1307, %v1306
          %v1309 = vrot.slane %v1234, 7
          %v1310 = vsel %vm1275, %v1309, %v1228
          %v1311 = vrot.slane %v1240, 6
          %v1312 = vsel %vm1278, %v1311, %v1310
          %v1313 = vrot.slane %v1246, 5
          %v1314 = vsel %vm1281, %v1313, %v1312
          %v1315 = vrot.slane %v1252, 4
          %v1316 = vsel %vm1284, %v1315, %v1314
          %v1317 = vrot.slane %v1258, 3
          %v1318 = vsel %vm1287, %v1317, %v1316
          %v1319 = vrot.slane %v1264, 2
          %v1320 = vsel %vm1290, %v1319, %v1318
          %v1321 = vrot.slane %v1270, 1
          %v1322 = vsel %vm1293, %v1321, %v1320
          %v1323 = vrot.slane %v1235, 7
          %v1324 = vsel %vm1275, %v1323, %v1229
          %v1325 = vrot.slane %v1241, 6
          %v1326 = vsel %vm1278, %v1325, %v1324
          %v1327 = vrot.slane %v1247, 5
          %v1328 = vsel %vm1281, %v1327, %v1326
          %v1329 = vrot.slane %v1253, 4
          %v1330 = vsel %vm1284, %v1329, %v1328
          %v1331 = vrot.slane %v1259, 3
          %v1332 = vsel %vm1287, %v1331, %v1330
          %v1333 = vrot.slane %v1265, 2
          %v1334 = vsel %vm1290, %v1333, %v1332
          %v1335 = vrot.slane %v1271, 1
          %v1336 = vsel %vm1293, %v1335, %v1334
          %v1337 = vrot.slane %v1236, 7
          %v1338 = vsel %vm1275, %v1337, %v1230
          %v1339 = vrot.slane %v1242, 6
          %v1340 = vsel %vm1278, %v1339, %v1338
          %v1341 = vrot.slane %v1248, 5
          %v1342 = vsel %vm1281, %v1341, %v1340
          %v1343 = vrot.slane %v1254, 4
          %v1344 = vsel %vm1284, %v1343, %v1342
          %v1345 = vrot.slane %v1260, 3
          %v1346 = vsel %vm1287, %v1345, %v1344
          %v1347 = vrot.slane %v1266, 2
          %v1348 = vsel %vm1290, %v1347, %v1346
          %v1349 = vrot.slane %v1272, 1
          %v1350 = vsel %vm1293, %v1349, %v1348
          %v1351 = vrot.slane %v1237, 7
          %v1352 = vsel %vm1275, %v1351, %v1231
          %v1353 = vrot.slane %v1243, 6
          %v1354 = vsel %vm1278, %v1353, %v1352
          %v1355 = vrot.slane %v1249, 5
          %v1356 = vsel %vm1281, %v1355, %v1354
          %v1357 = vrot.slane %v1255, 4
          %v1358 = vsel %vm1284, %v1357, %v1356
          %v1359 = vrot.slane %v1261, 3
          %v1360 = vsel %vm1287, %v1359, %v1358
          %v1361 = vrot.slane %v1267, 2
          %v1362 = vsel %vm1290, %v1361, %v1360
          %v1363 = vrot.slane %v1273, 1
          %v1364 = vsel %vm1293, %v1363, %v1362
          %v1365 = vpack.c.b16 %v1294, %v1294
          %v1366 = vpack.c.b16 %v1308, %v1308
          %v1367 = vpack.c.b16 %v1322, %v1322
          %v1368 = vpack.c.b16 %v1336, %v1336
          %v1369 = vpack.c.b16 %v1350, %v1350
          %v1370 = vpack.c.b16 %v1364, %v1364
          %v1473 = vunpack.c.l.b16 %v1070
          %v1474 = vunpack.c.h.b16 %v1070
          %v1475 = vunpack.c.l.b16 %v1071
          %v1476 = vunpack.c.h.b16 %v1071
          %v1477 = vunpack.c.l.b16 %v1072
          %v1478 = vunpack.c.h.b16 %v1072
          %v1479 = vunpack.c.l.b16 %v1073
          %v1480 = vunpack.c.h.b16 %v1073
          %v1481 = vunpack.c.l.b16 %v1074
          %v1482 = vunpack.c.h.b16 %v1074
          %v1483 = vunpack.c.l.b16 %v1075
          %v1484 = vunpack.c.h.b16 %v1075
          %v1485 = vunpack.c.l.b16 %v1076
          %v1486 = vunpack.c.h.b16 %v1076
          %v1487 = vunpack.c.l.b16 %v1077
          %v1488 = vunpack.c.h.b16 %v1077
          %v1489 = vunpack.c.l.b16 %v1078
          %v1490 = vunpack.c.h.b16 %v1078
          %v1491 = vunpack.c.l.b16 %v1079
          %v1492 = vunpack.c.h.b16 %v1079
          %v1493 = vunpack.c.l.b16 %v1080
          %v1494 = vunpack.c.h.b16 %v1080
          %v1495 = vunpack.c.l.b16 %v1081
          %v1496 = vunpack.c.h.b16 %v1081
          %v1497 = vunpack.c.l.b16 %v1082
          %v1498 = vunpack.c.h.b16 %v1082
          %v1499 = vunpack.c.l.b16 %v1083
          %v1500 = vunpack.c.h.b16 %v1083
          %v1501 = vunpack.c.l.b16 %v1084
          %v1502 = vunpack.c.h.b16 %v1084
          %v1503 = vunpack.c.l.b16 %v1085
          %v1504 = vunpack.c.h.b16 %v1085
          %v1505 = vunpack.c.l.b16 %v1086
          %v1506 = vunpack.c.h.b16 %v1086
          %v1507 = vunpack.c.l.b16 %v1087
          %v1508 = vunpack.c.h.b16 %v1087
          %v1509 = vunpack.c.l.b16 %v1088
          %v1510 = vunpack.c.h.b16 %v1088
          %v1511 = vunpack.c.l.b16 %v1089
          %v1512 = vunpack.c.h.b16 %v1089
          %v1513 = vunpack.c.l.b16 %v1090
          %v1514 = vunpack.c.h.b16 %v1090
          %v1515 = vunpack.c.l.b16 %v1091
          %v1516 = vunpack.c.h.b16 %v1091
          %v1517 = vunpack.c.l.b16 %v1092
          %v1518 = vunpack.c.h.b16 %v1092
          %v1519 = vunpack.c.l.b16 %v1093
          %v1520 = vunpack.c.h.b16 %v1093
          %v1521 = vunpack.c.l.b16 %v1094
          %v1522 = vunpack.c.h.b16 %v1094
          %v1523 = vunpack.c.l.b16 %v1095
          %v1524 = vunpack.c.h.b16 %v1095
          %v1525 = vunpack.c.l.b16 %v1096
          %v1526 = vunpack.c.h.b16 %v1096
          %v1527 = vunpack.c.l.b16 %v1097
          %v1528 = vunpack.c.h.b16 %v1097
          %v1529 = vunpack.c.l.b16 %v1098
          %v1530 = vunpack.c.h.b16 %v1098
          %v1531 = vunpack.c.l.b16 %v1099
          %v1532 = vunpack.c.h.b16 %v1099
          %v1533 = vunpack.c.l.b16 %v1100
          %v1534 = vunpack.c.h.b16 %v1100
          %v1535 = vunpack.c.l.b16 %v1101
          %v1536 = vunpack.c.h.b16 %v1101
          %v1537 = vunpack.c.l.b16 %v1102
          %v1538 = vunpack.c.h.b16 %v1102
          %v1539 = vunpack.c.l.b16 %v1103
          %v1540 = vunpack.c.h.b16 %v1103
          %v1541 = vunpack.c.l.b16 %v1104
          %v1542 = vunpack.c.h.b16 %v1104
          %v1543 = vunpack.c.l.b16 %v1105
          %v1544 = vunpack.c.h.b16 %v1105
          %v1545 = vunpack.c.l.b16 %v1106
          %v1546 = vunpack.c.h.b16 %v1106
          %v1547 = vunpack.c.l.b16 %v1107
          %v1548 = vunpack.c.h.b16 %v1107
          %v1549 = vunpack.c.l.b16 %v1108
          %v1550 = vunpack.c.h.b16 %v1108
          %v1551 = vunpack.c.l.b16 %v1109
          %v1552 = vunpack.c.h.b16 %v1109
          %v1553 = vunpack.c.l.b16 %v1110
          %v1554 = vunpack.c.h.b16 %v1110
          %v1555 = vunpack.c.l.b16 %v1111
          %v1556 = vunpack.c.h.b16 %v1111
          %v1557 = vunpack.c.l.b16 %v1112
          %v1558 = vunpack.c.h.b16 %v1112
          %v1559 = vunpack.c.l.b16 %v1113
          %v1560 = vunpack.c.h.b16 %v1113
          %v1561 = vunpack.c.l.b16 %v1114
          %v1562 = vunpack.c.h.b16 %v1114
          %v1563 = vunpack.c.l.b16 %v1115
          %v1564 = vunpack.c.h.b16 %v1115
          %v1565 = vunpack.c.l.b16 %v1116
          %v1566 = vunpack.c.h.b16 %v1116
          %v1567 = vunpack.c.l.b16 %v1117
          %v1568 = vunpack.c.h.b16 %v1117
          %v1569 = vunpack.c.l.b16 %v1118
          %v1570 = vunpack.c.h.b16 %v1118
          %v1571 = vunpack.c.l.b16 %v1119
          %v1572 = vunpack.c.h.b16 %v1119
          %v1573 = vunpack.c.l.b16 %v1120
          %v1574 = vunpack.c.h.b16 %v1120
          %v1575 = vunpack.c.l.b16 %v1121
          %v1576 = vunpack.c.h.b16 %v1121
          %v1577 = vunpack.c.l.b16 %v1122
          %v1578 = vunpack.c.h.b16 %v1122
          %v1579 = vunpack.c.l.b16 %v1123
          %v1580 = vunpack.c.h.b16 %v1123
          %v1581 = vunpack.c.l.b16 %v1124
          %v1582 = vunpack.c.h.b16 %v1124
          %v1583 = vunpack.c.l.b16 %v1125
          %v1584 = vunpack.c.h.b16 %v1125
          %v1585 = vunpack.c.l.b16 %v1126
          %v1586 = vunpack.c.h.b16 %v1126
          %v1587 = vunpack.c.l.b16 %v1127
          %v1588 = vunpack.c.h.b16 %v1127
          %v1589 = vunpack.c.l.b16 %v1128
          %v1590 = vunpack.c.h.b16 %v1128
          %v1591 = vunpack.c.l.b16 %v1129
          %v1592 = vunpack.c.h.b16 %v1129
          %v1593 = vunpack.c.l.b16 %v1130
          %v1594 = vunpack.c.h.b16 %v1130
          %v1595 = vunpack.c.l.b16 %v1131
          %v1596 = vunpack.c.h.b16 %v1131
          %v1597 = vunpack.c.l.b16 %v1132
          %v1598 = vunpack.c.h.b16 %v1132
          %v1599 = vunpack.c.l.b16 %v1133
          %v1600 = vunpack.c.h.b16 %v1133
          %v1601 = vunpack.c.l.b16 %v1134
          %v1602 = vunpack.c.h.b16 %v1134
          %v1603 = vunpack.c.l.b16 %v1135
          %v1604 = vunpack.c.h.b16 %v1135
          %v1605 = vunpack.c.l.b16 %v1136
          %v1606 = vunpack.c.h.b16 %v1136
          %v1607 = vunpack.c.l.b16 %v1137
          %v1608 = vunpack.c.h.b16 %v1137
          %v1609 = vunpack.c.l.b16 %v1138
          %v1610 = vunpack.c.h.b16 %v1138
          %v1611 = vunpack.c.l.b16 %v1139
          %v1612 = vunpack.c.h.b16 %v1139
          %v1613 = vunpack.c.l.b16 %v1140
          %v1614 = vunpack.c.h.b16 %v1140
          %v1615 = vunpack.c.l.b16 %v1141
          %v1616 = vunpack.c.h.b16 %v1141
          %v1617 = vunpack.c.l.b16 %v1142
          %v1618 = vunpack.c.h.b16 %v1142
          %v1619 = vunpack.c.l.b16 %v1143
          %v1620 = vunpack.c.h.b16 %v1143
          %v1621 = vunpack.c.l.b16 %v1144
          %v1622 = vunpack.c.h.b16 %v1144
          %v1623 = vunpack.c.l.b16 %v1145
          %v1624 = vunpack.c.h.b16 %v1145
          %v1625 = vunpack.c.l.b16 %v1146
          %v1626 = vunpack.c.h.b16 %v1146
          %v1627 = vunpack.c.l.b16 %v1147
          %v1628 = vunpack.c.h.b16 %v1147
          %v1629 = vunpack.c.l.b16 %v1148
          %v1630 = vunpack.c.h.b16 %v1148
          %v1631 = vunpack.c.l.b16 %v1149
          %v1632 = vunpack.c.h.b16 %v1149
          %v1633 = vunpack.c.l.b16 %v1150
          %v1634 = vunpack.c.h.b16 %v1150
          %v1635 = vunpack.c.l.b16 %v1151
          %v1636 = vunpack.c.h.b16 %v1151
          %v1637 = vunpack.c.l.b16 %v1152
          %v1638 = vunpack.c.h.b16 %v1152
          %v1639 = vunpack.c.l.b16 %v1153
          %v1640 = vunpack.c.h.b16 %v1153
          %v1641 = vunpack.c.l.b16 %v1154
          %v1642 = vunpack.c.h.b16 %v1154
          %v1643 = vunpack.c.l.b16 %v1155
          %v1644 = vunpack.c.h.b16 %v1155
          %v1645 = vunpack.c.l.b16 %v1156
          %v1646 = vunpack.c.h.b16 %v1156
          %v1647 = vunpack.c.l.b16 %v1157
          %v1648 = vunpack.c.h.b16 %v1157
          %v1649 = vunpack.c.l.b16 %v1158
          %v1650 = vunpack.c.h.b16 %v1158
          %v1651 = vunpack.c.l.b16 %v1159
          %v1652 = vunpack.c.h.b16 %v1159
          %v1653 = vunpack.c.l.b16 %v1160
          %v1654 = vunpack.c.h.b16 %v1160
          %v1655 = vunpack.c.l.b16 %v1161
          %v1656 = vunpack.c.h.b16 %v1161
          %v1657 = vunpack.c.l.b16 %v1162
          %v1658 = vunpack.c.h.b16 %v1162
          %v1659 = vunpack.c.l.b16 %v1163
          %v1660 = vunpack.c.h.b16 %v1163
          %v1661 = vunpack.c.l.b16 %v1164
          %v1662 = vunpack.c.h.b16 %v1164
          %v1663 = vunpack.c.l.b16 %v1165
          %v1664 = vunpack.c.h.b16 %v1165
          %v1665 = vpack.c.b16 %v1475, %v1473
          %v1666 = vpack.c.b16 %v1476, %v1474
          %v1667 = vpack.c.b16 %v1479, %v1477
          %v1668 = vpack.c.b16 %v1480, %v1478
          %v1669 = vpack.c.b16 %v1483, %v1481
          %v1670 = vpack.c.b16 %v1484, %v1482
          %v1671 = vpack.c.b16 %v1487, %v1485
          %v1672 = vpack.c.b16 %v1488, %v1486
          %v1673 = vpack.c.b16 %v1491, %v1489
          %v1674 = vpack.c.b16 %v1492, %v1490
          %v1675 = vpack.c.b16 %v1495, %v1493
          %v1676 = vpack.c.b16 %v1496, %v1494
          %v1677 = vpack.c.b16 %v1499, %v1497
          %v1678 = vpack.c.b16 %v1500, %v1498
          %v1679 = vpack.c.b16 %v1503, %v1501
          %v1680 = vpack.c.b16 %v1504, %v1502
          %v1681 = vpack.c.b16 %v1507, %v1505
          %v1682 = vpack.c.b16 %v1508, %v1506
          %v1683 = vpack.c.b16 %v1511, %v1509
          %v1684 = vpack.c.b16 %v1512, %v1510
          %v1685 = vpack.c.b16 %v1515, %v1513
          %v1686 = vpack.c.b16 %v1516, %v1514
          %v1687 = vpack.c.b16 %v1519, %v1517
          %v1688 = vpack.c.b16 %v1520, %v1518
          %v1689 = vpack.c.b16 %v1523, %v1521
          %v1690 = vpack.c.b16 %v1524, %v1522
          %v1691 = vpack.c.b16 %v1527, %v1525
          %v1692 = vpack.c.b16 %v1528, %v1526
          %v1693 = vpack.c.b16 %v1531, %v1529
          %v1694 = vpack.c.b16 %v1532, %v1530
          %v1695 = vpack.c.b16 %v1535, %v1533
          %v1696 = vpack.c.b16 %v1536, %v1534
          %v1697 = vpack.c.b16 %v1539, %v1537
          %v1698 = vpack.c.b16 %v1540, %v1538
          %v1699 = vpack.c.b16 %v1543, %v1541
          %v1700 = vpack.c.b16 %v1544, %v1542
          %v1701 = vpack.c.b16 %v1547, %v1545
          %v1702 = vpack.c.b16 %v1548, %v1546
          %v1703 = vpack.c.b16 %v1551, %v1549
          %v1704 = vpack.c.b16 %v1552, %v1550
          %v1705 = vpack.c.b16 %v1555, %v1553
          %v1706 = vpack.c.b16 %v1556, %v1554
          %v1707 = vpack.c.b16 %v1559, %v1557
          %v1708 = vpack.c.b16 %v1560, %v1558
          %v1709 = vpack.c.b16 %v1563, %v1561
          %v1710 = vpack.c.b16 %v1564, %v1562
          %v1711 = vpack.c.b16 %v1567, %v1565
          %v1712 = vpack.c.b16 %v1568, %v1566
          %v1713 = vpack.c.b16 %v1571, %v1569
          %v1714 = vpack.c.b16 %v1572, %v1570
          %v1715 = vpack.c.b16 %v1575, %v1573
          %v1716 = vpack.c.b16 %v1576, %v1574
          %v1717 = vpack.c.b16 %v1579, %v1577
          %v1718 = vpack.c.b16 %v1580, %v1578
          %v1719 = vpack.c.b16 %v1583, %v1581
          %v1720 = vpack.c.b16 %v1584, %v1582
          %v1721 = vpack.c.b16 %v1587, %v1585
          %v1722 = vpack.c.b16 %v1588, %v1586
          %v1723 = vpack.c.b16 %v1591, %v1589
          %v1724 = vpack.c.b16 %v1592, %v1590
          %v1725 = vpack.c.b16 %v1595, %v1593
          %v1726 = vpack.c.b16 %v1596, %v1594
          %v1727 = vpack.c.b16 %v1599, %v1597
          %v1728 = vpack.c.b16 %v1600, %v1598
          %v1729 = vpack.c.b16 %v1603, %v1601
          %v1730 = vpack.c.b16 %v1604, %v1602
          %v1731 = vpack.c.b16 %v1607, %v1605
          %v1732 = vpack.c.b16 %v1608, %v1606
          %v1733 = vpack.c.b16 %v1611, %v1609
          %v1734 = vpack.c.b16 %v1612, %v1610
          %v1735 = vpack.c.b16 %v1615, %v1613
          %v1736 = vpack.c.b16 %v1616, %v1614
          %v1737 = vpack.c.b16 %v1619, %v1617
          %v1738 = vpack.c.b16 %v1620, %v1618
          %v1739 = vpack.c.b16 %v1623, %v1621
          %v1740 = vpack.c.b16 %v1624, %v1622
          %v1741 = vpack.c.b16 %v1627, %v1625
          %v1742 = vpack.c.b16 %v1628, %v1626
          %v1743 = vpack.c.b16 %v1631, %v1629
          %v1744 = vpack.c.b16 %v1632, %v1630
          %v1745 = vpack.c.b16 %v1635, %v1633
          %v1746 = vpack.c.b16 %v1636, %v1634
          %v1747 = vpack.c.b16 %v1639, %v1637
          %v1748 = vpack.c.b16 %v1640, %v1638
          %v1749 = vpack.c.b16 %v1643, %v1641
          %v1750 = vpack.c.b16 %v1644, %v1642
          %v1751 = vpack.c.b16 %v1647, %v1645
          %v1752 = vpack.c.b16 %v1648, %v1646
          %v1753 = vpack.c.b16 %v1651, %v1649
          %v1754 = vpack.c.b16 %v1652, %v1650
          %v1755 = vpack.c.b16 %v1655, %v1653
          %v1756 = vpack.c.b16 %v1656, %v1654
          %v1757 = vpack.c.b16 %v1659, %v1657
          %v1758 = vpack.c.b16 %v1660, %v1658
          %v1759 = vpack.c.b16 %v1663, %v1661
          %v1760 = vpack.c.b16 %v1664, %v1662
          %1857 = vmatprep.subr.bf16.mxu0 %v1680
          %1858 = vmatpush1.bf16.msra.mxu0 %v1679
          %1859 = vmatprep.subr.bf16.mxu0 %v1678
          %1860 = vmatpush1.bf16.msra.mxu0 %v1677
          %1861 = vmatprep.subr.bf16.mxu0 %v1676
          %1862 = vmatpush1.bf16.msra.mxu0 %v1675
          %1863 = vmatprep.subr.bf16.mxu0 %v1674
          %1864 = vmatpush1.bf16.msra.mxu0 %v1673
          %1865 = vmatprep.subr.bf16.mxu0 %v1672
          %1866 = vmatpush1.bf16.msra.mxu0 %v1671
          %1867 = vmatprep.subr.bf16.mxu0 %v1670
          %1868 = vmatpush1.bf16.msra.mxu0 %v1669
          %1869 = vmatprep.subr.bf16.mxu0 %v1668
          %1870 = vmatpush1.bf16.msra.mxu0 %v1667
          %1871 = vmatprep.subr.bf16.mxu0 %v1666
          %1872 = vmatpush1.bf16.msra.mxu0 %v1665
          %1873 = vmatprep.subr.bf16.mxu0 %v1696
          %1874 = vmatpush2.bf16.msra.mxu0 %v1695
          %1875 = vmatprep.subr.bf16.mxu0 %v1694
          %1876 = vmatpush2.bf16.msra.mxu0 %v1693
          %1877 = vmatprep.subr.bf16.mxu0 %v1692
          %1878 = vmatpush2.bf16.msra.mxu0 %v1691
          %1879 = vmatprep.subr.bf16.mxu0 %v1690
          %1880 = vmatpush2.bf16.msra.mxu0 %v1689
          %1881 = vmatprep.subr.bf16.mxu0 %v1688
          %1882 = vmatpush2.bf16.msra.mxu0 %v1687
          %1883 = vmatprep.subr.bf16.mxu0 %v1686
          %1884 = vmatpush2.bf16.msra.mxu0 %v1685
          %1885 = vmatprep.subr.bf16.mxu0 %v1684
          %1886 = vmatpush2.bf16.msra.mxu0 %v1683
          %1887 = vmatprep.subr.bf16.mxu0 %v1682
          %1888 = vmatpush2.bf16.msra.mxu0 %v1681
          %1889 = vmatprep.mubr.bf16.mxu0 %v1366
          %1890 = vmatmul.mubr.bf16.gmra.mxu0 %v1365
          %v1891 = vpop.f32.mrf.mxu0
          %v1892 = vadd.f32 %v1171, %v1891
          %v1893 = vpop.f32.mrf.mxu0
          %v1894 = vadd.f32 %v1175, %v1893
          %v1895 = vpop.f32.mrf.mxu0
          %v1896 = vpop.f32.mrf.mxu0
          %1897 = vdwg.mxu0
          %1898 = vmatprep.subr.bf16.mxu0 %v1712
          %1899 = vmatpush1.bf16.msra.mxu0 %v1711
          %1900 = vmatprep.subr.bf16.mxu0 %v1710
          %1901 = vmatpush1.bf16.msra.mxu0 %v1709
          %1902 = vmatprep.subr.bf16.mxu0 %v1708
          %1903 = vmatpush1.bf16.msra.mxu0 %v1707
          %1904 = vmatprep.subr.bf16.mxu0 %v1706
          %1905 = vmatpush1.bf16.msra.mxu0 %v1705
          %1906 = vmatprep.subr.bf16.mxu0 %v1704
          %1907 = vmatpush1.bf16.msra.mxu0 %v1703
          %1908 = vmatprep.subr.bf16.mxu0 %v1702
          %1909 = vmatpush1.bf16.msra.mxu0 %v1701
          %1910 = vmatprep.subr.bf16.mxu0 %v1700
          %1911 = vmatpush1.bf16.msra.mxu0 %v1699
          %1912 = vmatprep.subr.bf16.mxu0 %v1698
          %1913 = vmatpush1.bf16.msra.mxu0 %v1697
          %1914 = vmatprep.subr.bf16.mxu0 %v1728
          %1915 = vmatpush2.bf16.msra.mxu0 %v1727
          %1916 = vmatprep.subr.bf16.mxu0 %v1726
          %1917 = vmatpush2.bf16.msra.mxu0 %v1725
          %1918 = vmatprep.subr.bf16.mxu0 %v1724
          %1919 = vmatpush2.bf16.msra.mxu0 %v1723
          %1920 = vmatprep.subr.bf16.mxu0 %v1722
          %1921 = vmatpush2.bf16.msra.mxu0 %v1721
          %1922 = vmatprep.subr.bf16.mxu0 %v1720
          %1923 = vmatpush2.bf16.msra.mxu0 %v1719
          %1924 = vmatprep.subr.bf16.mxu0 %v1718
          %1925 = vmatpush2.bf16.msra.mxu0 %v1717
          %1926 = vmatprep.subr.bf16.mxu0 %v1716
          %1927 = vmatpush2.bf16.msra.mxu0 %v1715
          %1928 = vmatprep.subr.bf16.mxu0 %v1714
          %1929 = vmatpush2.bf16.msra.mxu0 %v1713
          %1930 = vmatprep.mubr.bf16.mxu0 %v1368
          %1931 = vmatmul.mubr.bf16.gmra.mxu0 %v1367
          %v1932 = vpop.f32.mrf.mxu0
          %v1933 = vadd.f32 %v1892, %v1932
          %v1934 = vpop.f32.mrf.mxu0
          %v1935 = vadd.f32 %v1894, %v1934
          %v1936 = vpop.f32.mrf.mxu0
          %v1937 = vpop.f32.mrf.mxu0
          %1938 = vdwg.mxu0
          %1939 = vmatprep.subr.bf16.mxu0 %v1744
          %1940 = vmatpush1.bf16.msra.mxu0 %v1743
          %1941 = vmatprep.subr.bf16.mxu0 %v1742
          %1942 = vmatpush1.bf16.msra.mxu0 %v1741
          %1943 = vmatprep.subr.bf16.mxu0 %v1740
          %1944 = vmatpush1.bf16.msra.mxu0 %v1739
          %1945 = vmatprep.subr.bf16.mxu0 %v1738
          %1946 = vmatpush1.bf16.msra.mxu0 %v1737
          %1947 = vmatprep.subr.bf16.mxu0 %v1736
          %1948 = vmatpush1.bf16.msra.mxu0 %v1735
          %1949 = vmatprep.subr.bf16.mxu0 %v1734
          %1950 = vmatpush1.bf16.msra.mxu0 %v1733
          %1951 = vmatprep.subr.bf16.mxu0 %v1732
          %1952 = vmatpush1.bf16.msra.mxu0 %v1731
          %1953 = vmatprep.subr.bf16.mxu0 %v1730
          %1954 = vmatpush1.bf16.msra.mxu0 %v1729
          %1955 = vmatprep.subr.bf16.mxu0 %v1760
          %1956 = vmatpush2.bf16.msra.mxu0 %v1759
          %1957 = vmatprep.subr.bf16.mxu0 %v1758
          %1958 = vmatpush2.bf16.msra.mxu0 %v1757
          %1959 = vmatprep.subr.bf16.mxu0 %v1756
          %1960 = vmatpush2.bf16.msra.mxu0 %v1755
          %1961 = vmatprep.subr.bf16.mxu0 %v1754
          %1962 = vmatpush2.bf16.msra.mxu0 %v1753
          %1963 = vmatprep.subr.bf16.mxu0 %v1752
          %1964 = vmatpush2.bf16.msra.mxu0 %v1751
          %1965 = vmatprep.subr.bf16.mxu0 %v1750
          %1966 = vmatpush2.bf16.msra.mxu0 %v1749
          %1967 = vmatprep.subr.bf16.mxu0 %v1748
          %1968 = vmatpush2.bf16.msra.mxu0 %v1747
          %1969 = vmatprep.subr.bf16.mxu0 %v1746
          %1970 = vmatpush2.bf16.msra.mxu0 %v1745
          %1971 = vmatprep.mubr.bf16.mxu0 %v1370
          %1972 = vmatmul.mubr.bf16.gmra.mxu0 %v1369
          %v1973 = vpop.f32.mrf.mxu0
          %v1974 = vadd.f32 %v1933, %v1973
          %v1975 = vpop.f32.mrf.mxu0
          %v1976 = vadd.f32 %v1935, %v1975
          %v1977 = vpop.f32.mrf.mxu0
          %v1978 = vpop.f32.mrf.mxu0
          %1979 = vdwg.mxu0
          %v1980 = vmul.f32 %v1974, %v1974
          %v1981 = vmul.f32 %v1976, %v1976
          %v1982 = vadd.f32 %v1980, %v1981
          %1983 = vadd.xlane.f32.xlu0 %v1982
          %v1984 = vpop.xlane.xlu0 %1983
          %v1985 = vmax.f32 %v1984, 1e-24
          %v1986 = vrsqrt.pop %v1985
          %v1987 = vmul.f32 %v1974, %v1986
          %v1988 = vmul.f32 %v1976, %v1986
          %1989 = vst [vmem:[#allocation3] sm:$0xff] %v1987
          %1990 = vst [vmem:[#allocation3 + $0x8] sm:$0xff] %v1988
        $region96: #{tpu_custom_call.1} parent=55 // pred_fallthru
          _
        %v1991 = vld [vmem:[#allocation4] sm:$0xff]
        %v1992 = vld [vmem:[#allocation4 + $0x8] sm:$0xff]
        %v1993 = vld [vmem:[#allocation4 + $0x10] sm:$0xff]
        %v1994 = vld [vmem:[#allocation4 + $0x18] sm:$0xff]
        %v1995 = vld [vmem:[%s403] sm:$0xff]
        %v1996 = vld [vmem:[%s403 + $0x8] sm:$0xff]
        %v1997 = vld [vmem:[%s403 + $0x10] sm:$0xff]
        %v1998 = vld [vmem:[%s403 + $0x18] sm:$0xff]
        %v1999 = vld [vmem:[%s403 + $0x20] sm:$0xff]
        %v2000 = vld [vmem:[%s403 + $0x28] sm:$0xff]
        %v2001 = vld [vmem:[%s403 + $0x30] sm:$0xff]
        %v2002 = vld [vmem:[%s403 + $0x38] sm:$0xff]
        %v2003 = vld [vmem:[%s403 + $0x40] sm:$0xff]
        %v2004 = vld [vmem:[%s403 + $0x48] sm:$0xff]
        %v2005 = vld [vmem:[%s403 + $0x50] sm:$0xff]
        %v2006 = vld [vmem:[%s403 + $0x58] sm:$0xff]
        %v2007 = vld [vmem:[%s403 + $0x60] sm:$0xff]
        %v2008 = vld [vmem:[%s403 + $0x68] sm:$0xff]
        %v2009 = vld [vmem:[%s403 + $0x70] sm:$0xff]
        %v2010 = vld [vmem:[%s403 + $0x78] sm:$0xff]
        %v2011 = vld [vmem:[%s403 + $0x80] sm:$0xff]
        %v2012 = vld [vmem:[%s403 + $0x88] sm:$0xff]
        %v2013 = vld [vmem:[%s403 + $0x90] sm:$0xff]
        %v2014 = vld [vmem:[%s403 + $0x98] sm:$0xff]
        %v2015 = vld [vmem:[%s403 + $0xa0] sm:$0xff]
        %v2016 = vld [vmem:[%s403 + $0xa8] sm:$0xff]
        %v2017 = vld [vmem:[%s403 + $0xb0] sm:$0xff]
        %v2018 = vld [vmem:[%s403 + $0xb8] sm:$0xff]
        %v2019 = vld [vmem:[%s403 + $0xc0] sm:$0xff]
        %v2020 = vld [vmem:[%s403 + $0xc8] sm:$0xff]
        %v2021 = vld [vmem:[%s403 + $0xd0] sm:$0xff]
        %v2022 = vld [vmem:[%s403 + $0xd8] sm:$0xff]
        %v2023 = vld [vmem:[%s403 + $0xe0] sm:$0xff]
        %v2024 = vld [vmem:[%s403 + $0xe8] sm:$0xff]
        %v2025 = vld [vmem:[%s403 + $0xf0] sm:$0xff]
        %v2026 = vld [vmem:[%s403 + $0xf8] sm:$0xff]
        %v2027 = vld [vmem:[%s403 + $0x100] sm:$0xff]
        %v2028 = vld [vmem:[%s403 + $0x108] sm:$0xff]
        %v2029 = vld [vmem:[%s403 + $0x110] sm:$0xff]
        %v2030 = vld [vmem:[%s403 + $0x118] sm:$0xff]
        %v2031 = vld [vmem:[%s403 + $0x120] sm:$0xff]
        %v2032 = vld [vmem:[%s403 + $0x128] sm:$0xff]
        %v2033 = vld [vmem:[%s403 + $0x130] sm:$0xff]
        %v2034 = vld [vmem:[%s403 + $0x138] sm:$0xff]
        %v2035 = vld [vmem:[%s403 + $0x140] sm:$0xff]
        %v2036 = vld [vmem:[%s403 + $0x148] sm:$0xff]
        %v2037 = vld [vmem:[%s403 + $0x150] sm:$0xff]
        %v2038 = vld [vmem:[%s403 + $0x158] sm:$0xff]
        %v2039 = vld [vmem:[%s403 + $0x160] sm:$0xff]
        %v2040 = vld [vmem:[%s403 + $0x168] sm:$0xff]
        %v2041 = vld [vmem:[%s403 + $0x170] sm:$0xff]
        %v2042 = vld [vmem:[%s403 + $0x178] sm:$0xff]
        %v2043 = vld [vmem:[%s403 + $0x180] sm:$0xff]
        %v2044 = vld [vmem:[%s403 + $0x188] sm:$0xff]
        %v2045 = vld [vmem:[%s403 + $0x190] sm:$0xff]
        %v2046 = vld [vmem:[%s403 + $0x198] sm:$0xff]
        %v2047 = vld [vmem:[%s403 + $0x1a0] sm:$0xff]
        %v2048 = vld [vmem:[%s403 + $0x1a8] sm:$0xff]
        %v2049 = vld [vmem:[%s403 + $0x1b0] sm:$0xff]
        %v2050 = vld [vmem:[%s403 + $0x1b8] sm:$0xff]
        %v2051 = vld [vmem:[%s403 + $0x1c0] sm:$0xff]
        %v2052 = vld [vmem:[%s403 + $0x1c8] sm:$0xff]
        %v2053 = vld [vmem:[%s403 + $0x1d0] sm:$0xff]
        %v2054 = vld [vmem:[%s403 + $0x1d8] sm:$0xff]
        %v2055 = vld [vmem:[%s403 + $0x1e0] sm:$0xff]
        %v2056 = vld [vmem:[%s403 + $0x1e8] sm:$0xff]
        %v2057 = vld [vmem:[%s403 + $0x1f0] sm:$0xff]
        %v2058 = vld [vmem:[%s403 + $0x1f8] sm:$0xff]
        %v2059 = vld [vmem:[%s403 + $0x200] sm:$0xff]
        %v2060 = vld [vmem:[%s403 + $0x208] sm:$0xff]
        %v2061 = vld [vmem:[%s403 + $0x210] sm:$0xff]
        %v2062 = vld [vmem:[%s403 + $0x218] sm:$0xff]
        %v2063 = vld [vmem:[%s403 + $0x220] sm:$0xff]
        %v2064 = vld [vmem:[%s403 + $0x228] sm:$0xff]
        %v2065 = vld [vmem:[%s403 + $0x230] sm:$0xff]
        %v2066 = vld [vmem:[%s403 + $0x238] sm:$0xff]
        %v2067 = vld [vmem:[%s403 + $0x240] sm:$0xff]
        %v2068 = vld [vmem:[%s403 + $0x248] sm:$0xff]
        %v2069 = vld [vmem:[%s403 + $0x250] sm:$0xff]
        %v2070 = vld [vmem:[%s403 + $0x258] sm:$0xff]
        %v2071 = vld [vmem:[%s403 + $0x260] sm:$0xff]
        %v2072 = vld [vmem:[%s403 + $0x268] sm:$0xff]
        %v2073 = vld [vmem:[%s403 + $0x270] sm:$0xff]
        %v2074 = vld [vmem:[%s403 + $0x278] sm:$0xff]
        %v2075 = vld [vmem:[%s403 + $0x280] sm:$0xff]
        %v2076 = vld [vmem:[%s403 + $0x288] sm:$0xff]
        %v2077 = vld [vmem:[%s403 + $0x290] sm:$0xff]
        %v2078 = vld [vmem:[%s403 + $0x298] sm:$0xff]
        %v2079 = vld [vmem:[%s403 + $0x2a0] sm:$0xff]
        %v2080 = vld [vmem:[%s403 + $0x2a8] sm:$0xff]
        %v2081 = vld [vmem:[%s403 + $0x2b0] sm:$0xff]
        %v2082 = vld [vmem:[%s403 + $0x2b8] sm:$0xff]
        %v2083 = vld [vmem:[%s403 + $0x2c0] sm:$0xff]
        %v2084 = vld [vmem:[%s403 + $0x2c8] sm:$0xff]
        %v2085 = vld [vmem:[%s403 + $0x2d0] sm:$0xff]
        %v2086 = vld [vmem:[%s403 + $0x2d8] sm:$0xff]
        %v2087 = vld [vmem:[%s403 + $0x2e0] sm:$0xff]
        %v2088 = vld [vmem:[%s403 + $0x2e8] sm:$0xff]
        %v2089 = vld [vmem:[%s403 + $0x2f0] sm:$0xff]
        %v2090 = vld [vmem:[%s403 + $0x2f8] sm:$0xff]
        %v2091 = vld [vmem:[%s403 + $0x300] sm:$0xff]
        %v2092 = vld [vmem:[%s403 + $0x308] sm:$0xff]
        %v2093 = vld [vmem:[%s403 + $0x310] sm:$0xff]
        %v2094 = vld [vmem:[%s403 + $0x318] sm:$0xff]
        %v2095 = vld [vmem:[%s403 + $0x320] sm:$0xff]
        %v2096 = vld [vmem:[%s403 + $0x328] sm:$0xff]
        %v2097 = vld [vmem:[%s403 + $0x330] sm:$0xff]
        %v2098 = vld [vmem:[%s403 + $0x338] sm:$0xff]
        %v2099 = vld [vmem:[%s403 + $0x340] sm:$0xff]
        %v2100 = vld [vmem:[%s403 + $0x348] sm:$0xff]
        %v2101 = vld [vmem:[%s403 + $0x350] sm:$0xff]
        %v2102 = vld [vmem:[%s403 + $0x358] sm:$0xff]
        %v2103 = vld [vmem:[%s403 + $0x360] sm:$0xff]
        %v2104 = vld [vmem:[%s403 + $0x368] sm:$0xff]
        %v2105 = vld [vmem:[%s403 + $0x370] sm:$0xff]
        %v2106 = vld [vmem:[%s403 + $0x378] sm:$0xff]
        %v2107 = vld [vmem:[%s403 + $0x380] sm:$0xff]
        %v2108 = vld [vmem:[%s403 + $0x388] sm:$0xff]
        %v2109 = vld [vmem:[%s403 + $0x390] sm:$0xff]
        %v2110 = vld [vmem:[%s403 + $0x398] sm:$0xff]
        %v2111 = vld [vmem:[%s403 + $0x3a0] sm:$0xff]
        %v2112 = vld [vmem:[%s403 + $0x3a8] sm:$0xff]
        %v2113 = vld [vmem:[%s403 + $0x3b0] sm:$0xff]
        %v2114 = vld [vmem:[%s403 + $0x3b8] sm:$0xff]
        %v2115 = vld [vmem:[%s403 + $0x3c0] sm:$0xff]
        %v2116 = vld [vmem:[%s403 + $0x3c8] sm:$0xff]
        %v2117 = vld [vmem:[%s403 + $0x3d0] sm:$0xff]
        %v2118 = vld [vmem:[%s403 + $0x3d8] sm:$0xff]
        %v2119 = vld [vmem:[%s403 + $0x3e0] sm:$0xff]
        %v2120 = vld [vmem:[%s403 + $0x3e8] sm:$0xff]
        %v2121 = vld [vmem:[%s403 + $0x3f0] sm:$0xff]
        %v2122 = vld [vmem:[%s403 + $0x3f8] sm:$0xff]
        %v2123 = vld [vmem:[%s403 + $0x400] sm:$0xff]
        %v2124 = vld [vmem:[%s403 + $0x408] sm:$0xff]
        %v2125 = vld [vmem:[%s403 + $0x410] sm:$0xff]
        %v2126 = vld [vmem:[%s403 + $0x418] sm:$0xff]
        %v2127 = vld [vmem:[%s403 + $0x420] sm:$0xff]
        %v2128 = vld [vmem:[%s403 + $0x428] sm:$0xff]
        %v2129 = vld [vmem:[%s403 + $0x430] sm:$0xff]
        %v2130 = vld [vmem:[%s403 + $0x438] sm:$0xff]
        %v2131 = vld [vmem:[%s403 + $0x440] sm:$0xff]
        %v2132 = vld [vmem:[%s403 + $0x448] sm:$0xff]
        %v2133 = vld [vmem:[%s403 + $0x450] sm:$0xff]
        %v2134 = vld [vmem:[%s403 + $0x458] sm:$0xff]
        %v2135 = vld [vmem:[%s403 + $0x460] sm:$0xff]
        %v2136 = vld [vmem:[%s403 + $0x468] sm:$0xff]
        %v2137 = vld [vmem:[%s403 + $0x470] sm:$0xff]
        %v2138 = vld [vmem:[%s403 + $0x478] sm:$0xff]
        %v2139 = vld [vmem:[%s403 + $0x480] sm:$0xff]
        %v2140 = vld [vmem:[%s403 + $0x488] sm:$0xff]
        %v2141 = vld [vmem:[%s403 + $0x490] sm:$0xff]
        %v2142 = vld [vmem:[%s403 + $0x498] sm:$0xff]
        %v2143 = vld [vmem:[%s403 + $0x4a0] sm:$0xff]
        %v2144 = vld [vmem:[%s403 + $0x4a8] sm:$0xff]
        %v2145 = vld [vmem:[%s403 + $0x4b0] sm:$0xff]
        %v2146 = vld [vmem:[%s403 + $0x4b8] sm:$0xff]
        %v2147 = vld [vmem:[%s403 + $0x4c0] sm:$0xff]
        %v2148 = vld [vmem:[%s403 + $0x4c8] sm:$0xff]
        %v2149 = vld [vmem:[%s403 + $0x4d0] sm:$0xff]
        %v2150 = vld [vmem:[%s403 + $0x4d8] sm:$0xff]
        %v2151 = vld [vmem:[%s403 + $0x4e0] sm:$0xff]
        %v2152 = vld [vmem:[%s403 + $0x4e8] sm:$0xff]
        %v2153 = vld [vmem:[%s403 + $0x4f0] sm:$0xff]
        %v2154 = vld [vmem:[%s403 + $0x4f8] sm:$0xff]
        %v2155 = vld [vmem:[%s403 + $0x500] sm:$0xff]
        %v2156 = vld [vmem:[%s403 + $0x508] sm:$0xff]
        %v2157 = vld [vmem:[%s403 + $0x510] sm:$0xff]
        %v2158 = vld [vmem:[%s403 + $0x518] sm:$0xff]
        %v2159 = vld [vmem:[%s403 + $0x520] sm:$0xff]
        %v2160 = vld [vmem:[%s403 + $0x528] sm:$0xff]
        %v2161 = vld [vmem:[%s403 + $0x530] sm:$0xff]
        %v2162 = vld [vmem:[%s403 + $0x538] sm:$0xff]
        %v2163 = vld [vmem:[%s403 + $0x540] sm:$0xff]
        %v2164 = vld [vmem:[%s403 + $0x548] sm:$0xff]
        %v2165 = vld [vmem:[%s403 + $0x550] sm:$0xff]
        %v2166 = vld [vmem:[%s403 + $0x558] sm:$0xff]
        %v2167 = vld [vmem:[%s403 + $0x560] sm:$0xff]
        %v2168 = vld [vmem:[%s403 + $0x568] sm:$0xff]
        %v2169 = vld [vmem:[%s403 + $0x570] sm:$0xff]
        %v2170 = vld [vmem:[%s403 + $0x578] sm:$0xff]
        %v2171 = vld [vmem:[%s403 + $0x580] sm:$0xff]
        %v2172 = vld [vmem:[%s403 + $0x588] sm:$0xff]
        %v2173 = vld [vmem:[%s403 + $0x590] sm:$0xff]
        %v2174 = vld [vmem:[%s403 + $0x598] sm:$0xff]
        %v2175 = vld [vmem:[%s403 + $0x5a0] sm:$0xff]
        %v2176 = vld [vmem:[%s403 + $0x5a8] sm:$0xff]
        %v2177 = vld [vmem:[%s403 + $0x5b0] sm:$0xff]
        %v2178 = vld [vmem:[%s403 + $0x5b8] sm:$0xff]
        %v2179 = vld [vmem:[%s403 + $0x5c0] sm:$0xff]
        %v2180 = vld [vmem:[%s403 + $0x5c8] sm:$0xff]
        %v2181 = vld [vmem:[%s403 + $0x5d0] sm:$0xff]
        %v2182 = vld [vmem:[%s403 + $0x5d8] sm:$0xff]
        %v2183 = vld [vmem:[%s403 + $0x5e0] sm:$0xff]
        %v2184 = vld [vmem:[%s403 + $0x5e8] sm:$0xff]
        %v2185 = vld [vmem:[%s403 + $0x5f0] sm:$0xff]
        %v2186 = vld [vmem:[%s403 + $0x5f8] sm:$0xff]
        %v2187 = vld [vmem:[%s403 + $0x600] sm:$0xff]
        %v2188 = vld [vmem:[%s403 + $0x608] sm:$0xff]
        %v2189 = vld [vmem:[%s403 + $0x610] sm:$0xff]
        %v2190 = vld [vmem:[%s403 + $0x618] sm:$0xff]
        %v2191 = vld [vmem:[%s403 + $0x620] sm:$0xff]
        %v2192 = vld [vmem:[%s403 + $0x628] sm:$0xff]
        %v2193 = vld [vmem:[%s403 + $0x630] sm:$0xff]
        %v2194 = vld [vmem:[%s403 + $0x638] sm:$0xff]
        %v2195 = vld [vmem:[%s403 + $0x640] sm:$0xff]
        %v2196 = vld [vmem:[%s403 + $0x648] sm:$0xff]
        %v2197 = vld [vmem:[%s403 + $0x650] sm:$0xff]
        %v2198 = vld [vmem:[%s403 + $0x658] sm:$0xff]
        %v2199 = vld [vmem:[%s403 + $0x660] sm:$0xff]
        %v2200 = vld [vmem:[%s403 + $0x668] sm:$0xff]
        %v2201 = vld [vmem:[%s403 + $0x670] sm:$0xff]
        %v2202 = vld [vmem:[%s403 + $0x678] sm:$0xff]
        %v2203 = vld [vmem:[%s403 + $0x680] sm:$0xff]
        %v2204 = vld [vmem:[%s403 + $0x688] sm:$0xff]
        %v2205 = vld [vmem:[%s403 + $0x690] sm:$0xff]
        %v2206 = vld [vmem:[%s403 + $0x698] sm:$0xff]
        %v2207 = vld [vmem:[%s403 + $0x6a0] sm:$0xff]
        %v2208 = vld [vmem:[%s403 + $0x6a8] sm:$0xff]
        %v2209 = vld [vmem:[%s403 + $0x6b0] sm:$0xff]
        %v2210 = vld [vmem:[%s403 + $0x6b8] sm:$0xff]
        %v2211 = vld [vmem:[%s403 + $0x6c0] sm:$0xff]
        %v2212 = vld [vmem:[%s403 + $0x6c8] sm:$0xff]
        %v2213 = vld [vmem:[%s403 + $0x6d0] sm:$0xff]
        %v2214 = vld [vmem:[%s403 + $0x6d8] sm:$0xff]
        %v2215 = vld [vmem:[%s403 + $0x6e0] sm:$0xff]
        %v2216 = vld [vmem:[%s403 + $0x6e8] sm:$0xff]
        %v2217 = vld [vmem:[%s403 + $0x6f0] sm:$0xff]
        %v2218 = vld [vmem:[%s403 + $0x6f8] sm:$0xff]
        %v2219 = vld [vmem:[%s403 + $0x700] sm:$0xff]
        %v2220 = vld [vmem:[%s403 + $0x708] sm:$0xff]
        %v2221 = vld [vmem:[%s403 + $0x710] sm:$0xff]
        %v2222 = vld [vmem:[%s403 + $0x718] sm:$0xff]
        %v2223 = vld [vmem:[%s403 + $0x720] sm:$0xff]
        %v2224 = vld [vmem:[%s403 + $0x728] sm:$0xff]
        %v2225 = vld [vmem:[%s403 + $0x730] sm:$0xff]
        %v2226 = vld [vmem:[%s403 + $0x738] sm:$0xff]
        %v2227 = vld [vmem:[%s403 + $0x740] sm:$0xff]
        %v2228 = vld [vmem:[%s403 + $0x748] sm:$0xff]
        %v2229 = vld [vmem:[%s403 + $0x750] sm:$0xff]
        %v2230 = vld [vmem:[%s403 + $0x758] sm:$0xff]
        %v2231 = vld [vmem:[%s403 + $0x760] sm:$0xff]
        %v2232 = vld [vmem:[%s403 + $0x768] sm:$0xff]
        %v2233 = vld [vmem:[%s403 + $0x770] sm:$0xff]
        %v2234 = vld [vmem:[%s403 + $0x778] sm:$0xff]
        %v2235 = vld [vmem:[%s403 + $0x780] sm:$0xff]
        %v2236 = vld [vmem:[%s403 + $0x788] sm:$0xff]
        %v2237 = vld [vmem:[%s403 + $0x790] sm:$0xff]
        %v2238 = vld [vmem:[%s403 + $0x798] sm:$0xff]
        %v2239 = vld [vmem:[%s403 + $0x7a0] sm:$0xff]
        %v2240 = vld [vmem:[%s403 + $0x7a8] sm:$0xff]
        %v2241 = vld [vmem:[%s403 + $0x7b0] sm:$0xff]
        %v2242 = vld [vmem:[%s403 + $0x7b8] sm:$0xff]
        %v2243 = vld [vmem:[%s403 + $0x7c0] sm:$0xff]
        %v2244 = vld [vmem:[%s403 + $0x7c8] sm:$0xff]
        %v2245 = vld [vmem:[%s403 + $0x7d0] sm:$0xff]
        %v2246 = vld [vmem:[%s403 + $0x7d8] sm:$0xff]
        %v2247 = vld [vmem:[%s403 + $0x7e0] sm:$0xff]
        %v2248 = vld [vmem:[%s403 + $0x7e8] sm:$0xff]
        %v2249 = vld [vmem:[%s403 + $0x7f0] sm:$0xff]
        %v2250 = vld [vmem:[%s403 + $0x7f8] sm:$0xff]
        %v2251 = vld [vmem:[%s403 + $0x800] sm:$0xff]
        %v2252 = vld [vmem:[%s403 + $0x808] sm:$0xff]
        %v2253 = vld [vmem:[%s403 + $0x810] sm:$0xff]
        %v2254 = vld [vmem:[%s403 + $0x818] sm:$0xff]
        %v2255 = vld [vmem:[%s403 + $0x820] sm:$0xff]
        %v2256 = vld [vmem:[%s403 + $0x828] sm:$0xff]
        %v2257 = vld [vmem:[%s403 + $0x830] sm:$0xff]
        %v2258 = vld [vmem:[%s403 + $0x838] sm:$0xff]
        %v2259 = vld [vmem:[%s403 + $0x840] sm:$0xff]
        %v2260 = vld [vmem:[%s403 + $0x848] sm:$0xff]
        %v2261 = vld [vmem:[%s403 + $0x850] sm:$0xff]
        %v2262 = vld [vmem:[%s403 + $0x858] sm:$0xff]
        %v2263 = vld [vmem:[%s403 + $0x860] sm:$0xff]
        %v2264 = vld [vmem:[%s403 + $0x868] sm:$0xff]
        %v2265 = vld [vmem:[%s403 + $0x870] sm:$0xff]
        %v2266 = vld [vmem:[%s403 + $0x878] sm:$0xff]
        %v2267 = vld [vmem:[%s403 + $0x880] sm:$0xff]
        %v2268 = vld [vmem:[%s403 + $0x888] sm:$0xff]
        %v2269 = vld [vmem:[%s403 + $0x890] sm:$0xff]
        %v2270 = vld [vmem:[%s403 + $0x898] sm:$0xff]
        %v2271 = vld [vmem:[%s403 + $0x8a0] sm:$0xff]
        %v2272 = vld [vmem:[%s403 + $0x8a8] sm:$0xff]
        %v2273 = vld [vmem:[%s403 + $0x8b0] sm:$0xff]
        %v2274 = vld [vmem:[%s403 + $0x8b8] sm:$0xff]
        %v2275 = vld [vmem:[%s403 + $0x8c0] sm:$0xff]
        %v2276 = vld [vmem:[%s403 + $0x8c8] sm:$0xff]
        %v2277 = vld [vmem:[%s403 + $0x8d0] sm:$0xff]
        %v2278 = vld [vmem:[%s403 + $0x8d8] sm:$0xff]
        %v2279 = vld [vmem:[%s403 + $0x8e0] sm:$0xff]
        %v2280 = vld [vmem:[%s403 + $0x8e8] sm:$0xff]
        %v2281 = vld [vmem:[%s403 + $0x8f0] sm:$0xff]
        %v2282 = vld [vmem:[%s403 + $0x8f8] sm:$0xff]
        %v2283 = vld [vmem:[%s403 + $0x900] sm:$0xff]
        %v2284 = vld [vmem:[%s403 + $0x908] sm:$0xff]
        %v2285 = vld [vmem:[%s403 + $0x910] sm:$0xff]
        %v2286 = vld [vmem:[%s403 + $0x918] sm:$0xff]
        %v2287 = vld [vmem:[%s403 + $0x920] sm:$0xff]
        %v2288 = vld [vmem:[%s403 + $0x928] sm:$0xff]
        %v2289 = vld [vmem:[%s403 + $0x930] sm:$0xff]
        %v2290 = vld [vmem:[%s403 + $0x938] sm:$0xff]
        %v2291 = vld [vmem:[%s403 + $0x940] sm:$0xff]
        %v2292 = vld [vmem:[%s403 + $0x948] sm:$0xff]
        %v2293 = vld [vmem:[%s403 + $0x950] sm:$0xff]
        %v2294 = vld [vmem:[%s403 + $0x958] sm:$0xff]
        %v2295 = vld [vmem:[%s403 + $0x960] sm:$0xff]
        %v2296 = vld [vmem:[%s403 + $0x968] sm:$0xff]
        %v2297 = vld [vmem:[%s403 + $0x970] sm:$0xff]
        %v2298 = vld [vmem:[%s403 + $0x978] sm:$0xff]
        %v2299 = vld [vmem:[%s403 + $0x980] sm:$0xff]
        %v2300 = vld [vmem:[%s403 + $0x988] sm:$0xff]
        %v2301 = vld [vmem:[%s403 + $0x990] sm:$0xff]
        %v2302 = vld [vmem:[%s403 + $0x998] sm:$0xff]
        %v2303 = vld [vmem:[%s403 + $0x9a0] sm:$0xff]
        %v2304 = vld [vmem:[%s403 + $0x9a8] sm:$0xff]
        %v2305 = vld [vmem:[%s403 + $0x9b0] sm:$0xff]
        %v2306 = vld [vmem:[%s403 + $0x9b8] sm:$0xff]
        %v2307 = vld [vmem:[%s403 + $0x9c0] sm:$0xff]
        %v2308 = vld [vmem:[%s403 + $0x9c8] sm:$0xff]
        %v2309 = vld [vmem:[%s403 + $0x9d0] sm:$0xff]
        %v2310 = vld [vmem:[%s403 + $0x9d8] sm:$0xff]
        %v2311 = vld [vmem:[%s403 + $0x9e0] sm:$0xff]
        %v2312 = vld [vmem:[%s403 + $0x9e8] sm:$0xff]
        %v2313 = vld [vmem:[%s403 + $0x9f0] sm:$0xff]
        %v2314 = vld [vmem:[%s403 + $0x9f8] sm:$0xff]
        %v2315 = vld [vmem:[%s403 + $0xa00] sm:$0xff]
        %v2316 = vld [vmem:[%s403 + $0xa08] sm:$0xff]
        %v2317 = vld [vmem:[%s403 + $0xa10] sm:$0xff]
        %v2318 = vld [vmem:[%s403 + $0xa18] sm:$0xff]
        %v2319 = vld [vmem:[%s403 + $0xa20] sm:$0xff]
        %v2320 = vld [vmem:[%s403 + $0xa28] sm:$0xff]
        %v2321 = vld [vmem:[%s403 + $0xa30] sm:$0xff]
        %v2322 = vld [vmem:[%s403 + $0xa38] sm:$0xff]
        %v2323 = vld [vmem:[%s403 + $0xa40] sm:$0xff]
        %v2324 = vld [vmem:[%s403 + $0xa48] sm:$0xff]
        %v2325 = vld [vmem:[%s403 + $0xa50] sm:$0xff]
        %v2326 = vld [vmem:[%s403 + $0xa58] sm:$0xff]
        %v2327 = vld [vmem:[%s403 + $0xa60] sm:$0xff]
        %v2328 = vld [vmem:[%s403 + $0xa68] sm:$0xff]
        %v2329 = vld [vmem:[%s403 + $0xa70] sm:$0xff]
        %v2330 = vld [vmem:[%s403 + $0xa78] sm:$0xff]
        %v2331 = vld [vmem:[%s403 + $0xa80] sm:$0xff]
        %v2332 = vld [vmem:[%s403 + $0xa88] sm:$0xff]
        %v2333 = vld [vmem:[%s403 + $0xa90] sm:$0xff]
        %v2334 = vld [vmem:[%s403 + $0xa98] sm:$0xff]
        %v2335 = vld [vmem:[%s403 + $0xaa0] sm:$0xff]
        %v2336 = vld [vmem:[%s403 + $0xaa8] sm:$0xff]
        %v2337 = vld [vmem:[%s403 + $0xab0] sm:$0xff]
        %v2338 = vld [vmem:[%s403 + $0xab8] sm:$0xff]
        %v2339 = vld [vmem:[%s403 + $0xac0] sm:$0xff]
        %v2340 = vld [vmem:[%s403 + $0xac8] sm:$0xff]
        %v2341 = vld [vmem:[%s403 + $0xad0] sm:$0xff]
        %v2342 = vld [vmem:[%s403 + $0xad8] sm:$0xff]
        %v2343 = vld [vmem:[%s403 + $0xae0] sm:$0xff]
        %v2344 = vld [vmem:[%s403 + $0xae8] sm:$0xff]
        %v2345 = vld [vmem:[%s403 + $0xaf0] sm:$0xff]
        %v2346 = vld [vmem:[%s403 + $0xaf8] sm:$0xff]
        %v2347 = vld [vmem:[%s403 + $0xb00] sm:$0xff]
        %v2348 = vld [vmem:[%s403 + $0xb08] sm:$0xff]
        %v2349 = vld [vmem:[%s403 + $0xb10] sm:$0xff]
        %v2350 = vld [vmem:[%s403 + $0xb18] sm:$0xff]
        %v2351 = vld [vmem:[%s403 + $0xb20] sm:$0xff]
        %v2352 = vld [vmem:[%s403 + $0xb28] sm:$0xff]
        %v2353 = vld [vmem:[%s403 + $0xb30] sm:$0xff]
        %v2354 = vld [vmem:[%s403 + $0xb38] sm:$0xff]
        %v2355 = vld [vmem:[%s403 + $0xb40] sm:$0xff]
        %v2356 = vld [vmem:[%s403 + $0xb48] sm:$0xff]
        %v2357 = vld [vmem:[%s403 + $0xb50] sm:$0xff]
        %v2358 = vld [vmem:[%s403 + $0xb58] sm:$0xff]
        %v2359 = vld [vmem:[%s403 + $0xb60] sm:$0xff]
        %v2360 = vld [vmem:[%s403 + $0xb68] sm:$0xff]
        %v2361 = vld [vmem:[%s403 + $0xb70] sm:$0xff]
        %v2362 = vld [vmem:[%s403 + $0xb78] sm:$0xff]
        %v2363 = vld [vmem:[%s403 + $0xb80] sm:$0xff]
        %v2364 = vld [vmem:[%s403 + $0xb88] sm:$0xff]
        %v2365 = vld [vmem:[%s403 + $0xb90] sm:$0xff]
        %v2366 = vld [vmem:[%s403 + $0xb98] sm:$0xff]
        %v2367 = vld [vmem:[%s403 + $0xba0] sm:$0xff]
        %v2368 = vld [vmem:[%s403 + $0xba8] sm:$0xff]
        %v2369 = vld [vmem:[%s403 + $0xbb0] sm:$0xff]
        %v2370 = vld [vmem:[%s403 + $0xbb8] sm:$0xff]
        %v2371 = vld [vmem:[%s403 + $0xbc0] sm:$0xff]
        %v2372 = vld [vmem:[%s403 + $0xbc8] sm:$0xff]
        %v2373 = vld [vmem:[%s403 + $0xbd0] sm:$0xff]
        %v2374 = vld [vmem:[%s403 + $0xbd8] sm:$0xff]
        %v2375 = vld [vmem:[%s403 + $0xbe0] sm:$0xff]
        %v2376 = vld [vmem:[%s403 + $0xbe8] sm:$0xff]
        %v2377 = vld [vmem:[%s403 + $0xbf0] sm:$0xff]
        %v2378 = vld [vmem:[%s403 + $0xbf8] sm:$0xff]
        %v2379 = vld [vmem:[%s403 + $0xc00] sm:$0xff]
        %v2380 = vld [vmem:[%s403 + $0xc08] sm:$0xff]
        %v2381 = vld [vmem:[%s403 + $0xc10] sm:$0xff]
        %v2382 = vld [vmem:[%s403 + $0xc18] sm:$0xff]
        %v2383 = vld [vmem:[%s403 + $0xc20] sm:$0xff]
        %v2384 = vld [vmem:[%s403 + $0xc28] sm:$0xff]
        %v2385 = vld [vmem:[%s403 + $0xc30] sm:$0xff]
        %v2386 = vld [vmem:[%s403 + $0xc38] sm:$0xff]
        %v2387 = vld [vmem:[%s403 + $0xc40] sm:$0xff]
        %v2388 = vld [vmem:[%s403 + $0xc48] sm:$0xff]
        %v2389 = vld [vmem:[%s403 + $0xc50] sm:$0xff]
        %v2390 = vld [vmem:[%s403 + $0xc58] sm:$0xff]
        %v2391 = vld [vmem:[%s403 + $0xc60] sm:$0xff]
        %v2392 = vld [vmem:[%s403 + $0xc68] sm:$0xff]
        %v2393 = vld [vmem:[%s403 + $0xc70] sm:$0xff]
        %v2394 = vld [vmem:[%s403 + $0xc78] sm:$0xff]
        %v2395 = vld [vmem:[%s403 + $0xc80] sm:$0xff]
        %v2396 = vld [vmem:[%s403 + $0xc88] sm:$0xff]
        %v2397 = vld [vmem:[%s403 + $0xc90] sm:$0xff]
        %v2398 = vld [vmem:[%s403 + $0xc98] sm:$0xff]
        %v2399 = vld [vmem:[%s403 + $0xca0] sm:$0xff]
        %v2400 = vld [vmem:[%s403 + $0xca8] sm:$0xff]
        %v2401 = vld [vmem:[%s403 + $0xcb0] sm:$0xff]
        %v2402 = vld [vmem:[%s403 + $0xcb8] sm:$0xff]
        %v2403 = vld [vmem:[%s403 + $0xcc0] sm:$0xff]
        %v2404 = vld [vmem:[%s403 + $0xcc8] sm:$0xff]
        %v2405 = vld [vmem:[%s403 + $0xcd0] sm:$0xff]
        %v2406 = vld [vmem:[%s403 + $0xcd8] sm:$0xff]
        %v2407 = vld [vmem:[%s403 + $0xce0] sm:$0xff]
        %v2408 = vld [vmem:[%s403 + $0xce8] sm:$0xff]
        %v2409 = vld [vmem:[%s403 + $0xcf0] sm:$0xff]
        %v2410 = vld [vmem:[%s403 + $0xcf8] sm:$0xff]
        %v2411 = vld [vmem:[%s403 + $0xd00] sm:$0xff]
        %v2412 = vld [vmem:[%s403 + $0xd08] sm:$0xff]
        %v2413 = vld [vmem:[%s403 + $0xd10] sm:$0xff]
        %v2414 = vld [vmem:[%s403 + $0xd18] sm:$0xff]
        %v2415 = vld [vmem:[%s403 + $0xd20] sm:$0xff]
        %v2416 = vld [vmem:[%s403 + $0xd28] sm:$0xff]
        %v2417 = vld [vmem:[%s403 + $0xd30] sm:$0xff]
        %v2418 = vld [vmem:[%s403 + $0xd38] sm:$0xff]
        %v2419 = vld [vmem:[%s403 + $0xd40] sm:$0xff]
        %v2420 = vld [vmem:[%s403 + $0xd48] sm:$0xff]
        %v2421 = vld [vmem:[%s403 + $0xd50] sm:$0xff]
        %v2422 = vld [vmem:[%s403 + $0xd58] sm:$0xff]
        %v2423 = vld [vmem:[%s403 + $0xd60] sm:$0xff]
        %v2424 = vld [vmem:[%s403 + $0xd68] sm:$0xff]
        %v2425 = vld [vmem:[%s403 + $0xd70] sm:$0xff]
        %v2426 = vld [vmem:[%s403 + $0xd78] sm:$0xff]
        %v2427 = vld [vmem:[%s403 + $0xd80] sm:$0xff]
        %v2428 = vld [vmem:[%s403 + $0xd88] sm:$0xff]
        %v2429 = vld [vmem:[%s403 + $0xd90] sm:$0xff]
        %v2430 = vld [vmem:[%s403 + $0xd98] sm:$0xff]
        %v2431 = vld [vmem:[%s403 + $0xda0] sm:$0xff]
        %v2432 = vld [vmem:[%s403 + $0xda8] sm:$0xff]
        %v2433 = vld [vmem:[%s403 + $0xdb0] sm:$0xff]
        %v2434 = vld [vmem:[%s403 + $0xdb8] sm:$0xff]
        %v2435 = vld [vmem:[%s403 + $0xdc0] sm:$0xff]
        %v2436 = vld [vmem:[%s403 + $0xdc8] sm:$0xff]
        %v2437 = vld [vmem:[%s403 + $0xdd0] sm:$0xff]
        %v2438 = vld [vmem:[%s403 + $0xdd8] sm:$0xff]
        %v2439 = vld [vmem:[%s403 + $0xde0] sm:$0xff]
        %v2440 = vld [vmem:[%s403 + $0xde8] sm:$0xff]
        %v2441 = vld [vmem:[%s403 + $0xdf0] sm:$0xff]
        %v2442 = vld [vmem:[%s403 + $0xdf8] sm:$0xff]
        %v2443 = vld [vmem:[%s403 + $0xe00] sm:$0xff]
        %v2444 = vld [vmem:[%s403 + $0xe08] sm:$0xff]
        %v2445 = vld [vmem:[%s403 + $0xe10] sm:$0xff]
        %v2446 = vld [vmem:[%s403 + $0xe18] sm:$0xff]
        %v2447 = vld [vmem:[%s403 + $0xe20] sm:$0xff]
        %v2448 = vld [vmem:[%s403 + $0xe28] sm:$0xff]
        %v2449 = vld [vmem:[%s403 + $0xe30] sm:$0xff]
        %v2450 = vld [vmem:[%s403 + $0xe38] sm:$0xff]
        %v2451 = vld [vmem:[%s403 + $0xe40] sm:$0xff]
        %v2452 = vld [vmem:[%s403 + $0xe48] sm:$0xff]
        %v2453 = vld [vmem:[%s403 + $0xe50] sm:$0xff]
        %v2454 = vld [vmem:[%s403 + $0xe58] sm:$0xff]
        %v2455 = vld [vmem:[%s403 + $0xe60] sm:$0xff]
        %v2456 = vld [vmem:[%s403 + $0xe68] sm:$0xff]
        %v2457 = vld [vmem:[%s403 + $0xe70] sm:$0xff]
        %v2458 = vld [vmem:[%s403 + $0xe78] sm:$0xff]
        %v2459 = vld [vmem:[%s403 + $0xe80] sm:$0xff]
        %v2460 = vld [vmem:[%s403 + $0xe88] sm:$0xff]
        %v2461 = vld [vmem:[%s403 + $0xe90] sm:$0xff]
        %v2462 = vld [vmem:[%s403 + $0xe98] sm:$0xff]
        %v2463 = vld [vmem:[%s403 + $0xea0] sm:$0xff]
        %v2464 = vld [vmem:[%s403 + $0xea8] sm:$0xff]
        %v2465 = vld [vmem:[%s403 + $0xeb0] sm:$0xff]
        %v2466 = vld [vmem:[%s403 + $0xeb8] sm:$0xff]
        %v2467 = vld [vmem:[%s403 + $0xec0] sm:$0xff]
        %v2468 = vld [vmem:[%s403 + $0xec8] sm:$0xff]
        %v2469 = vld [vmem:[%s403 + $0xed0] sm:$0xff]
        %v2470 = vld [vmem:[%s403 + $0xed8] sm:$0xff]
        %v2471 = vld [vmem:[%s403 + $0xee0] sm:$0xff]
        %v2472 = vld [vmem:[%s403 + $0xee8] sm:$0xff]
        %v2473 = vld [vmem:[%s403 + $0xef0] sm:$0xff]
        %v2474 = vld [vmem:[%s403 + $0xef8] sm:$0xff]
        %v2475 = vld [vmem:[%s403 + $0xf00] sm:$0xff]
        %v2476 = vld [vmem:[%s403 + $0xf08] sm:$0xff]
        %v2477 = vld [vmem:[%s403 + $0xf10] sm:$0xff]
        %v2478 = vld [vmem:[%s403 + $0xf18] sm:$0xff]
        %v2479 = vld [vmem:[%s403 + $0xf20] sm:$0xff]
        %v2480 = vld [vmem:[%s403 + $0xf28] sm:$0xff]
        %v2481 = vld [vmem:[%s403 + $0xf30] sm:$0xff]
        %v2482 = vld [vmem:[%s403 + $0xf38] sm:$0xff]
        %v2483 = vld [vmem:[%s403 + $0xf40] sm:$0xff]
        %v2484 = vld [vmem:[%s403 + $0xf48] sm:$0xff]
        %v2485 = vld [vmem:[%s403 + $0xf50] sm:$0xff]
        %v2486 = vld [vmem:[%s403 + $0xf58] sm:$0xff]
        %v2487 = vld [vmem:[%s403 + $0xf60] sm:$0xff]
        %v2488 = vld [vmem:[%s403 + $0xf68] sm:$0xff]
        %v2489 = vld [vmem:[%s403 + $0xf70] sm:$0xff]
        %v2490 = vld [vmem:[%s403 + $0xf78] sm:$0xff]
        %v2491 = vld [vmem:[%s403 + $0xf80] sm:$0xff]
        %v2492 = vld [vmem:[%s403 + $0xf88] sm:$0xff]
        %v2493 = vld [vmem:[%s403 + $0xf90] sm:$0xff]
        %v2494 = vld [vmem:[%s403 + $0xf98] sm:$0xff]
        %v2495 = vld [vmem:[%s403 + $0xfa0] sm:$0xff]
        %v2496 = vld [vmem:[%s403 + $0xfa8] sm:$0xff]
        %v2497 = vld [vmem:[%s403 + $0xfb0] sm:$0xff]
        %v2498 = vld [vmem:[%s403 + $0xfb8] sm:$0xff]
        %v2499 = vld [vmem:[%s403 + $0xfc0] sm:$0xff]
        %v2500 = vld [vmem:[%s403 + $0xfc8] sm:$0xff]
        %v2501 = vld [vmem:[%s403 + $0xfd0] sm:$0xff]
        %v2502 = vld [vmem:[%s403 + $0xfd8] sm:$0xff]
        %v2503 = vld [vmem:[%s403 + $0xfe0] sm:$0xff]
        %v2504 = vld [vmem:[%s403 + $0xfe8] sm:$0xff]
        %v2505 = vld [vmem:[%s403 + $0xff0] sm:$0xff]
        %v2506 = vld [vmem:[%s403 + $0xff8] sm:$0xff]
        %s2507 = sshra.s32 %s30, 1
        %s2508 = sand.u32 %s30, 1
        %s2509 = sshra.s32 %s30, 1
        %s2510 = sand.u32 %s30, 1
        %s2511 = smul.u32 %s2507, 8
        %s2512 = smul.u32 %s2511, 2
        %s2513 = sadd.s32 %s2512, %s2510
        %s2514 = scalar_lea.vmem [#allocation9], %s2513
        %v2515 = vld [vmem:[%s2514] ss:$2 sm:$0xff]
        %v2517 = vlaneseq
        %v2518 = vshrl.u32 %v2517, 7
        %v2519 = vsub.s32 0, %v2518
        %v2520 = vrot.slane %v2515, %v2519
        %v2521 = vlaneseq
        %v2522 = vshrl.u32 %v2521, 7
        %v2523 = vsub.s32 1, %v2522
        %v2524 = vrot.slane %v2515, %v2523
        %v2525 = vlaneseq
        %v2526 = vshrl.u32 %v2525, 7
        %v2527 = vsub.s32 2, %v2526
        %v2528 = vrot.slane %v2515, %v2527
        %v2529 = vlaneseq
        %v2530 = vshrl.u32 %v2529, 7
        %v2531 = vsub.s32 3, %v2530
        %v2532 = vrot.slane %v2515, %v2531
        %v2533 = vlaneseq
        %v2534 = vshrl.u32 %v2533, 7
        %v2535 = vsub.s32 4, %v2534
        %v2536 = vrot.slane %v2515, %v2535
        %v2537 = vlaneseq
        %v2538 = vshrl.u32 %v2537, 7
        %v2539 = vsub.s32 5, %v2538
        %v2540 = vrot.slane %v2515, %v2539
        %v2541 = vlaneseq
        %v2542 = vshrl.u32 %v2541, 7
        %v2543 = vsub.s32 6, %v2542
        %v2544 = vrot.slane %v2515, %v2543
        %v2545 = vlaneseq
        %v2546 = vshrl.u32 %v2545, 7
        %v2547 = vsub.s32 7, %v2546
        %v2548 = vrot.slane %v2515, %v2547
        %v2561 = vunpack.c.l.b16 %v1991
        %v2562 = vunpack.c.h.b16 %v1991
        %v2563 = vunpack.c.l.b16 %v1992
        %v2564 = vunpack.c.h.b16 %v1992
        %v2565 = vunpack.c.l.b16 %v1993
        %v2566 = vunpack.c.h.b16 %v1993
        %v2567 = vunpack.c.l.b16 %v1994
        %v2568 = vunpack.c.h.b16 %v1994
        %v2569 = vpack.c.b16 %v2561, %v2561
        %v2570 = vpack.c.b16 %v2562, %v2562
        %v2571 = vpack.c.b16 %v2563, %v2563
        %v2572 = vpack.c.b16 %v2564, %v2564
        %v2573 = vpack.c.b16 %v2565, %v2565
        %v2574 = vpack.c.b16 %v2566, %v2566
        %v2575 = vpack.c.b16 %v2567, %v2567
        %v2576 = vpack.c.b16 %v2568, %v2568
        %v3097 = vunpack.c.l.b16 %v1995
        %v3098 = vunpack.c.h.b16 %v1995
        %v3099 = vunpack.c.l.b16 %v1996
        %v3100 = vunpack.c.h.b16 %v1996
        %v3101 = vunpack.c.l.b16 %v1997
        %v3102 = vunpack.c.h.b16 %v1997
        %v3103 = vunpack.c.l.b16 %v1998
        %v3104 = vunpack.c.h.b16 %v1998
        %v3105 = vunpack.c.l.b16 %v1999
        %v3106 = vunpack.c.h.b16 %v1999
        %v3107 = vunpack.c.l.b16 %v2000
        %v3108 = vunpack.c.h.b16 %v2000
        %v3109 = vunpack.c.l.b16 %v2001
        %v3110 = vunpack.c.h.b16 %v2001
        %v3111 = vunpack.c.l.b16 %v2002
        %v3112 = vunpack.c.h.b16 %v2002
        %v3113 = vunpack.c.l.b16 %v2003
        %v3114 = vunpack.c.h.b16 %v2003
        %v3115 = vunpack.c.l.b16 %v2004
        %v3116 = vunpack.c.h.b16 %v2004
        %v3117 = vunpack.c.l.b16 %v2005
        %v3118 = vunpack.c.h.b16 %v2005
        %v3119 = vunpack.c.l.b16 %v2006
        %v3120 = vunpack.c.h.b16 %v2006
        %v3121 = vunpack.c.l.b16 %v2007
        %v3122 = vunpack.c.h.b16 %v2007
        %v3123 = vunpack.c.l.b16 %v2008
        %v3124 = vunpack.c.h.b16 %v2008
        %v3125 = vunpack.c.l.b16 %v2009
        %v3126 = vunpack.c.h.b16 %v2009
        %v3127 = vunpack.c.l.b16 %v2010
        %v3128 = vunpack.c.h.b16 %v2010
        %v3129 = vunpack.c.l.b16 %v2011
        %v3130 = vunpack.c.h.b16 %v2011
        %v3131 = vunpack.c.l.b16 %v2012
        %v3132 = vunpack.c.h.b16 %v2012
        %v3133 = vunpack.c.l.b16 %v2013
        %v3134 = vunpack.c.h.b16 %v2013
        %v3135 = vunpack.c.l.b16 %v2014
        %v3136 = vunpack.c.h.b16 %v2014
        %v3137 = vunpack.c.l.b16 %v2015
        %v3138 = vunpack.c.h.b16 %v2015
        %v3139 = vunpack.c.l.b16 %v2016
        %v3140 = vunpack.c.h.b16 %v2016
        %v3141 = vunpack.c.l.b16 %v2017
        %v3142 = vunpack.c.h.b16 %v2017
        %v3143 = vunpack.c.l.b16 %v2018
        %v3144 = vunpack.c.h.b16 %v2018
        %v3145 = vunpack.c.l.b16 %v2019
        %v3146 = vunpack.c.h.b16 %v2019
        %v3147 = vunpack.c.l.b16 %v2020
        %v3148 = vunpack.c.h.b16 %v2020
        %v3149 = vunpack.c.l.b16 %v2021
        %v3150 = vunpack.c.h.b16 %v2021
        %v3151 = vunpack.c.l.b16 %v2022
        %v3152 = vunpack.c.h.b16 %v2022
        %v3153 = vunpack.c.l.b16 %v2023
        %v3154 = vunpack.c.h.b16 %v2023
        %v3155 = vunpack.c.l.b16 %v2024
        %v3156 = vunpack.c.h.b16 %v2024
        %v3157 = vunpack.c.l.b16 %v2025
        %v3158 = vunpack.c.h.b16 %v2025
        %v3159 = vunpack.c.l.b16 %v2026
        %v3160 = vunpack.c.h.b16 %v2026
        %v3161 = vunpack.c.l.b16 %v2027
        %v3162 = vunpack.c.h.b16 %v2027
        %v3163 = vunpack.c.l.b16 %v2028
        %v3164 = vunpack.c.h.b16 %v2028
        %v3165 = vunpack.c.l.b16 %v2029
        %v3166 = vunpack.c.h.b16 %v2029
        %v3167 = vunpack.c.l.b16 %v2030
        %v3168 = vunpack.c.h.b16 %v2030
        %v3169 = vunpack.c.l.b16 %v2031
        %v3170 = vunpack.c.h.b16 %v2031
        %v3171 = vunpack.c.l.b16 %v2032
        %v3172 = vunpack.c.h.b16 %v2032
        %v3173 = vunpack.c.l.b16 %v2033
        %v3174 = vunpack.c.h.b16 %v2033
        %v3175 = vunpack.c.l.b16 %v2034
        %v3176 = vunpack.c.h.b16 %v2034
        %v3177 = vunpack.c.l.b16 %v2035
        %v3178 = vunpack.c.h.b16 %v2035
        %v3179 = vunpack.c.l.b16 %v2036
        %v3180 = vunpack.c.h.b16 %v2036
        %v3181 = vunpack.c.l.b16 %v2037
        %v3182 = vunpack.c.h.b16 %v2037
        %v3183 = vunpack.c.l.b16 %v2038
        %v3184 = vunpack.c.h.b16 %v2038
        %v3185 = vunpack.c.l.b16 %v2039
        %v3186 = vunpack.c.h.b16 %v2039
        %v3187 = vunpack.c.l.b16 %v2040
        %v3188 = vunpack.c.h.b16 %v2040
        %v3189 = vunpack.c.l.b16 %v2041
        %v3190 = vunpack.c.h.b16 %v2041
        %v3191 = vunpack.c.l.b16 %v2042
        %v3192 = vunpack.c.h.b16 %v2042
        %v3193 = vunpack.c.l.b16 %v2043
        %v3194 = vunpack.c.h.b16 %v2043
        %v3195 = vunpack.c.l.b16 %v2044
        %v3196 = vunpack.c.h.b16 %v2044
        %v3197 = vunpack.c.l.b16 %v2045
        %v3198 = vunpack.c.h.b16 %v2045
        %v3199 = vunpack.c.l.b16 %v2046
        %v3200 = vunpack.c.h.b16 %v2046
        %v3201 = vunpack.c.l.b16 %v2047
        %v3202 = vunpack.c.h.b16 %v2047
        %v3203 = vunpack.c.l.b16 %v2048
        %v3204 = vunpack.c.h.b16 %v2048
        %v3205 = vunpack.c.l.b16 %v2049
        %v3206 = vunpack.c.h.b16 %v2049
        %v3207 = vunpack.c.l.b16 %v2050
        %v3208 = vunpack.c.h.b16 %v2050
        %v3209 = vunpack.c.l.b16 %v2051
        %v3210 = vunpack.c.h.b16 %v2051
        %v3211 = vunpack.c.l.b16 %v2052
        %v3212 = vunpack.c.h.b16 %v2052
        %v3213 = vunpack.c.l.b16 %v2053
        %v3214 = vunpack.c.h.b16 %v2053
        %v3215 = vunpack.c.l.b16 %v2054
        %v3216 = vunpack.c.h.b16 %v2054
        %v3217 = vunpack.c.l.b16 %v2055
        %v3218 = vunpack.c.h.b16 %v2055
        %v3219 = vunpack.c.l.b16 %v2056
        %v3220 = vunpack.c.h.b16 %v2056
        %v3221 = vunpack.c.l.b16 %v2057
        %v3222 = vunpack.c.h.b16 %v2057
        %v3223 = vunpack.c.l.b16 %v2058
        %v3224 = vunpack.c.h.b16 %v2058
        %v3225 = vunpack.c.l.b16 %v2059
        %v3226 = vunpack.c.h.b16 %v2059
        %v3227 = vunpack.c.l.b16 %v2060
        %v3228 = vunpack.c.h.b16 %v2060
        %v3229 = vunpack.c.l.b16 %v2061
        %v3230 = vunpack.c.h.b16 %v2061
        %v3231 = vunpack.c.l.b16 %v2062
        %v3232 = vunpack.c.h.b16 %v2062
        %v3233 = vunpack.c.l.b16 %v2063
        %v3234 = vunpack.c.h.b16 %v2063
        %v3235 = vunpack.c.l.b16 %v2064
        %v3236 = vunpack.c.h.b16 %v2064
        %v3237 = vunpack.c.l.b16 %v2065
        %v3238 = vunpack.c.h.b16 %v2065
        %v3239 = vunpack.c.l.b16 %v2066
        %v3240 = vunpack.c.h.b16 %v2066
        %v3241 = vunpack.c.l.b16 %v2067
        %v3242 = vunpack.c.h.b16 %v2067
        %v3243 = vunpack.c.l.b16 %v2068
        %v3244 = vunpack.c.h.b16 %v2068
        %v3245 = vunpack.c.l.b16 %v2069
        %v3246 = vunpack.c.h.b16 %v2069
        %v3247 = vunpack.c.l.b16 %v2070
        %v3248 = vunpack.c.h.b16 %v2070
        %v3249 = vunpack.c.l.b16 %v2071
        %v3250 = vunpack.c.h.b16 %v2071
        %v3251 = vunpack.c.l.b16 %v2072
        %v3252 = vunpack.c.h.b16 %v2072
        %v3253 = vunpack.c.l.b16 %v2073
        %v3254 = vunpack.c.h.b16 %v2073
        %v3255 = vunpack.c.l.b16 %v2074
        %v3256 = vunpack.c.h.b16 %v2074
        %v3257 = vunpack.c.l.b16 %v2075
        %v3258 = vunpack.c.h.b16 %v2075
        %v3259 = vunpack.c.l.b16 %v2076
        %v3260 = vunpack.c.h.b16 %v2076
        %v3261 = vunpack.c.l.b16 %v2077
        %v3262 = vunpack.c.h.b16 %v2077
        %v3263 = vunpack.c.l.b16 %v2078
        %v3264 = vunpack.c.h.b16 %v2078
        %v3265 = vunpack.c.l.b16 %v2079
        %v3266 = vunpack.c.h.b16 %v2079
        %v3267 = vunpack.c.l.b16 %v2080
        %v3268 = vunpack.c.h.b16 %v2080
        %v3269 = vunpack.c.l.b16 %v2081
        %v3270 = vunpack.c.h.b16 %v2081
        %v3271 = vunpack.c.l.b16 %v2082
        %v3272 = vunpack.c.h.b16 %v2082
        %v3273 = vunpack.c.l.b16 %v2083
        %v3274 = vunpack.c.h.b16 %v2083
        %v3275 = vunpack.c.l.b16 %v2084
        %v3276 = vunpack.c.h.b16 %v2084
        %v3277 = vunpack.c.l.b16 %v2085
        %v3278 = vunpack.c.h.b16 %v2085
        %v3279 = vunpack.c.l.b16 %v2086
        %v3280 = vunpack.c.h.b16 %v2086
        %v3281 = vunpack.c.l.b16 %v2087
        %v3282 = vunpack.c.h.b16 %v2087
        %v3283 = vunpack.c.l.b16 %v2088
        %v3284 = vunpack.c.h.b16 %v2088
        %v3285 = vunpack.c.l.b16 %v2089
        %v3286 = vunpack.c.h.b16 %v2089
        %v3287 = vunpack.c.l.b16 %v2090
        %v3288 = vunpack.c.h.b16 %v2090
        %v3289 = vunpack.c.l.b16 %v2091
        %v3290 = vunpack.c.h.b16 %v2091
        %v3291 = vunpack.c.l.b16 %v2092
        %v3292 = vunpack.c.h.b16 %v2092
        %v3293 = vunpack.c.l.b16 %v2093
        %v3294 = vunpack.c.h.b16 %v2093
        %v3295 = vunpack.c.l.b16 %v2094
        %v3296 = vunpack.c.h.b16 %v2094
        %v3297 = vunpack.c.l.b16 %v2095
        %v3298 = vunpack.c.h.b16 %v2095
        %v3299 = vunpack.c.l.b16 %v2096
        %v3300 = vunpack.c.h.b16 %v2096
        %v3301 = vunpack.c.l.b16 %v2097
        %v3302 = vunpack.c.h.b16 %v2097
        %v3303 = vunpack.c.l.b16 %v2098
        %v3304 = vunpack.c.h.b16 %v2098
        %v3305 = vunpack.c.l.b16 %v2099
        %v3306 = vunpack.c.h.b16 %v2099
        %v3307 = vunpack.c.l.b16 %v2100
        %v3308 = vunpack.c.h.b16 %v2100
        %v3309 = vunpack.c.l.b16 %v2101
        %v3310 = vunpack.c.h.b16 %v2101
        %v3311 = vunpack.c.l.b16 %v2102
        %v3312 = vunpack.c.h.b16 %v2102
        %v3313 = vunpack.c.l.b16 %v2103
        %v3314 = vunpack.c.h.b16 %v2103
        %v3315 = vunpack.c.l.b16 %v2104
        %v3316 = vunpack.c.h.b16 %v2104
        %v3317 = vunpack.c.l.b16 %v2105
        %v3318 = vunpack.c.h.b16 %v2105
        %v3319 = vunpack.c.l.b16 %v2106
        %v3320 = vunpack.c.h.b16 %v2106
        %v3321 = vunpack.c.l.b16 %v2107
        %v3322 = vunpack.c.h.b16 %v2107
        %v3323 = vunpack.c.l.b16 %v2108
        %v3324 = vunpack.c.h.b16 %v2108
        %v3325 = vunpack.c.l.b16 %v2109
        %v3326 = vunpack.c.h.b16 %v2109
        %v3327 = vunpack.c.l.b16 %v2110
        %v3328 = vunpack.c.h.b16 %v2110
        %v3329 = vunpack.c.l.b16 %v2111
        %v3330 = vunpack.c.h.b16 %v2111
        %v3331 = vunpack.c.l.b16 %v2112
        %v3332 = vunpack.c.h.b16 %v2112
        %v3333 = vunpack.c.l.b16 %v2113
        %v3334 = vunpack.c.h.b16 %v2113
        %v3335 = vunpack.c.l.b16 %v2114
        %v3336 = vunpack.c.h.b16 %v2114
        %v3337 = vunpack.c.l.b16 %v2115
        %v3338 = vunpack.c.h.b16 %v2115
        %v3339 = vunpack.c.l.b16 %v2116
        %v3340 = vunpack.c.h.b16 %v2116
        %v3341 = vunpack.c.l.b16 %v2117
        %v3342 = vunpack.c.h.b16 %v2117
        %v3343 = vunpack.c.l.b16 %v2118
        %v3344 = vunpack.c.h.b16 %v2118
        %v3345 = vunpack.c.l.b16 %v2119
        %v3346 = vunpack.c.h.b16 %v2119
        %v3347 = vunpack.c.l.b16 %v2120
        %v3348 = vunpack.c.h.b16 %v2120
        %v3349 = vunpack.c.l.b16 %v2121
        %v3350 = vunpack.c.h.b16 %v2121
        %v3351 = vunpack.c.l.b16 %v2122
        %v3352 = vunpack.c.h.b16 %v2122
        %v3353 = vunpack.c.l.b16 %v2123
        %v3354 = vunpack.c.h.b16 %v2123
        %v3355 = vunpack.c.l.b16 %v2124
        %v3356 = vunpack.c.h.b16 %v2124
        %v3357 = vunpack.c.l.b16 %v2125
        %v3358 = vunpack.c.h.b16 %v2125
        %v3359 = vunpack.c.l.b16 %v2126
        %v3360 = vunpack.c.h.b16 %v2126
        %v3361 = vunpack.c.l.b16 %v2127
        %v3362 = vunpack.c.h.b16 %v2127
        %v3363 = vunpack.c.l.b16 %v2128
        %v3364 = vunpack.c.h.b16 %v2128
        %v3365 = vunpack.c.l.b16 %v2129
        %v3366 = vunpack.c.h.b16 %v2129
        %v3367 = vunpack.c.l.b16 %v2130
        %v3368 = vunpack.c.h.b16 %v2130
        %v3369 = vunpack.c.l.b16 %v2131
        %v3370 = vunpack.c.h.b16 %v2131
        %v3371 = vunpack.c.l.b16 %v2132
        %v3372 = vunpack.c.h.b16 %v2132
        %v3373 = vunpack.c.l.b16 %v2133
        %v3374 = vunpack.c.h.b16 %v2133
        %v3375 = vunpack.c.l.b16 %v2134
        %v3376 = vunpack.c.h.b16 %v2134
        %v3377 = vunpack.c.l.b16 %v2135
        %v3378 = vunpack.c.h.b16 %v2135
        %v3379 = vunpack.c.l.b16 %v2136
        %v3380 = vunpack.c.h.b16 %v2136
        %v3381 = vunpack.c.l.b16 %v2137
        %v3382 = vunpack.c.h.b16 %v2137
        %v3383 = vunpack.c.l.b16 %v2138
        %v3384 = vunpack.c.h.b16 %v2138
        %v3385 = vunpack.c.l.b16 %v2139
        %v3386 = vunpack.c.h.b16 %v2139
        %v3387 = vunpack.c.l.b16 %v2140
        %v3388 = vunpack.c.h.b16 %v2140
        %v3389 = vunpack.c.l.b16 %v2141
        %v3390 = vunpack.c.h.b16 %v2141
        %v3391 = vunpack.c.l.b16 %v2142
        %v3392 = vunpack.c.h.b16 %v2142
        %v3393 = vunpack.c.l.b16 %v2143
        %v3394 = vunpack.c.h.b16 %v2143
        %v3395 = vunpack.c.l.b16 %v2144
        %v3396 = vunpack.c.h.b16 %v2144
        %v3397 = vunpack.c.l.b16 %v2145
        %v3398 = vunpack.c.h.b16 %v2145
        %v3399 = vunpack.c.l.b16 %v2146
        %v3400 = vunpack.c.h.b16 %v2146
        %v3401 = vunpack.c.l.b16 %v2147
        %v3402 = vunpack.c.h.b16 %v2147
        %v3403 = vunpack.c.l.b16 %v2148
        %v3404 = vunpack.c.h.b16 %v2148
        %v3405 = vunpack.c.l.b16 %v2149
        %v3406 = vunpack.c.h.b16 %v2149
        %v3407 = vunpack.c.l.b16 %v2150
        %v3408 = vunpack.c.h.b16 %v2150
        %v3409 = vunpack.c.l.b16 %v2151
        %v3410 = vunpack.c.h.b16 %v2151
        %v3411 = vunpack.c.l.b16 %v2152
        %v3412 = vunpack.c.h.b16 %v2152
        %v3413 = vunpack.c.l.b16 %v2153
        %v3414 = vunpack.c.h.b16 %v2153
        %v3415 = vunpack.c.l.b16 %v2154
        %v3416 = vunpack.c.h.b16 %v2154
        %v3417 = vunpack.c.l.b16 %v2155
        %v3418 = vunpack.c.h.b16 %v2155
        %v3419 = vunpack.c.l.b16 %v2156
        %v3420 = vunpack.c.h.b16 %v2156
        %v3421 = vunpack.c.l.b16 %v2157
        %v3422 = vunpack.c.h.b16 %v2157
        %v3423 = vunpack.c.l.b16 %v2158
        %v3424 = vunpack.c.h.b16 %v2158
        %v3425 = vunpack.c.l.b16 %v2159
        %v3426 = vunpack.c.h.b16 %v2159
        %v3427 = vunpack.c.l.b16 %v2160
        %v3428 = vunpack.c.h.b16 %v2160
        %v3429 = vunpack.c.l.b16 %v2161
        %v3430 = vunpack.c.h.b16 %v2161
        %v3431 = vunpack.c.l.b16 %v2162
        %v3432 = vunpack.c.h.b16 %v2162
        %v3433 = vunpack.c.l.b16 %v2163
        %v3434 = vunpack.c.h.b16 %v2163
        %v3435 = vunpack.c.l.b16 %v2164
        %v3436 = vunpack.c.h.b16 %v2164
        %v3437 = vunpack.c.l.b16 %v2165
        %v3438 = vunpack.c.h.b16 %v2165
        %v3439 = vunpack.c.l.b16 %v2166
        %v3440 = vunpack.c.h.b16 %v2166
        %v3441 = vunpack.c.l.b16 %v2167
        %v3442 = vunpack.c.h.b16 %v2167
        %v3443 = vunpack.c.l.b16 %v2168
        %v3444 = vunpack.c.h.b16 %v2168
        %v3445 = vunpack.c.l.b16 %v2169
        %v3446 = vunpack.c.h.b16 %v2169
        %v3447 = vunpack.c.l.b16 %v2170
        %v3448 = vunpack.c.h.b16 %v2170
        %v3449 = vunpack.c.l.b16 %v2171
        %v3450 = vunpack.c.h.b16 %v2171
        %v3451 = vunpack.c.l.b16 %v2172
        %v3452 = vunpack.c.h.b16 %v2172
        %v3453 = vunpack.c.l.b16 %v2173
        %v3454 = vunpack.c.h.b16 %v2173
        %v3455 = vunpack.c.l.b16 %v2174
        %v3456 = vunpack.c.h.b16 %v2174
        %v3457 = vunpack.c.l.b16 %v2175
        %v3458 = vunpack.c.h.b16 %v2175
        %v3459 = vunpack.c.l.b16 %v2176
        %v3460 = vunpack.c.h.b16 %v2176
        %v3461 = vunpack.c.l.b16 %v2177
        %v3462 = vunpack.c.h.b16 %v2177
        %v3463 = vunpack.c.l.b16 %v2178
        %v3464 = vunpack.c.h.b16 %v2178
        %v3465 = vunpack.c.l.b16 %v2179
        %v3466 = vunpack.c.h.b16 %v2179
        %v3467 = vunpack.c.l.b16 %v2180
        %v3468 = vunpack.c.h.b16 %v2180
        %v3469 = vunpack.c.l.b16 %v2181
        %v3470 = vunpack.c.h.b16 %v2181
        %v3471 = vunpack.c.l.b16 %v2182
        %v3472 = vunpack.c.h.b16 %v2182
        %v3473 = vunpack.c.l.b16 %v2183
        %v3474 = vunpack.c.h.b16 %v2183
        %v3475 = vunpack.c.l.b16 %v2184
        %v3476 = vunpack.c.h.b16 %v2184
        %v3477 = vunpack.c.l.b16 %v2185
        %v3478 = vunpack.c.h.b16 %v2185
        %v3479 = vunpack.c.l.b16 %v2186
        %v3480 = vunpack.c.h.b16 %v2186
        %v3481 = vunpack.c.l.b16 %v2187
        %v3482 = vunpack.c.h.b16 %v2187
        %v3483 = vunpack.c.l.b16 %v2188
        %v3484 = vunpack.c.h.b16 %v2188
        %v3485 = vunpack.c.l.b16 %v2189
        %v3486 = vunpack.c.h.b16 %v2189
        %v3487 = vunpack.c.l.b16 %v2190
        %v3488 = vunpack.c.h.b16 %v2190
        %v3489 = vunpack.c.l.b16 %v2191
        %v3490 = vunpack.c.h.b16 %v2191
        %v3491 = vunpack.c.l.b16 %v2192
        %v3492 = vunpack.c.h.b16 %v2192
        %v3493 = vunpack.c.l.b16 %v2193
        %v3494 = vunpack.c.h.b16 %v2193
        %v3495 = vunpack.c.l.b16 %v2194
        %v3496 = vunpack.c.h.b16 %v2194
        %v3497 = vunpack.c.l.b16 %v2195
        %v3498 = vunpack.c.h.b16 %v2195
        %v3499 = vunpack.c.l.b16 %v2196
        %v3500 = vunpack.c.h.b16 %v2196
        %v3501 = vunpack.c.l.b16 %v2197
        %v3502 = vunpack.c.h.b16 %v2197
        %v3503 = vunpack.c.l.b16 %v2198
        %v3504 = vunpack.c.h.b16 %v2198
        %v3505 = vunpack.c.l.b16 %v2199
        %v3506 = vunpack.c.h.b16 %v2199
        %v3507 = vunpack.c.l.b16 %v2200
        %v3508 = vunpack.c.h.b16 %v2200
        %v3509 = vunpack.c.l.b16 %v2201
        %v3510 = vunpack.c.h.b16 %v2201
        %v3511 = vunpack.c.l.b16 %v2202
        %v3512 = vunpack.c.h.b16 %v2202
        %v3513 = vunpack.c.l.b16 %v2203
        %v3514 = vunpack.c.h.b16 %v2203
        %v3515 = vunpack.c.l.b16 %v2204
        %v3516 = vunpack.c.h.b16 %v2204
        %v3517 = vunpack.c.l.b16 %v2205
        %v3518 = vunpack.c.h.b16 %v2205
        %v3519 = vunpack.c.l.b16 %v2206
        %v3520 = vunpack.c.h.b16 %v2206
        %v3521 = vunpack.c.l.b16 %v2207
        %v3522 = vunpack.c.h.b16 %v2207
        %v3523 = vunpack.c.l.b16 %v2208
        %v3524 = vunpack.c.h.b16 %v2208
        %v3525 = vunpack.c.l.b16 %v2209
        %v3526 = vunpack.c.h.b16 %v2209
        %v3527 = vunpack.c.l.b16 %v2210
        %v3528 = vunpack.c.h.b16 %v2210
        %v3529 = vunpack.c.l.b16 %v2211
        %v3530 = vunpack.c.h.b16 %v2211
        %v3531 = vunpack.c.l.b16 %v2212
        %v3532 = vunpack.c.h.b16 %v2212
        %v3533 = vunpack.c.l.b16 %v2213
        %v3534 = vunpack.c.h.b16 %v2213
        %v3535 = vunpack.c.l.b16 %v2214
        %v3536 = vunpack.c.h.b16 %v2214
        %v3537 = vunpack.c.l.b16 %v2215
        %v3538 = vunpack.c.h.b16 %v2215
        %v3539 = vunpack.c.l.b16 %v2216
        %v3540 = vunpack.c.h.b16 %v2216
        %v3541 = vunpack.c.l.b16 %v2217
        %v3542 = vunpack.c.h.b16 %v2217
        %v3543 = vunpack.c.l.b16 %v2218
        %v3544 = vunpack.c.h.b16 %v2218
        %v3545 = vunpack.c.l.b16 %v2219
        %v3546 = vunpack.c.h.b16 %v2219
        %v3547 = vunpack.c.l.b16 %v2220
        %v3548 = vunpack.c.h.b16 %v2220
        %v3549 = vunpack.c.l.b16 %v2221
        %v3550 = vunpack.c.h.b16 %v2221
        %v3551 = vunpack.c.l.b16 %v2222
        %v3552 = vunpack.c.h.b16 %v2222
        %v3553 = vunpack.c.l.b16 %v2223
        %v3554 = vunpack.c.h.b16 %v2223
        %v3555 = vunpack.c.l.b16 %v2224
        %v3556 = vunpack.c.h.b16 %v2224
        %v3557 = vunpack.c.l.b16 %v2225
        %v3558 = vunpack.c.h.b16 %v2225
        %v3559 = vunpack.c.l.b16 %v2226
        %v3560 = vunpack.c.h.b16 %v2226
        %v3561 = vunpack.c.l.b16 %v2227
        %v3562 = vunpack.c.h.b16 %v2227
        %v3563 = vunpack.c.l.b16 %v2228
        %v3564 = vunpack.c.h.b16 %v2228
        %v3565 = vunpack.c.l.b16 %v2229
        %v3566 = vunpack.c.h.b16 %v2229
        %v3567 = vunpack.c.l.b16 %v2230
        %v3568 = vunpack.c.h.b16 %v2230
        %v3569 = vunpack.c.l.b16 %v2231
        %v3570 = vunpack.c.h.b16 %v2231
        %v3571 = vunpack.c.l.b16 %v2232
        %v3572 = vunpack.c.h.b16 %v2232
        %v3573 = vunpack.c.l.b16 %v2233
        %v3574 = vunpack.c.h.b16 %v2233
        %v3575 = vunpack.c.l.b16 %v2234
        %v3576 = vunpack.c.h.b16 %v2234
        %v3577 = vunpack.c.l.b16 %v2235
        %v3578 = vunpack.c.h.b16 %v2235
        %v3579 = vunpack.c.l.b16 %v2236
        %v3580 = vunpack.c.h.b16 %v2236
        %v3581 = vunpack.c.l.b16 %v2237
        %v3582 = vunpack.c.h.b16 %v2237
        %v3583 = vunpack.c.l.b16 %v2238
        %v3584 = vunpack.c.h.b16 %v2238
        %v3585 = vunpack.c.l.b16 %v2239
        %v3586 = vunpack.c.h.b16 %v2239
        %v3587 = vunpack.c.l.b16 %v2240
        %v3588 = vunpack.c.h.b16 %v2240
        %v3589 = vunpack.c.l.b16 %v2241
        %v3590 = vunpack.c.h.b16 %v2241
        %v3591 = vunpack.c.l.b16 %v2242
        %v3592 = vunpack.c.h.b16 %v2242
        %v3593 = vunpack.c.l.b16 %v2243
        %v3594 = vunpack.c.h.b16 %v2243
        %v3595 = vunpack.c.l.b16 %v2244
        %v3596 = vunpack.c.h.b16 %v2244
        %v3597 = vunpack.c.l.b16 %v2245
        %v3598 = vunpack.c.h.b16 %v2245
        %v3599 = vunpack.c.l.b16 %v2246
        %v3600 = vunpack.c.h.b16 %v2246
        %v3601 = vunpack.c.l.b16 %v2247
        %v3602 = vunpack.c.h.b16 %v2247
        %v3603 = vunpack.c.l.b16 %v2248
        %v3604 = vunpack.c.h.b16 %v2248
        %v3605 = vunpack.c.l.b16 %v2249
        %v3606 = vunpack.c.h.b16 %v2249
        %v3607 = vunpack.c.l.b16 %v2250
        %v3608 = vunpack.c.h.b16 %v2250
        %v3609 = vunpack.c.l.b16 %v2251
        %v3610 = vunpack.c.h.b16 %v2251
        %v3611 = vunpack.c.l.b16 %v2252
        %v3612 = vunpack.c.h.b16 %v2252
        %v3613 = vunpack.c.l.b16 %v2253
        %v3614 = vunpack.c.h.b16 %v2253
        %v3615 = vunpack.c.l.b16 %v2254
        %v3616 = vunpack.c.h.b16 %v2254
        %v3617 = vunpack.c.l.b16 %v2255
        %v3618 = vunpack.c.h.b16 %v2255
        %v3619 = vunpack.c.l.b16 %v2256
        %v3620 = vunpack.c.h.b16 %v2256
        %v3621 = vunpack.c.l.b16 %v2257
        %v3622 = vunpack.c.h.b16 %v2257
        %v3623 = vunpack.c.l.b16 %v2258
        %v3624 = vunpack.c.h.b16 %v2258
        %v3625 = vunpack.c.l.b16 %v2259
        %v3626 = vunpack.c.h.b16 %v2259
        %v3627 = vunpack.c.l.b16 %v2260
        %v3628 = vunpack.c.h.b16 %v2260
        %v3629 = vunpack.c.l.b16 %v2261
        %v3630 = vunpack.c.h.b16 %v2261
        %v3631 = vunpack.c.l.b16 %v2262
        %v3632 = vunpack.c.h.b16 %v2262
        %v3633 = vunpack.c.l.b16 %v2263
        %v3634 = vunpack.c.h.b16 %v2263
        %v3635 = vunpack.c.l.b16 %v2264
        %v3636 = vunpack.c.h.b16 %v2264
        %v3637 = vunpack.c.l.b16 %v2265
        %v3638 = vunpack.c.h.b16 %v2265
        %v3639 = vunpack.c.l.b16 %v2266
        %v3640 = vunpack.c.h.b16 %v2266
        %v3641 = vunpack.c.l.b16 %v2267
        %v3642 = vunpack.c.h.b16 %v2267
        %v3643 = vunpack.c.l.b16 %v2268
        %v3644 = vunpack.c.h.b16 %v2268
        %v3645 = vunpack.c.l.b16 %v2269
        %v3646 = vunpack.c.h.b16 %v2269
        %v3647 = vunpack.c.l.b16 %v2270
        %v3648 = vunpack.c.h.b16 %v2270
        %v3649 = vunpack.c.l.b16 %v2271
        %v3650 = vunpack.c.h.b16 %v2271
        %v3651 = vunpack.c.l.b16 %v2272
        %v3652 = vunpack.c.h.b16 %v2272
        %v3653 = vunpack.c.l.b16 %v2273
        %v3654 = vunpack.c.h.b16 %v2273
        %v3655 = vunpack.c.l.b16 %v2274
        %v3656 = vunpack.c.h.b16 %v2274
        %v3657 = vunpack.c.l.b16 %v2275
        %v3658 = vunpack.c.h.b16 %v2275
        %v3659 = vunpack.c.l.b16 %v2276
        %v3660 = vunpack.c.h.b16 %v2276
        %v3661 = vunpack.c.l.b16 %v2277
        %v3662 = vunpack.c.h.b16 %v2277
        %v3663 = vunpack.c.l.b16 %v2278
        %v3664 = vunpack.c.h.b16 %v2278
        %v3665 = vunpack.c.l.b16 %v2279
        %v3666 = vunpack.c.h.b16 %v2279
        %v3667 = vunpack.c.l.b16 %v2280
        %v3668 = vunpack.c.h.b16 %v2280
        %v3669 = vunpack.c.l.b16 %v2281
        %v3670 = vunpack.c.h.b16 %v2281
        %v3671 = vunpack.c.l.b16 %v2282
        %v3672 = vunpack.c.h.b16 %v2282
        %v3673 = vunpack.c.l.b16 %v2283
        %v3674 = vunpack.c.h.b16 %v2283
        %v3675 = vunpack.c.l.b16 %v2284
        %v3676 = vunpack.c.h.b16 %v2284
        %v3677 = vunpack.c.l.b16 %v2285
        %v3678 = vunpack.c.h.b16 %v2285
        %v3679 = vunpack.c.l.b16 %v2286
        %v3680 = vunpack.c.h.b16 %v2286
        %v3681 = vunpack.c.l.b16 %v2287
        %v3682 = vunpack.c.h.b16 %v2287
        %v3683 = vunpack.c.l.b16 %v2288
        %v3684 = vunpack.c.h.b16 %v2288
        %v3685 = vunpack.c.l.b16 %v2289
        %v3686 = vunpack.c.h.b16 %v2289
        %v3687 = vunpack.c.l.b16 %v2290
        %v3688 = vunpack.c.h.b16 %v2290
        %v3689 = vunpack.c.l.b16 %v2291
        %v3690 = vunpack.c.h.b16 %v2291
        %v3691 = vunpack.c.l.b16 %v2292
        %v3692 = vunpack.c.h.b16 %v2292
        %v3693 = vunpack.c.l.b16 %v2293
        %v3694 = vunpack.c.h.b16 %v2293
        %v3695 = vunpack.c.l.b16 %v2294
        %v3696 = vunpack.c.h.b16 %v2294
        %v3697 = vunpack.c.l.b16 %v2295
        %v3698 = vunpack.c.h.b16 %v2295
        %v3699 = vunpack.c.l.b16 %v2296
        %v3700 = vunpack.c.h.b16 %v2296
        %v3701 = vunpack.c.l.b16 %v2297
        %v3702 = vunpack.c.h.b16 %v2297
        %v3703 = vunpack.c.l.b16 %v2298
        %v3704 = vunpack.c.h.b16 %v2298
        %v3705 = vunpack.c.l.b16 %v2299
        %v3706 = vunpack.c.h.b16 %v2299
        %v3707 = vunpack.c.l.b16 %v2300
        %v3708 = vunpack.c.h.b16 %v2300
        %v3709 = vunpack.c.l.b16 %v2301
        %v3710 = vunpack.c.h.b16 %v2301
        %v3711 = vunpack.c.l.b16 %v2302
        %v3712 = vunpack.c.h.b16 %v2302
        %v3713 = vunpack.c.l.b16 %v2303
        %v3714 = vunpack.c.h.b16 %v2303
        %v3715 = vunpack.c.l.b16 %v2304
        %v3716 = vunpack.c.h.b16 %v2304
        %v3717 = vunpack.c.l.b16 %v2305
        %v3718 = vunpack.c.h.b16 %v2305
        %v3719 = vunpack.c.l.b16 %v2306
        %v3720 = vunpack.c.h.b16 %v2306
        %v3721 = vunpack.c.l.b16 %v2307
        %v3722 = vunpack.c.h.b16 %v2307
        %v3723 = vunpack.c.l.b16 %v2308
        %v3724 = vunpack.c.h.b16 %v2308
        %v3725 = vunpack.c.l.b16 %v2309
        %v3726 = vunpack.c.h.b16 %v2309
        %v3727 = vunpack.c.l.b16 %v2310
        %v3728 = vunpack.c.h.b16 %v2310
        %v3729 = vunpack.c.l.b16 %v2311
        %v3730 = vunpack.c.h.b16 %v2311
        %v3731 = vunpack.c.l.b16 %v2312
        %v3732 = vunpack.c.h.b16 %v2312
        %v3733 = vunpack.c.l.b16 %v2313
        %v3734 = vunpack.c.h.b16 %v2313
        %v3735 = vunpack.c.l.b16 %v2314
        %v3736 = vunpack.c.h.b16 %v2314
        %v3737 = vunpack.c.l.b16 %v2315
        %v3738 = vunpack.c.h.b16 %v2315
        %v3739 = vunpack.c.l.b16 %v2316
        %v3740 = vunpack.c.h.b16 %v2316
        %v3741 = vunpack.c.l.b16 %v2317
        %v3742 = vunpack.c.h.b16 %v2317
        %v3743 = vunpack.c.l.b16 %v2318
        %v3744 = vunpack.c.h.b16 %v2318
        %v3745 = vunpack.c.l.b16 %v2319
        %v3746 = vunpack.c.h.b16 %v2319
        %v3747 = vunpack.c.l.b16 %v2320
        %v3748 = vunpack.c.h.b16 %v2320
        %v3749 = vunpack.c.l.b16 %v2321
        %v3750 = vunpack.c.h.b16 %v2321
        %v3751 = vunpack.c.l.b16 %v2322
        %v3752 = vunpack.c.h.b16 %v2322
        %v3753 = vunpack.c.l.b16 %v2323
        %v3754 = vunpack.c.h.b16 %v2323
        %v3755 = vunpack.c.l.b16 %v2324
        %v3756 = vunpack.c.h.b16 %v2324
        %v3757 = vunpack.c.l.b16 %v2325
        %v3758 = vunpack.c.h.b16 %v2325
        %v3759 = vunpack.c.l.b16 %v2326
        %v3760 = vunpack.c.h.b16 %v2326
        %v3761 = vunpack.c.l.b16 %v2327
        %v3762 = vunpack.c.h.b16 %v2327
        %v3763 = vunpack.c.l.b16 %v2328
        %v3764 = vunpack.c.h.b16 %v2328
        %v3765 = vunpack.c.l.b16 %v2329
        %v3766 = vunpack.c.h.b16 %v2329
        %v3767 = vunpack.c.l.b16 %v2330
        %v3768 = vunpack.c.h.b16 %v2330
        %v3769 = vunpack.c.l.b16 %v2331
        %v3770 = vunpack.c.h.b16 %v2331
        %v3771 = vunpack.c.l.b16 %v2332
        %v3772 = vunpack.c.h.b16 %v2332
        %v3773 = vunpack.c.l.b16 %v2333
        %v3774 = vunpack.c.h.b16 %v2333
        %v3775 = vunpack.c.l.b16 %v2334
        %v3776 = vunpack.c.h.b16 %v2334
        %v3777 = vunpack.c.l.b16 %v2335
        %v3778 = vunpack.c.h.b16 %v2335
        %v3779 = vunpack.c.l.b16 %v2336
        %v3780 = vunpack.c.h.b16 %v2336
        %v3781 = vunpack.c.l.b16 %v2337
        %v3782 = vunpack.c.h.b16 %v2337
        %v3783 = vunpack.c.l.b16 %v2338
        %v3784 = vunpack.c.h.b16 %v2338
        %v3785 = vunpack.c.l.b16 %v2339
        %v3786 = vunpack.c.h.b16 %v2339
        %v3787 = vunpack.c.l.b16 %v2340
        %v3788 = vunpack.c.h.b16 %v2340
        %v3789 = vunpack.c.l.b16 %v2341
        %v3790 = vunpack.c.h.b16 %v2341
        %v3791 = vunpack.c.l.b16 %v2342
        %v3792 = vunpack.c.h.b16 %v2342
        %v3793 = vunpack.c.l.b16 %v2343
        %v3794 = vunpack.c.h.b16 %v2343
        %v3795 = vunpack.c.l.b16 %v2344
        %v3796 = vunpack.c.h.b16 %v2344
        %v3797 = vunpack.c.l.b16 %v2345
        %v3798 = vunpack.c.h.b16 %v2345
        %v3799 = vunpack.c.l.b16 %v2346
        %v3800 = vunpack.c.h.b16 %v2346
        %v3801 = vunpack.c.l.b16 %v2347
        %v3802 = vunpack.c.h.b16 %v2347
        %v3803 = vunpack.c.l.b16 %v2348
        %v3804 = vunpack.c.h.b16 %v2348
        %v3805 = vunpack.c.l.b16 %v2349
        %v3806 = vunpack.c.h.b16 %v2349
        %v3807 = vunpack.c.l.b16 %v2350
        %v3808 = vunpack.c.h.b16 %v2350
        %v3809 = vunpack.c.l.b16 %v2351
        %v3810 = vunpack.c.h.b16 %v2351
        %v3811 = vunpack.c.l.b16 %v2352
        %v3812 = vunpack.c.h.b16 %v2352
        %v3813 = vunpack.c.l.b16 %v2353
        %v3814 = vunpack.c.h.b16 %v2353
        %v3815 = vunpack.c.l.b16 %v2354
        %v3816 = vunpack.c.h.b16 %v2354
        %v3817 = vunpack.c.l.b16 %v2355
        %v3818 = vunpack.c.h.b16 %v2355
        %v3819 = vunpack.c.l.b16 %v2356
        %v3820 = vunpack.c.h.b16 %v2356
        %v3821 = vunpack.c.l.b16 %v2357
        %v3822 = vunpack.c.h.b16 %v2357
        %v3823 = vunpack.c.l.b16 %v2358
        %v3824 = vunpack.c.h.b16 %v2358
        %v3825 = vunpack.c.l.b16 %v2359
        %v3826 = vunpack.c.h.b16 %v2359
        %v3827 = vunpack.c.l.b16 %v2360
        %v3828 = vunpack.c.h.b16 %v2360
        %v3829 = vunpack.c.l.b16 %v2361
        %v3830 = vunpack.c.h.b16 %v2361
        %v3831 = vunpack.c.l.b16 %v2362
        %v3832 = vunpack.c.h.b16 %v2362
        %v3833 = vunpack.c.l.b16 %v2363
        %v3834 = vunpack.c.h.b16 %v2363
        %v3835 = vunpack.c.l.b16 %v2364
        %v3836 = vunpack.c.h.b16 %v2364
        %v3837 = vunpack.c.l.b16 %v2365
        %v3838 = vunpack.c.h.b16 %v2365
        %v3839 = vunpack.c.l.b16 %v2366
        %v3840 = vunpack.c.h.b16 %v2366
        %v3841 = vunpack.c.l.b16 %v2367
        %v3842 = vunpack.c.h.b16 %v2367
        %v3843 = vunpack.c.l.b16 %v2368
        %v3844 = vunpack.c.h.b16 %v2368
        %v3845 = vunpack.c.l.b16 %v2369
        %v3846 = vunpack.c.h.b16 %v2369
        %v3847 = vunpack.c.l.b16 %v2370
        %v3848 = vunpack.c.h.b16 %v2370
        %v3849 = vunpack.c.l.b16 %v2371
        %v3850 = vunpack.c.h.b16 %v2371
        %v3851 = vunpack.c.l.b16 %v2372
        %v3852 = vunpack.c.h.b16 %v2372
        %v3853 = vunpack.c.l.b16 %v2373
        %v3854 = vunpack.c.h.b16 %v2373
        %v3855 = vunpack.c.l.b16 %v2374
        %v3856 = vunpack.c.h.b16 %v2374
        %v3857 = vunpack.c.l.b16 %v2375
        %v3858 = vunpack.c.h.b16 %v2375
        %v3859 = vunpack.c.l.b16 %v2376
        %v3860 = vunpack.c.h.b16 %v2376
        %v3861 = vunpack.c.l.b16 %v2377
        %v3862 = vunpack.c.h.b16 %v2377
        %v3863 = vunpack.c.l.b16 %v2378
        %v3864 = vunpack.c.h.b16 %v2378
        %v3865 = vunpack.c.l.b16 %v2379
        %v3866 = vunpack.c.h.b16 %v2379
        %v3867 = vunpack.c.l.b16 %v2380
        %v3868 = vunpack.c.h.b16 %v2380
        %v3869 = vunpack.c.l.b16 %v2381
        %v3870 = vunpack.c.h.b16 %v2381
        %v3871 = vunpack.c.l.b16 %v2382
        %v3872 = vunpack.c.h.b16 %v2382
        %v3873 = vunpack.c.l.b16 %v2383
        %v3874 = vunpack.c.h.b16 %v2383
        %v3875 = vunpack.c.l.b16 %v2384
        %v3876 = vunpack.c.h.b16 %v2384
        %v3877 = vunpack.c.l.b16 %v2385
        %v3878 = vunpack.c.h.b16 %v2385
        %v3879 = vunpack.c.l.b16 %v2386
        %v3880 = vunpack.c.h.b16 %v2386
        %v3881 = vunpack.c.l.b16 %v2387
        %v3882 = vunpack.c.h.b16 %v2387
        %v3883 = vunpack.c.l.b16 %v2388
        %v3884 = vunpack.c.h.b16 %v2388
        %v3885 = vunpack.c.l.b16 %v2389
        %v3886 = vunpack.c.h.b16 %v2389
        %v3887 = vunpack.c.l.b16 %v2390
        %v3888 = vunpack.c.h.b16 %v2390
        %v3889 = vunpack.c.l.b16 %v2391
        %v3890 = vunpack.c.h.b16 %v2391
        %v3891 = vunpack.c.l.b16 %v2392
        %v3892 = vunpack.c.h.b16 %v2392
        %v3893 = vunpack.c.l.b16 %v2393
        %v3894 = vunpack.c.h.b16 %v2393
        %v3895 = vunpack.c.l.b16 %v2394
        %v3896 = vunpack.c.h.b16 %v2394
        %v3897 = vunpack.c.l.b16 %v2395
        %v3898 = vunpack.c.h.b16 %v2395
        %v3899 = vunpack.c.l.b16 %v2396
        %v3900 = vunpack.c.h.b16 %v2396
        %v3901 = vunpack.c.l.b16 %v2397
        %v3902 = vunpack.c.h.b16 %v2397
        %v3903 = vunpack.c.l.b16 %v2398
        %v3904 = vunpack.c.h.b16 %v2398
        %v3905 = vunpack.c.l.b16 %v2399
        %v3906 = vunpack.c.h.b16 %v2399
        %v3907 = vunpack.c.l.b16 %v2400
        %v3908 = vunpack.c.h.b16 %v2400
        %v3909 = vunpack.c.l.b16 %v2401
        %v3910 = vunpack.c.h.b16 %v2401
        %v3911 = vunpack.c.l.b16 %v2402
        %v3912 = vunpack.c.h.b16 %v2402
        %v3913 = vunpack.c.l.b16 %v2403
        %v3914 = vunpack.c.h.b16 %v2403
        %v3915 = vunpack.c.l.b16 %v2404
        %v3916 = vunpack.c.h.b16 %v2404
        %v3917 = vunpack.c.l.b16 %v2405
        %v3918 = vunpack.c.h.b16 %v2405
        %v3919 = vunpack.c.l.b16 %v2406
        %v3920 = vunpack.c.h.b16 %v2406
        %v3921 = vunpack.c.l.b16 %v2407
        %v3922 = vunpack.c.h.b16 %v2407
        %v3923 = vunpack.c.l.b16 %v2408
        %v3924 = vunpack.c.h.b16 %v2408
        %v3925 = vunpack.c.l.b16 %v2409
        %v3926 = vunpack.c.h.b16 %v2409
        %v3927 = vunpack.c.l.b16 %v2410
        %v3928 = vunpack.c.h.b16 %v2410
        %v3929 = vunpack.c.l.b16 %v2411
        %v3930 = vunpack.c.h.b16 %v2411
        %v3931 = vunpack.c.l.b16 %v2412
        %v3932 = vunpack.c.h.b16 %v2412
        %v3933 = vunpack.c.l.b16 %v2413
        %v3934 = vunpack.c.h.b16 %v2413
        %v3935 = vunpack.c.l.b16 %v2414
        %v3936 = vunpack.c.h.b16 %v2414
        %v3937 = vunpack.c.l.b16 %v2415
        %v3938 = vunpack.c.h.b16 %v2415
        %v3939 = vunpack.c.l.b16 %v2416
        %v3940 = vunpack.c.h.b16 %v2416
        %v3941 = vunpack.c.l.b16 %v2417
        %v3942 = vunpack.c.h.b16 %v2417
        %v3943 = vunpack.c.l.b16 %v2418
        %v3944 = vunpack.c.h.b16 %v2418
        %v3945 = vunpack.c.l.b16 %v2419
        %v3946 = vunpack.c.h.b16 %v2419
        %v3947 = vunpack.c.l.b16 %v2420
        %v3948 = vunpack.c.h.b16 %v2420
        %v3949 = vunpack.c.l.b16 %v2421
        %v3950 = vunpack.c.h.b16 %v2421
        %v3951 = vunpack.c.l.b16 %v2422
        %v3952 = vunpack.c.h.b16 %v2422
        %v3953 = vunpack.c.l.b16 %v2423
        %v3954 = vunpack.c.h.b16 %v2423
        %v3955 = vunpack.c.l.b16 %v2424
        %v3956 = vunpack.c.h.b16 %v2424
        %v3957 = vunpack.c.l.b16 %v2425
        %v3958 = vunpack.c.h.b16 %v2425
        %v3959 = vunpack.c.l.b16 %v2426
        %v3960 = vunpack.c.h.b16 %v2426
        %v3961 = vunpack.c.l.b16 %v2427
        %v3962 = vunpack.c.h.b16 %v2427
        %v3963 = vunpack.c.l.b16 %v2428
        %v3964 = vunpack.c.h.b16 %v2428
        %v3965 = vunpack.c.l.b16 %v2429
        %v3966 = vunpack.c.h.b16 %v2429
        %v3967 = vunpack.c.l.b16 %v2430
        %v3968 = vunpack.c.h.b16 %v2430
        %v3969 = vunpack.c.l.b16 %v2431
        %v3970 = vunpack.c.h.b16 %v2431
        %v3971 = vunpack.c.l.b16 %v2432
        %v3972 = vunpack.c.h.b16 %v2432
        %v3973 = vunpack.c.l.b16 %v2433
        %v3974 = vunpack.c.h.b16 %v2433
        %v3975 = vunpack.c.l.b16 %v2434
        %v3976 = vunpack.c.h.b16 %v2434
        %v3977 = vunpack.c.l.b16 %v2435
        %v3978 = vunpack.c.h.b16 %v2435
        %v3979 = vunpack.c.l.b16 %v2436
        %v3980 = vunpack.c.h.b16 %v2436
        %v3981 = vunpack.c.l.b16 %v2437
        %v3982 = vunpack.c.h.b16 %v2437
        %v3983 = vunpack.c.l.b16 %v2438
        %v3984 = vunpack.c.h.b16 %v2438
        %v3985 = vunpack.c.l.b16 %v2439
        %v3986 = vunpack.c.h.b16 %v2439
        %v3987 = vunpack.c.l.b16 %v2440
        %v3988 = vunpack.c.h.b16 %v2440
        %v3989 = vunpack.c.l.b16 %v2441
        %v3990 = vunpack.c.h.b16 %v2441
        %v3991 = vunpack.c.l.b16 %v2442
        %v3992 = vunpack.c.h.b16 %v2442
        %v3993 = vunpack.c.l.b16 %v2443
        %v3994 = vunpack.c.h.b16 %v2443
        %v3995 = vunpack.c.l.b16 %v2444
        %v3996 = vunpack.c.h.b16 %v2444
        %v3997 = vunpack.c.l.b16 %v2445
        %v3998 = vunpack.c.h.b16 %v2445
        %v3999 = vunpack.c.l.b16 %v2446
        %v4000 = vunpack.c.h.b16 %v2446
        %v4001 = vunpack.c.l.b16 %v2447
        %v4002 = vunpack.c.h.b16 %v2447
        %v4003 = vunpack.c.l.b16 %v2448
        %v4004 = vunpack.c.h.b16 %v2448
        %v4005 = vunpack.c.l.b16 %v2449
        %v4006 = vunpack.c.h.b16 %v2449
        %v4007 = vunpack.c.l.b16 %v2450
        %v4008 = vunpack.c.h.b16 %v2450
        %v4009 = vunpack.c.l.b16 %v2451
        %v4010 = vunpack.c.h.b16 %v2451
        %v4011 = vunpack.c.l.b16 %v2452
        %v4012 = vunpack.c.h.b16 %v2452
        %v4013 = vunpack.c.l.b16 %v2453
        %v4014 = vunpack.c.h.b16 %v2453
        %v4015 = vunpack.c.l.b16 %v2454
        %v4016 = vunpack.c.h.b16 %v2454
        %v4017 = vunpack.c.l.b16 %v2455
        %v4018 = vunpack.c.h.b16 %v2455
        %v4019 = vunpack.c.l.b16 %v2456
        %v4020 = vunpack.c.h.b16 %v2456
        %v4021 = vunpack.c.l.b16 %v2457
        %v4022 = vunpack.c.h.b16 %v2457
        %v4023 = vunpack.c.l.b16 %v2458
        %v4024 = vunpack.c.h.b16 %v2458
        %v4025 = vunpack.c.l.b16 %v2459
        %v4026 = vunpack.c.h.b16 %v2459
        %v4027 = vunpack.c.l.b16 %v2460
        %v4028 = vunpack.c.h.b16 %v2460
        %v4029 = vunpack.c.l.b16 %v2461
        %v4030 = vunpack.c.h.b16 %v2461
        %v4031 = vunpack.c.l.b16 %v2462
        %v4032 = vunpack.c.h.b16 %v2462
        %v4033 = vunpack.c.l.b16 %v2463
        %v4034 = vunpack.c.h.b16 %v2463
        %v4035 = vunpack.c.l.b16 %v2464
        %v4036 = vunpack.c.h.b16 %v2464
        %v4037 = vunpack.c.l.b16 %v2465
        %v4038 = vunpack.c.h.b16 %v2465
        %v4039 = vunpack.c.l.b16 %v2466
        %v4040 = vunpack.c.h.b16 %v2466
        %v4041 = vunpack.c.l.b16 %v2467
        %v4042 = vunpack.c.h.b16 %v2467
        %v4043 = vunpack.c.l.b16 %v2468
        %v4044 = vunpack.c.h.b16 %v2468
        %v4045 = vunpack.c.l.b16 %v2469
        %v4046 = vunpack.c.h.b16 %v2469
        %v4047 = vunpack.c.l.b16 %v2470
        %v4048 = vunpack.c.h.b16 %v2470
        %v4049 = vunpack.c.l.b16 %v2471
        %v4050 = vunpack.c.h.b16 %v2471
        %v4051 = vunpack.c.l.b16 %v2472
        %v4052 = vunpack.c.h.b16 %v2472
        %v4053 = vunpack.c.l.b16 %v2473
        %v4054 = vunpack.c.h.b16 %v2473
        %v4055 = vunpack.c.l.b16 %v2474
        %v4056 = vunpack.c.h.b16 %v2474
        %v4057 = vunpack.c.l.b16 %v2475
        %v4058 = vunpack.c.h.b16 %v2475
        %v4059 = vunpack.c.l.b16 %v2476
        %v4060 = vunpack.c.h.b16 %v2476
        %v4061 = vunpack.c.l.b16 %v2477
        %v4062 = vunpack.c.h.b16 %v2477
        %v4063 = vunpack.c.l.b16 %v2478
        %v4064 = vunpack.c.h.b16 %v2478
        %v4065 = vunpack.c.l.b16 %v2479
        %v4066 = vunpack.c.h.b16 %v2479
        %v4067 = vunpack.c.l.b16 %v2480
        %v4068 = vunpack.c.h.b16 %v2480
        %v4069 = vunpack.c.l.b16 %v2481
        %v4070 = vunpack.c.h.b16 %v2481
        %v4071 = vunpack.c.l.b16 %v2482
        %v4072 = vunpack.c.h.b16 %v2482
        %v4073 = vunpack.c.l.b16 %v2483
        %v4074 = vunpack.c.h.b16 %v2483
        %v4075 = vunpack.c.l.b16 %v2484
        %v4076 = vunpack.c.h.b16 %v2484
        %v4077 = vunpack.c.l.b16 %v2485
        %v4078 = vunpack.c.h.b16 %v2485
        %v4079 = vunpack.c.l.b16 %v2486
        %v4080 = vunpack.c.h.b16 %v2486
        %v4081 = vunpack.c.l.b16 %v2487
        %v4082 = vunpack.c.h.b16 %v2487
        %v4083 = vunpack.c.l.b16 %v2488
        %v4084 = vunpack.c.h.b16 %v2488
        %v4085 = vunpack.c.l.b16 %v2489
        %v4086 = vunpack.c.h.b16 %v2489
        %v4087 = vunpack.c.l.b16 %v2490
        %v4088 = vunpack.c.h.b16 %v2490
        %v4089 = vunpack.c.l.b16 %v2491
        %v4090 = vunpack.c.h.b16 %v2491
        %v4091 = vunpack.c.l.b16 %v2492
        %v4092 = vunpack.c.h.b16 %v2492
        %v4093 = vunpack.c.l.b16 %v2493
        %v4094 = vunpack.c.h.b16 %v2493
        %v4095 = vunpack.c.l.b16 %v2494
        %v4096 = vunpack.c.h.b16 %v2494
        %v4097 = vunpack.c.l.b16 %v2495
        %v4098 = vunpack.c.h.b16 %v2495
        %v4099 = vunpack.c.l.b16 %v2496
        %v4100 = vunpack.c.h.b16 %v2496
        %v4101 = vunpack.c.l.b16 %v2497
        %v4102 = vunpack.c.h.b16 %v2497
        %v4103 = vunpack.c.l.b16 %v2498
        %v4104 = vunpack.c.h.b16 %v2498
        %v4105 = vunpack.c.l.b16 %v2499
        %v4106 = vunpack.c.h.b16 %v2499
        %v4107 = vunpack.c.l.b16 %v2500
        %v4108 = vunpack.c.h.b16 %v2500
        %v4109 = vunpack.c.l.b16 %v2501
        %v4110 = vunpack.c.h.b16 %v2501
        %v4111 = vunpack.c.l.b16 %v2502
        %v4112 = vunpack.c.h.b16 %v2502
        %v4113 = vunpack.c.l.b16 %v2503
        %v4114 = vunpack.c.h.b16 %v2503
        %v4115 = vunpack.c.l.b16 %v2504
        %v4116 = vunpack.c.h.b16 %v2504
        %v4117 = vunpack.c.l.b16 %v2505
        %v4118 = vunpack.c.h.b16 %v2505
        %v4119 = vunpack.c.l.b16 %v2506
        %v4120 = vunpack.c.h.b16 %v2506
        %v4121 = vpack.c.b16 %v3105, %v3097
        %v4122 = vpack.c.b16 %v3106, %v3098
        %v4123 = vpack.c.b16 %v3107, %v3099
        %v4124 = vpack.c.b16 %v3108, %v3100
        %v4125 = vpack.c.b16 %v3109, %v3101
        %v4126 = vpack.c.b16 %v3110, %v3102
        %v4127 = vpack.c.b16 %v3111, %v3103
        %v4128 = vpack.c.b16 %v3112, %v3104
        %v4129 = vpack.c.b16 %v3121, %v3113
        %v4130 = vpack.c.b16 %v3122, %v3114
        %v4131 = vpack.c.b16 %v3123, %v3115
        %v4132 = vpack.c.b16 %v3124, %v3116
        %v4133 = vpack.c.b16 %v3125, %v3117
        %v4134 = vpack.c.b16 %v3126, %v3118
        %v4135 = vpack.c.b16 %v3127, %v3119
        %v4136 = vpack.c.b16 %v3128, %v3120
        %v4137 = vpack.c.b16 %v3137, %v3129
        %v4138 = vpack.c.b16 %v3138, %v3130
        %v4139 = vpack.c.b16 %v3139, %v3131
        %v4140 = vpack.c.b16 %v3140, %v3132
        %v4141 = vpack.c.b16 %v3141, %v3133
        %v4142 = vpack.c.b16 %v3142, %v3134
        %v4143 = vpack.c.b16 %v3143, %v3135
        %v4144 = vpack.c.b16 %v3144, %v3136
        %v4145 = vpack.c.b16 %v3153, %v3145
        %v4146 = vpack.c.b16 %v3154, %v3146
        %v4147 = vpack.c.b16 %v3155, %v3147
        %v4148 = vpack.c.b16 %v3156, %v3148
        %v4149 = vpack.c.b16 %v3157, %v3149
        %v4150 = vpack.c.b16 %v3158, %v3150
        %v4151 = vpack.c.b16 %v3159, %v3151
        %v4152 = vpack.c.b16 %v3160, %v3152
        %v4153 = vpack.c.b16 %v3169, %v3161
        %v4154 = vpack.c.b16 %v3170, %v3162
        %v4155 = vpack.c.b16 %v3171, %v3163
        %v4156 = vpack.c.b16 %v3172, %v3164
        %v4157 = vpack.c.b16 %v3173, %v3165
        %v4158 = vpack.c.b16 %v3174, %v3166
        %v4159 = vpack.c.b16 %v3175, %v3167
        %v4160 = vpack.c.b16 %v3176, %v3168
        %v4161 = vpack.c.b16 %v3185, %v3177
        %v4162 = vpack.c.b16 %v3186, %v3178
        %v4163 = vpack.c.b16 %v3187, %v3179
        %v4164 = vpack.c.b16 %v3188, %v3180
        %v4165 = vpack.c.b16 %v3189, %v3181
        %v4166 = vpack.c.b16 %v3190, %v3182
        %v4167 = vpack.c.b16 %v3191, %v3183
        %v4168 = vpack.c.b16 %v3192, %v3184
        %v4169 = vpack.c.b16 %v3201, %v3193
        %v4170 = vpack.c.b16 %v3202, %v3194
        %v4171 = vpack.c.b16 %v3203, %v3195
        %v4172 = vpack.c.b16 %v3204, %v3196
        %v4173 = vpack.c.b16 %v3205, %v3197
        %v4174 = vpack.c.b16 %v3206, %v3198
        %v4175 = vpack.c.b16 %v3207, %v3199
        %v4176 = vpack.c.b16 %v3208, %v3200
        %v4177 = vpack.c.b16 %v3217, %v3209
        %v4178 = vpack.c.b16 %v3218, %v3210
        %v4179 = vpack.c.b16 %v3219, %v3211
        %v4180 = vpack.c.b16 %v3220, %v3212
        %v4181 = vpack.c.b16 %v3221, %v3213
        %v4182 = vpack.c.b16 %v3222, %v3214
        %v4183 = vpack.c.b16 %v3223, %v3215
        %v4184 = vpack.c.b16 %v3224, %v3216
        %v4185 = vpack.c.b16 %v3233, %v3225
        %v4186 = vpack.c.b16 %v3234, %v3226
        %v4187 = vpack.c.b16 %v3235, %v3227
        %v4188 = vpack.c.b16 %v3236, %v3228
        %v4189 = vpack.c.b16 %v3237, %v3229
        %v4190 = vpack.c.b16 %v3238, %v3230
        %v4191 = vpack.c.b16 %v3239, %v3231
        %v4192 = vpack.c.b16 %v3240, %v3232
        %v4193 = vpack.c.b16 %v3249, %v3241
        %v4194 = vpack.c.b16 %v3250, %v3242
        %v4195 = vpack.c.b16 %v3251, %v3243
        %v4196 = vpack.c.b16 %v3252, %v3244
        %v4197 = vpack.c.b16 %v3253, %v3245
        %v4198 = vpack.c.b16 %v3254, %v3246
        %v4199 = vpack.c.b16 %v3255, %v3247
        %v4200 = vpack.c.b16 %v3256, %v3248
        %v4201 = vpack.c.b16 %v3265, %v3257
        %v4202 = vpack.c.b16 %v3266, %v3258
        %v4203 = vpack.c.b16 %v3267, %v3259
        %v4204 = vpack.c.b16 %v3268, %v3260
        %v4205 = vpack.c.b16 %v3269, %v3261
        %v4206 = vpack.c.b16 %v3270, %v3262
        %v4207 = vpack.c.b16 %v3271, %v3263
        %v4208 = vpack.c.b16 %v3272, %v3264
        %v4209 = vpack.c.b16 %v3281, %v3273
        %v4210 = vpack.c.b16 %v3282, %v3274
        %v4211 = vpack.c.b16 %v3283, %v3275
        %v4212 = vpack.c.b16 %v3284, %v3276
        %v4213 = vpack.c.b16 %v3285, %v3277
        %v4214 = vpack.c.b16 %v3286, %v3278
        %v4215 = vpack.c.b16 %v3287, %v3279
        %v4216 = vpack.c.b16 %v3288, %v3280
        %v4217 = vpack.c.b16 %v3297, %v3289
        %v4218 = vpack.c.b16 %v3298, %v3290
        %v4219 = vpack.c.b16 %v3299, %v3291
        %v4220 = vpack.c.b16 %v3300, %v3292
        %v4221 = vpack.c.b16 %v3301, %v3293
        %v4222 = vpack.c.b16 %v3302, %v3294
        %v4223 = vpack.c.b16 %v3303, %v3295
        %v4224 = vpack.c.b16 %v3304, %v3296
        %v4225 = vpack.c.b16 %v3313, %v3305
        %v4226 = vpack.c.b16 %v3314, %v3306
        %v4227 = vpack.c.b16 %v3315, %v3307
        %v4228 = vpack.c.b16 %v3316, %v3308
        %v4229 = vpack.c.b16 %v3317, %v3309
        %v4230 = vpack.c.b16 %v3318, %v3310
        %v4231 = vpack.c.b16 %v3319, %v3311
        %v4232 = vpack.c.b16 %v3320, %v3312
        %v4233 = vpack.c.b16 %v3329, %v3321
        %v4234 = vpack.c.b16 %v3330, %v3322
        %v4235 = vpack.c.b16 %v3331, %v3323
        %v4236 = vpack.c.b16 %v3332, %v3324
        %v4237 = vpack.c.b16 %v3333, %v3325
        %v4238 = vpack.c.b16 %v3334, %v3326
        %v4239 = vpack.c.b16 %v3335, %v3327
        %v4240 = vpack.c.b16 %v3336, %v3328
        %v4241 = vpack.c.b16 %v3345, %v3337
        %v4242 = vpack.c.b16 %v3346, %v3338
        %v4243 = vpack.c.b16 %v3347, %v3339
        %v4244 = vpack.c.b16 %v3348, %v3340
        %v4245 = vpack.c.b16 %v3349, %v3341
        %v4246 = vpack.c.b16 %v3350, %v3342
        %v4247 = vpack.c.b16 %v3351, %v3343
        %v4248 = vpack.c.b16 %v3352, %v3344
        %v4249 = vpack.c.b16 %v3361, %v3353
        %v4250 = vpack.c.b16 %v3362, %v3354
        %v4251 = vpack.c.b16 %v3363, %v3355
        %v4252 = vpack.c.b16 %v3364, %v3356
        %v4253 = vpack.c.b16 %v3365, %v3357
        %v4254 = vpack.c.b16 %v3366, %v3358
        %v4255 = vpack.c.b16 %v3367, %v3359
        %v4256 = vpack.c.b16 %v3368, %v3360
        %v4257 = vpack.c.b16 %v3377, %v3369
        %v4258 = vpack.c.b16 %v3378, %v3370
        %v4259 = vpack.c.b16 %v3379, %v3371
        %v4260 = vpack.c.b16 %v3380, %v3372
        %v4261 = vpack.c.b16 %v3381, %v3373
        %v4262 = vpack.c.b16 %v3382, %v3374
        %v4263 = vpack.c.b16 %v3383, %v3375
        %v4264 = vpack.c.b16 %v3384, %v3376
        %v4265 = vpack.c.b16 %v3393, %v3385
        %v4266 = vpack.c.b16 %v3394, %v3386
        %v4267 = vpack.c.b16 %v3395, %v3387
        %v4268 = vpack.c.b16 %v3396, %v3388
        %v4269 = vpack.c.b16 %v3397, %v3389
        %v4270 = vpack.c.b16 %v3398, %v3390
        %v4271 = vpack.c.b16 %v3399, %v3391
        %v4272 = vpack.c.b16 %v3400, %v3392
        %v4273 = vpack.c.b16 %v3409, %v3401
        %v4274 = vpack.c.b16 %v3410, %v3402
        %v4275 = vpack.c.b16 %v3411, %v3403
        %v4276 = vpack.c.b16 %v3412, %v3404
        %v4277 = vpack.c.b16 %v3413, %v3405
        %v4278 = vpack.c.b16 %v3414, %v3406
        %v4279 = vpack.c.b16 %v3415, %v3407
        %v4280 = vpack.c.b16 %v3416, %v3408
        %v4281 = vpack.c.b16 %v3425, %v3417
        %v4282 = vpack.c.b16 %v3426, %v3418
        %v4283 = vpack.c.b16 %v3427, %v3419
        %v4284 = vpack.c.b16 %v3428, %v3420
        %v4285 = vpack.c.b16 %v3429, %v3421
        %v4286 = vpack.c.b16 %v3430, %v3422
        %v4287 = vpack.c.b16 %v3431, %v3423
        %v4288 = vpack.c.b16 %v3432, %v3424
        %v4289 = vpack.c.b16 %v3441, %v3433
        %v4290 = vpack.c.b16 %v3442, %v3434
        %v4291 = vpack.c.b16 %v3443, %v3435
        %v4292 = vpack.c.b16 %v3444, %v3436
        %v4293 = vpack.c.b16 %v3445, %v3437
        %v4294 = vpack.c.b16 %v3446, %v3438
        %v4295 = vpack.c.b16 %v3447, %v3439
        %v4296 = vpack.c.b16 %v3448, %v3440
        %v4297 = vpack.c.b16 %v3457, %v3449
        %v4298 = vpack.c.b16 %v3458, %v3450
        %v4299 = vpack.c.b16 %v3459, %v3451
        %v4300 = vpack.c.b16 %v3460, %v3452
        %v4301 = vpack.c.b16 %v3461, %v3453
        %v4302 = vpack.c.b16 %v3462, %v3454
        %v4303 = vpack.c.b16 %v3463, %v3455
        %v4304 = vpack.c.b16 %v3464, %v3456
        %v4305 = vpack.c.b16 %v3473, %v3465
        %v4306 = vpack.c.b16 %v3474, %v3466
        %v4307 = vpack.c.b16 %v3475, %v3467
        %v4308 = vpack.c.b16 %v3476, %v3468
        %v4309 = vpack.c.b16 %v3477, %v3469
        %v4310 = vpack.c.b16 %v3478, %v3470
        %v4311 = vpack.c.b16 %v3479, %v3471
        %v4312 = vpack.c.b16 %v3480, %v3472
        %v4313 = vpack.c.b16 %v3489, %v3481
        %v4314 = vpack.c.b16 %v3490, %v3482
        %v4315 = vpack.c.b16 %v3491, %v3483
        %v4316 = vpack.c.b16 %v3492, %v3484
        %v4317 = vpack.c.b16 %v3493, %v3485
        %v4318 = vpack.c.b16 %v3494, %v3486
        %v4319 = vpack.c.b16 %v3495, %v3487
        %v4320 = vpack.c.b16 %v3496, %v3488
        %v4321 = vpack.c.b16 %v3505, %v3497
        %v4322 = vpack.c.b16 %v3506, %v3498
        %v4323 = vpack.c.b16 %v3507, %v3499
        %v4324 = vpack.c.b16 %v3508, %v3500
        %v4325 = vpack.c.b16 %v3509, %v3501
        %v4326 = vpack.c.b16 %v3510, %v3502
        %v4327 = vpack.c.b16 %v3511, %v3503
        %v4328 = vpack.c.b16 %v3512, %v3504
        %v4329 = vpack.c.b16 %v3521, %v3513
        %v4330 = vpack.c.b16 %v3522, %v3514
        %v4331 = vpack.c.b16 %v3523, %v3515
        %v4332 = vpack.c.b16 %v3524, %v3516
        %v4333 = vpack.c.b16 %v3525, %v3517
        %v4334 = vpack.c.b16 %v3526, %v3518
        %v4335 = vpack.c.b16 %v3527, %v3519
        %v4336 = vpack.c.b16 %v3528, %v3520
        %v4337 = vpack.c.b16 %v3537, %v3529
        %v4338 = vpack.c.b16 %v3538, %v3530
        %v4339 = vpack.c.b16 %v3539, %v3531
        %v4340 = vpack.c.b16 %v3540, %v3532
        %v4341 = vpack.c.b16 %v3541, %v3533
        %v4342 = vpack.c.b16 %v3542, %v3534
        %v4343 = vpack.c.b16 %v3543, %v3535
        %v4344 = vpack.c.b16 %v3544, %v3536
        %v4345 = vpack.c.b16 %v3553, %v3545
        %v4346 = vpack.c.b16 %v3554, %v3546
        %v4347 = vpack.c.b16 %v3555, %v3547
        %v4348 = vpack.c.b16 %v3556, %v3548
        %v4349 = vpack.c.b16 %v3557, %v3549
        %v4350 = vpack.c.b16 %v3558, %v3550
        %v4351 = vpack.c.b16 %v3559, %v3551
        %v4352 = vpack.c.b16 %v3560, %v3552
        %v4353 = vpack.c.b16 %v3569, %v3561
        %v4354 = vpack.c.b16 %v3570, %v3562
        %v4355 = vpack.c.b16 %v3571, %v3563
        %v4356 = vpack.c.b16 %v3572, %v3564
        %v4357 = vpack.c.b16 %v3573, %v3565
        %v4358 = vpack.c.b16 %v3574, %v3566
        %v4359 = vpack.c.b16 %v3575, %v3567
        %v4360 = vpack.c.b16 %v3576, %v3568
        %v4361 = vpack.c.b16 %v3585, %v3577
        %v4362 = vpack.c.b16 %v3586, %v3578
        %v4363 = vpack.c.b16 %v3587, %v3579
        %v4364 = vpack.c.b16 %v3588, %v3580
        %v4365 = vpack.c.b16 %v3589, %v3581
        %v4366 = vpack.c.b16 %v3590, %v3582
        %v4367 = vpack.c.b16 %v3591, %v3583
        %v4368 = vpack.c.b16 %v3592, %v3584
        %v4369 = vpack.c.b16 %v3601, %v3593
        %v4370 = vpack.c.b16 %v3602, %v3594
        %v4371 = vpack.c.b16 %v3603, %v3595
        %v4372 = vpack.c.b16 %v3604, %v3596
        %v4373 = vpack.c.b16 %v3605, %v3597
        %v4374 = vpack.c.b16 %v3606, %v3598
        %v4375 = vpack.c.b16 %v3607, %v3599
        %v4376 = vpack.c.b16 %v3608, %v3600
        %v4377 = vpack.c.b16 %v3617, %v3609
        %v4378 = vpack.c.b16 %v3618, %v3610
        %v4379 = vpack.c.b16 %v3619, %v3611
        %v4380 = vpack.c.b16 %v3620, %v3612
        %v4381 = vpack.c.b16 %v3621, %v3613
        %v4382 = vpack.c.b16 %v3622, %v3614
        %v4383 = vpack.c.b16 %v3623, %v3615
        %v4384 = vpack.c.b16 %v3624, %v3616
        %v4385 = vpack.c.b16 %v3633, %v3625
        %v4386 = vpack.c.b16 %v3634, %v3626
        %v4387 = vpack.c.b16 %v3635, %v3627
        %v4388 = vpack.c.b16 %v3636, %v3628
        %v4389 = vpack.c.b16 %v3637, %v3629
        %v4390 = vpack.c.b16 %v3638, %v3630
        %v4391 = vpack.c.b16 %v3639, %v3631
        %v4392 = vpack.c.b16 %v3640, %v3632
        %v4393 = vpack.c.b16 %v3649, %v3641
        %v4394 = vpack.c.b16 %v3650, %v3642
        %v4395 = vpack.c.b16 %v3651, %v3643
        %v4396 = vpack.c.b16 %v3652, %v3644
        %v4397 = vpack.c.b16 %v3653, %v3645
        %v4398 = vpack.c.b16 %v3654, %v3646
        %v4399 = vpack.c.b16 %v3655, %v3647
        %v4400 = vpack.c.b16 %v3656, %v3648
        %v4401 = vpack.c.b16 %v3665, %v3657
        %v4402 = vpack.c.b16 %v3666, %v3658
        %v4403 = vpack.c.b16 %v3667, %v3659
        %v4404 = vpack.c.b16 %v3668, %v3660
        %v4405 = vpack.c.b16 %v3669, %v3661
        %v4406 = vpack.c.b16 %v3670, %v3662
        %v4407 = vpack.c.b16 %v3671, %v3663
        %v4408 = vpack.c.b16 %v3672, %v3664
        %v4409 = vpack.c.b16 %v3681, %v3673
        %v4410 = vpack.c.b16 %v3682, %v3674
        %v4411 = vpack.c.b16 %v3683, %v3675
        %v4412 = vpack.c.b16 %v3684, %v3676
        %v4413 = vpack.c.b16 %v3685, %v3677
        %v4414 = vpack.c.b16 %v3686, %v3678
        %v4415 = vpack.c.b16 %v3687, %v3679
        %v4416 = vpack.c.b16 %v3688, %v3680
        %v4417 = vpack.c.b16 %v3697, %v3689
        %v4418 = vpack.c.b16 %v3698, %v3690
        %v4419 = vpack.c.b16 %v3699, %v3691
        %v4420 = vpack.c.b16 %v3700, %v3692
        %v4421 = vpack.c.b16 %v3701, %v3693
        %v4422 = vpack.c.b16 %v3702, %v3694
        %v4423 = vpack.c.b16 %v3703, %v3695
        %v4424 = vpack.c.b16 %v3704, %v3696
        %v4425 = vpack.c.b16 %v3713, %v3705
        %v4426 = vpack.c.b16 %v3714, %v3706
        %v4427 = vpack.c.b16 %v3715, %v3707
        %v4428 = vpack.c.b16 %v3716, %v3708
        %v4429 = vpack.c.b16 %v3717, %v3709
        %v4430 = vpack.c.b16 %v3718, %v3710
        %v4431 = vpack.c.b16 %v3719, %v3711
        %v4432 = vpack.c.b16 %v3720, %v3712
        %v4433 = vpack.c.b16 %v3729, %v3721
        %v4434 = vpack.c.b16 %v3730, %v3722
        %v4435 = vpack.c.b16 %v3731, %v3723
        %v4436 = vpack.c.b16 %v3732, %v3724
        %v4437 = vpack.c.b16 %v3733, %v3725
        %v4438 = vpack.c.b16 %v3734, %v3726
        %v4439 = vpack.c.b16 %v3735, %v3727
        %v4440 = vpack.c.b16 %v3736, %v3728
        %v4441 = vpack.c.b16 %v3745, %v3737
        %v4442 = vpack.c.b16 %v3746, %v3738
        %v4443 = vpack.c.b16 %v3747, %v3739
        %v4444 = vpack.c.b16 %v3748, %v3740
        %v4445 = vpack.c.b16 %v3749, %v3741
        %v4446 = vpack.c.b16 %v3750, %v3742
        %v4447 = vpack.c.b16 %v3751, %v3743
        %v4448 = vpack.c.b16 %v3752, %v3744
        %v4449 = vpack.c.b16 %v3761, %v3753
        %v4450 = vpack.c.b16 %v3762, %v3754
        %v4451 = vpack.c.b16 %v3763, %v3755
        %v4452 = vpack.c.b16 %v3764, %v3756
        %v4453 = vpack.c.b16 %v3765, %v3757
        %v4454 = vpack.c.b16 %v3766, %v3758
        %v4455 = vpack.c.b16 %v3767, %v3759
        %v4456 = vpack.c.b16 %v3768, %v3760
        %v4457 = vpack.c.b16 %v3777, %v3769
        %v4458 = vpack.c.b16 %v3778, %v3770
        %v4459 = vpack.c.b16 %v3779, %v3771
        %v4460 = vpack.c.b16 %v3780, %v3772
        %v4461 = vpack.c.b16 %v3781, %v3773
        %v4462 = vpack.c.b16 %v3782, %v3774
        %v4463 = vpack.c.b16 %v3783, %v3775
        %v4464 = vpack.c.b16 %v3784, %v3776
        %v4465 = vpack.c.b16 %v3793, %v3785
        %v4466 = vpack.c.b16 %v3794, %v3786
        %v4467 = vpack.c.b16 %v3795, %v3787
        %v4468 = vpack.c.b16 %v3796, %v3788
        %v4469 = vpack.c.b16 %v3797, %v3789
        %v4470 = vpack.c.b16 %v3798, %v3790
        %v4471 = vpack.c.b16 %v3799, %v3791
        %v4472 = vpack.c.b16 %v3800, %v3792
        %v4473 = vpack.c.b16 %v3809, %v3801
        %v4474 = vpack.c.b16 %v3810, %v3802
        %v4475 = vpack.c.b16 %v3811, %v3803
        %v4476 = vpack.c.b16 %v3812, %v3804
        %v4477 = vpack.c.b16 %v3813, %v3805
        %v4478 = vpack.c.b16 %v3814, %v3806
        %v4479 = vpack.c.b16 %v3815, %v3807
        %v4480 = vpack.c.b16 %v3816, %v3808
        %v4481 = vpack.c.b16 %v3825, %v3817
        %v4482 = vpack.c.b16 %v3826, %v3818
        %v4483 = vpack.c.b16 %v3827, %v3819
        %v4484 = vpack.c.b16 %v3828, %v3820
        %v4485 = vpack.c.b16 %v3829, %v3821
        %v4486 = vpack.c.b16 %v3830, %v3822
        %v4487 = vpack.c.b16 %v3831, %v3823
        %v4488 = vpack.c.b16 %v3832, %v3824
        %v4489 = vpack.c.b16 %v3841, %v3833
        %v4490 = vpack.c.b16 %v3842, %v3834
        %v4491 = vpack.c.b16 %v3843, %v3835
        %v4492 = vpack.c.b16 %v3844, %v3836
        %v4493 = vpack.c.b16 %v3845, %v3837
        %v4494 = vpack.c.b16 %v3846, %v3838
        %v4495 = vpack.c.b16 %v3847, %v3839
        %v4496 = vpack.c.b16 %v3848, %v3840
        %v4497 = vpack.c.b16 %v3857, %v3849
        %v4498 = vpack.c.b16 %v3858, %v3850
        %v4499 = vpack.c.b16 %v3859, %v3851
        %v4500 = vpack.c.b16 %v3860, %v3852
        %v4501 = vpack.c.b16 %v3861, %v3853
        %v4502 = vpack.c.b16 %v3862, %v3854
        %v4503 = vpack.c.b16 %v3863, %v3855
        %v4504 = vpack.c.b16 %v3864, %v3856
        %v4505 = vpack.c.b16 %v3873, %v3865
        %v4506 = vpack.c.b16 %v3874, %v3866
        %v4507 = vpack.c.b16 %v3875, %v3867
        %v4508 = vpack.c.b16 %v3876, %v3868
        %v4509 = vpack.c.b16 %v3877, %v3869
        %v4510 = vpack.c.b16 %v3878, %v3870
        %v4511 = vpack.c.b16 %v3879, %v3871
        %v4512 = vpack.c.b16 %v3880, %v3872
        %v4513 = vpack.c.b16 %v3889, %v3881
        %v4514 = vpack.c.b16 %v3890, %v3882
        %v4515 = vpack.c.b16 %v3891, %v3883
        %v4516 = vpack.c.b16 %v3892, %v3884
        %v4517 = vpack.c.b16 %v3893, %v3885
        %v4518 = vpack.c.b16 %v3894, %v3886
        %v4519 = vpack.c.b16 %v3895, %v3887
        %v4520 = vpack.c.b16 %v3896, %v3888
        %v4521 = vpack.c.b16 %v3905, %v3897
        %v4522 = vpack.c.b16 %v3906, %v3898
        %v4523 = vpack.c.b16 %v3907, %v3899
        %v4524 = vpack.c.b16 %v3908, %v3900
        %v4525 = vpack.c.b16 %v3909, %v3901
        %v4526 = vpack.c.b16 %v3910, %v3902
        %v4527 = vpack.c.b16 %v3911, %v3903
        %v4528 = vpack.c.b16 %v3912, %v3904
        %v4529 = vpack.c.b16 %v3921, %v3913
        %v4530 = vpack.c.b16 %v3922, %v3914
        %v4531 = vpack.c.b16 %v3923, %v3915
        %v4532 = vpack.c.b16 %v3924, %v3916
        %v4533 = vpack.c.b16 %v3925, %v3917
        %v4534 = vpack.c.b16 %v3926, %v3918
        %v4535 = vpack.c.b16 %v3927, %v3919
        %v4536 = vpack.c.b16 %v3928, %v3920
        %v4537 = vpack.c.b16 %v3937, %v3929
        %v4538 = vpack.c.b16 %v3938, %v3930
        %v4539 = vpack.c.b16 %v3939, %v3931
        %v4540 = vpack.c.b16 %v3940, %v3932
        %v4541 = vpack.c.b16 %v3941, %v3933
        %v4542 = vpack.c.b16 %v3942, %v3934
        %v4543 = vpack.c.b16 %v3943, %v3935
        %v4544 = vpack.c.b16 %v3944, %v3936
        %v4545 = vpack.c.b16 %v3953, %v3945
        %v4546 = vpack.c.b16 %v3954, %v3946
        %v4547 = vpack.c.b16 %v3955, %v3947
        %v4548 = vpack.c.b16 %v3956, %v3948
        %v4549 = vpack.c.b16 %v3957, %v3949
        %v4550 = vpack.c.b16 %v3958, %v3950
        %v4551 = vpack.c.b16 %v3959, %v3951
        %v4552 = vpack.c.b16 %v3960, %v3952
        %v4553 = vpack.c.b16 %v3969, %v3961
        %v4554 = vpack.c.b16 %v3970, %v3962
        %v4555 = vpack.c.b16 %v3971, %v3963
        %v4556 = vpack.c.b16 %v3972, %v3964
        %v4557 = vpack.c.b16 %v3973, %v3965
        %v4558 = vpack.c.b16 %v3974, %v3966
        %v4559 = vpack.c.b16 %v3975, %v3967
        %v4560 = vpack.c.b16 %v3976, %v3968
        %v4561 = vpack.c.b16 %v3985, %v3977
        %v4562 = vpack.c.b16 %v3986, %v3978
        %v4563 = vpack.c.b16 %v3987, %v3979
        %v4564 = vpack.c.b16 %v3988, %v3980
        %v4565 = vpack.c.b16 %v3989, %v3981
        %v4566 = vpack.c.b16 %v3990, %v3982
        %v4567 = vpack.c.b16 %v3991, %v3983
        %v4568 = vpack.c.b16 %v3992, %v3984
        %v4569 = vpack.c.b16 %v4001, %v3993
        %v4570 = vpack.c.b16 %v4002, %v3994
        %v4571 = vpack.c.b16 %v4003, %v3995
        %v4572 = vpack.c.b16 %v4004, %v3996
        %v4573 = vpack.c.b16 %v4005, %v3997
        %v4574 = vpack.c.b16 %v4006, %v3998
        %v4575 = vpack.c.b16 %v4007, %v3999
        %v4576 = vpack.c.b16 %v4008, %v4000
        %v4577 = vpack.c.b16 %v4017, %v4009
        %v4578 = vpack.c.b16 %v4018, %v4010
        %v4579 = vpack.c.b16 %v4019, %v4011
        %v4580 = vpack.c.b16 %v4020, %v4012
        %v4581 = vpack.c.b16 %v4021, %v4013
        %v4582 = vpack.c.b16 %v4022, %v4014
        %v4583 = vpack.c.b16 %v4023, %v4015
        %v4584 = vpack.c.b16 %v4024, %v4016
        %v4585 = vpack.c.b16 %v4033, %v4025
        %v4586 = vpack.c.b16 %v4034, %v4026
        %v4587 = vpack.c.b16 %v4035, %v4027
        %v4588 = vpack.c.b16 %v4036, %v4028
        %v4589 = vpack.c.b16 %v4037, %v4029
        %v4590 = vpack.c.b16 %v4038, %v4030
        %v4591 = vpack.c.b16 %v4039, %v4031
        %v4592 = vpack.c.b16 %v4040, %v4032
        %v4593 = vpack.c.b16 %v4049, %v4041
        %v4594 = vpack.c.b16 %v4050, %v4042
        %v4595 = vpack.c.b16 %v4051, %v4043
        %v4596 = vpack.c.b16 %v4052, %v4044
        %v4597 = vpack.c.b16 %v4053, %v4045
        %v4598 = vpack.c.b16 %v4054, %v4046
        %v4599 = vpack.c.b16 %v4055, %v4047
        %v4600 = vpack.c.b16 %v4056, %v4048
        %v4601 = vpack.c.b16 %v4065, %v4057
        %v4602 = vpack.c.b16 %v4066, %v4058
        %v4603 = vpack.c.b16 %v4067, %v4059
        %v4604 = vpack.c.b16 %v4068, %v4060
        %v4605 = vpack.c.b16 %v4069, %v4061
        %v4606 = vpack.c.b16 %v4070, %v4062
        %v4607 = vpack.c.b16 %v4071, %v4063
        %v4608 = vpack.c.b16 %v4072, %v4064
        %v4609 = vpack.c.b16 %v4081, %v4073
        %v4610 = vpack.c.b16 %v4082, %v4074
        %v4611 = vpack.c.b16 %v4083, %v4075
        %v4612 = vpack.c.b16 %v4084, %v4076
        %v4613 = vpack.c.b16 %v4085, %v4077
        %v4614 = vpack.c.b16 %v4086, %v4078
        %v4615 = vpack.c.b16 %v4087, %v4079
        %v4616 = vpack.c.b16 %v4088, %v4080
        %v4617 = vpack.c.b16 %v4097, %v4089
        %v4618 = vpack.c.b16 %v4098, %v4090
        %v4619 = vpack.c.b16 %v4099, %v4091
        %v4620 = vpack.c.b16 %v4100, %v4092
        %v4621 = vpack.c.b16 %v4101, %v4093
        %v4622 = vpack.c.b16 %v4102, %v4094
        %v4623 = vpack.c.b16 %v4103, %v4095
        %v4624 = vpack.c.b16 %v4104, %v4096
        %v4625 = vpack.c.b16 %v4113, %v4105
        %v4626 = vpack.c.b16 %v4114, %v4106
        %v4627 = vpack.c.b16 %v4115, %v4107
        %v4628 = vpack.c.b16 %v4116, %v4108
        %v4629 = vpack.c.b16 %v4117, %v4109
        %v4630 = vpack.c.b16 %v4118, %v4110
        %v4631 = vpack.c.b16 %v4119, %v4111
        %v4632 = vpack.c.b16 %v4120, %v4112
        %5145 = vmatprep.subr.bf16.mxu0 %v4178
        %5146 = vmatpush1.bf16.msra.mxu0 %v4177
        %5147 = vmatprep.subr.bf16.mxu0 %v4170
        %5148 = vmatpush1.bf16.msra.mxu0 %v4169
        %5149 = vmatprep.subr.bf16.mxu0 %v4162
        %5150 = vmatpush1.bf16.msra.mxu0 %v4161
        %5151 = vmatprep.subr.bf16.mxu0 %v4154
        %5152 = vmatpush1.bf16.msra.mxu0 %v4153
        %5153 = vmatprep.subr.bf16.mxu0 %v4146
        %5154 = vmatpush1.bf16.msra.mxu0 %v4145
        %5155 = vmatprep.subr.bf16.mxu0 %v4138
        %5156 = vmatpush1.bf16.msra.mxu0 %v4137
        %5157 = vmatprep.subr.bf16.mxu0 %v4130
        %5158 = vmatpush1.bf16.msra.mxu0 %v4129
        %5159 = vmatprep.subr.bf16.mxu0 %v4122
        %5160 = vmatpush1.bf16.msra.mxu0 %v4121
        %5161 = vmatprep.subr.bf16.mxu0 %v4242
        %5162 = vmatpush2.bf16.msra.mxu0 %v4241
        %5163 = vmatprep.subr.bf16.mxu0 %v4234
        %5164 = vmatpush2.bf16.msra.mxu0 %v4233
        %5165 = vmatprep.subr.bf16.mxu0 %v4226
        %5166 = vmatpush2.bf16.msra.mxu0 %v4225
        %5167 = vmatprep.subr.bf16.mxu0 %v4218
        %5168 = vmatpush2.bf16.msra.mxu0 %v4217
        %5169 = vmatprep.subr.bf16.mxu0 %v4210
        %5170 = vmatpush2.bf16.msra.mxu0 %v4209
        %5171 = vmatprep.subr.bf16.mxu0 %v4202
        %5172 = vmatpush2.bf16.msra.mxu0 %v4201
        %5173 = vmatprep.subr.bf16.mxu0 %v4194
        %5174 = vmatpush2.bf16.msra.mxu0 %v4193
        %5175 = vmatprep.subr.bf16.mxu0 %v4186
        %5176 = vmatpush2.bf16.msra.mxu0 %v4185
        %5177 = vmatprep.mubr.bf16.mxu0 %v2570
        %5178 = vmatmul.mubr.bf16.gmra.mxu0 %v2569
        %v5179 = vpop.f32.mrf.mxu0
        %v5180 = vadd.f32 %v2520, %v5179
        %v5181 = vpop.f32.mrf.mxu0
        %v5182 = vadd.f32 %v2524, %v5181
        %v5183 = vpop.f32.mrf.mxu0
        %v5184 = vpop.f32.mrf.mxu0
        %5185 = vdwg.mxu0
        %5186 = vmatprep.subr.bf16.mxu0 %v4306
        %5187 = vmatpush1.bf16.msra.mxu0 %v4305
        %5188 = vmatprep.subr.bf16.mxu0 %v4298
        %5189 = vmatpush1.bf16.msra.mxu0 %v4297
        %5190 = vmatprep.subr.bf16.mxu0 %v4290
        %5191 = vmatpush1.bf16.msra.mxu0 %v4289
        %5192 = vmatprep.subr.bf16.mxu0 %v4282
        %5193 = vmatpush1.bf16.msra.mxu0 %v4281
        %5194 = vmatprep.subr.bf16.mxu0 %v4274
        %5195 = vmatpush1.bf16.msra.mxu0 %v4273
        %5196 = vmatprep.subr.bf16.mxu0 %v4266
        %5197 = vmatpush1.bf16.msra.mxu0 %v4265
        %5198 = vmatprep.subr.bf16.mxu0 %v4258
        %5199 = vmatpush1.bf16.msra.mxu0 %v4257
        %5200 = vmatprep.subr.bf16.mxu0 %v4250
        %5201 = vmatpush1.bf16.msra.mxu0 %v4249
        %5202 = vmatprep.subr.bf16.mxu0 %v4370
        %5203 = vmatpush2.bf16.msra.mxu0 %v4369
        %5204 = vmatprep.subr.bf16.mxu0 %v4362
        %5205 = vmatpush2.bf16.msra.mxu0 %v4361
        %5206 = vmatprep.subr.bf16.mxu0 %v4354
        %5207 = vmatpush2.bf16.msra.mxu0 %v4353
        %5208 = vmatprep.subr.bf16.mxu0 %v4346
        %5209 = vmatpush2.bf16.msra.mxu0 %v4345
        %5210 = vmatprep.subr.bf16.mxu0 %v4338
        %5211 = vmatpush2.bf16.msra.mxu0 %v4337
        %5212 = vmatprep.subr.bf16.mxu0 %v4330
        %5213 = vmatpush2.bf16.msra.mxu0 %v4329
        %5214 = vmatprep.subr.bf16.mxu0 %v4322
        %5215 = vmatpush2.bf16.msra.mxu0 %v4321
        %5216 = vmatprep.subr.bf16.mxu0 %v4314
        %5217 = vmatpush2.bf16.msra.mxu0 %v4313
        %5218 = vmatprep.mubr.bf16.mxu0 %v2572
        %5219 = vmatmul.mubr.bf16.gmra.mxu0 %v2571
        %v5220 = vpop.f32.mrf.mxu0
        %v5221 = vadd.f32 %v5180, %v5220
        %v5222 = vpop.f32.mrf.mxu0
        %v5223 = vadd.f32 %v5182, %v5222
        %v5224 = vpop.f32.mrf.mxu0
        %v5225 = vpop.f32.mrf.mxu0
        %5226 = vdwg.mxu0
        %5227 = vmatprep.subr.bf16.mxu0 %v4434
        %5228 = vmatpush1.bf16.msra.mxu0 %v4433
        %5229 = vmatprep.subr.bf16.mxu0 %v4426
        %5230 = vmatpush1.bf16.msra.mxu0 %v4425
        %5231 = vmatprep.subr.bf16.mxu0 %v4418
        %5232 = vmatpush1.bf16.msra.mxu0 %v4417
        %5233 = vmatprep.subr.bf16.mxu0 %v4410
        %5234 = vmatpush1.bf16.msra.mxu0 %v4409
        %5235 = vmatprep.subr.bf16.mxu0 %v4402
        %5236 = vmatpush1.bf16.msra.mxu0 %v4401
        %5237 = vmatprep.subr.bf16.mxu0 %v4394
        %5238 = vmatpush1.bf16.msra.mxu0 %v4393
        %5239 = vmatprep.subr.bf16.mxu0 %v4386
        %5240 = vmatpush1.bf16.msra.mxu0 %v4385
        %5241 = vmatprep.subr.bf16.mxu0 %v4378
        %5242 = vmatpush1.bf16.msra.mxu0 %v4377
        %5243 = vmatprep.subr.bf16.mxu0 %v4498
        %5244 = vmatpush2.bf16.msra.mxu0 %v4497
        %5245 = vmatprep.subr.bf16.mxu0 %v4490
        %5246 = vmatpush2.bf16.msra.mxu0 %v4489
        %5247 = vmatprep.subr.bf16.mxu0 %v4482
        %5248 = vmatpush2.bf16.msra.mxu0 %v4481
        %5249 = vmatprep.subr.bf16.mxu0 %v4474
        %5250 = vmatpush2.bf16.msra.mxu0 %v4473
        %5251 = vmatprep.subr.bf16.mxu0 %v4466
        %5252 = vmatpush2.bf16.msra.mxu0 %v4465
        %5253 = vmatprep.subr.bf16.mxu0 %v4458
        %5254 = vmatpush2.bf16.msra.mxu0 %v4457
        %5255 = vmatprep.subr.bf16.mxu0 %v4450
        %5256 = vmatpush2.bf16.msra.mxu0 %v4449
        %5257 = vmatprep.subr.bf16.mxu0 %v4442
        %5258 = vmatpush2.bf16.msra.mxu0 %v4441
        %5259 = vmatprep.mubr.bf16.mxu0 %v2574
        %5260 = vmatmul.mubr.bf16.gmra.mxu0 %v2573
        %v5261 = vpop.f32.mrf.mxu0
        %v5262 = vadd.f32 %v5221, %v5261
        %v5263 = vpop.f32.mrf.mxu0
        %v5264 = vadd.f32 %v5223, %v5263
        %v5265 = vpop.f32.mrf.mxu0
        %v5266 = vpop.f32.mrf.mxu0
        %5267 = vdwg.mxu0
        %5268 = vmatprep.subr.bf16.mxu0 %v4562
        %5269 = vmatpush1.bf16.msra.mxu0 %v4561
        %5270 = vmatprep.subr.bf16.mxu0 %v4554
        %5271 = vmatpush1.bf16.msra.mxu0 %v4553
        %5272 = vmatprep.subr.bf16.mxu0 %v4546
        %5273 = vmatpush1.bf16.msra.mxu0 %v4545
        %5274 = vmatprep.subr.bf16.mxu0 %v4538
        %5275 = vmatpush1.bf16.msra.mxu0 %v4537
        %5276 = vmatprep.subr.bf16.mxu0 %v4530
        %5277 = vmatpush1.bf16.msra.mxu0 %v4529
        %5278 = vmatprep.subr.bf16.mxu0 %v4522
        %5279 = vmatpush1.bf16.msra.mxu0 %v4521
        %5280 = vmatprep.subr.bf16.mxu0 %v4514
        %5281 = vmatpush1.bf16.msra.mxu0 %v4513
        %5282 = vmatprep.subr.bf16.mxu0 %v4506
        %5283 = vmatpush1.bf16.msra.mxu0 %v4505
        %5284 = vmatprep.subr.bf16.mxu0 %v4626
        %5285 = vmatpush2.bf16.msra.mxu0 %v4625
        %5286 = vmatprep.subr.bf16.mxu0 %v4618
        %5287 = vmatpush2.bf16.msra.mxu0 %v4617
        %5288 = vmatprep.subr.bf16.mxu0 %v4610
        %5289 = vmatpush2.bf16.msra.mxu0 %v4609
        %5290 = vmatprep.subr.bf16.mxu0 %v4602
        %5291 = vmatpush2.bf16.msra.mxu0 %v4601
        %5292 = vmatprep.subr.bf16.mxu0 %v4594
        %5293 = vmatpush2.bf16.msra.mxu0 %v4593
        %5294 = vmatprep.subr.bf16.mxu0 %v4586
        %5295 = vmatpush2.bf16.msra.mxu0 %v4585
        %5296 = vmatprep.subr.bf16.mxu0 %v4578
        %5297 = vmatpush2.bf16.msra.mxu0 %v4577
        %5298 = vmatprep.subr.bf16.mxu0 %v4570
        %5299 = vmatpush2.bf16.msra.mxu0 %v4569
        %5300 = vmatprep.mubr.bf16.mxu0 %v2576
        %5301 = vmatmul.mubr.bf16.gmra.mxu0 %v2575
        %v5302 = vpop.f32.mrf.mxu0
        %v5303 = vadd.f32 %v5262, %v5302
        %v5304 = vpop.f32.mrf.mxu0
        %v5305 = vadd.f32 %v5264, %v5304
        %v5306 = vpop.f32.mrf.mxu0
        %v5307 = vpop.f32.mrf.mxu0
        %5308 = vdwg.mxu0
        %5309 = vmatprep.subr.bf16.mxu0 %v4180
        %5310 = vmatpush1.bf16.msra.mxu0 %v4179
        %5311 = vmatprep.subr.bf16.mxu0 %v4172
        %5312 = vmatpush1.bf16.msra.mxu0 %v4171
        %5313 = vmatprep.subr.bf16.mxu0 %v4164
        %5314 = vmatpush1.bf16.msra.mxu0 %v4163
        %5315 = vmatprep.subr.bf16.mxu0 %v4156
        %5316 = vmatpush1.bf16.msra.mxu0 %v4155
        %5317 = vmatprep.subr.bf16.mxu0 %v4148
        %5318 = vmatpush1.bf16.msra.mxu0 %v4147
        %5319 = vmatprep.subr.bf16.mxu0 %v4140
        %5320 = vmatpush1.bf16.msra.mxu0 %v4139
        %5321 = vmatprep.subr.bf16.mxu0 %v4132
        %5322 = vmatpush1.bf16.msra.mxu0 %v4131
        %5323 = vmatprep.subr.bf16.mxu0 %v4124
        %5324 = vmatpush1.bf16.msra.mxu0 %v4123
        %5325 = vmatprep.subr.bf16.mxu0 %v4244
        %5326 = vmatpush2.bf16.msra.mxu0 %v4243
        %5327 = vmatprep.subr.bf16.mxu0 %v4236
        %5328 = vmatpush2.bf16.msra.mxu0 %v4235
        %5329 = vmatprep.subr.bf16.mxu0 %v4228
        %5330 = vmatpush2.bf16.msra.mxu0 %v4227
        %5331 = vmatprep.subr.bf16.mxu0 %v4220
        %5332 = vmatpush2.bf16.msra.mxu0 %v4219
        %5333 = vmatprep.subr.bf16.mxu0 %v4212
        %5334 = vmatpush2.bf16.msra.mxu0 %v4211
        %5335 = vmatprep.subr.bf16.mxu0 %v4204
        %5336 = vmatpush2.bf16.msra.mxu0 %v4203
        %5337 = vmatprep.subr.bf16.mxu0 %v4196
        %5338 = vmatpush2.bf16.msra.mxu0 %v4195
        %5339 = vmatprep.subr.bf16.mxu0 %v4188
        %5340 = vmatpush2.bf16.msra.mxu0 %v4187
        %5341 = vmatprep.mubr.bf16.mxu0 %v2570
        %5342 = vmatmul.mubr.bf16.gmra.mxu0 %v2569
        %v5343 = vpop.f32.mrf.mxu0
        %v5344 = vadd.f32 %v2528, %v5343
        %v5345 = vpop.f32.mrf.mxu0
        %v5346 = vadd.f32 %v2532, %v5345
        %v5347 = vpop.f32.mrf.mxu0
        %v5348 = vpop.f32.mrf.mxu0
        %5349 = vdwg.mxu0
        %5350 = vmatprep.subr.bf16.mxu0 %v4308
        %5351 = vmatpush1.bf16.msra.mxu0 %v4307
        %5352 = vmatprep.subr.bf16.mxu0 %v4300
        %5353 = vmatpush1.bf16.msra.mxu0 %v4299
        %5354 = vmatprep.subr.bf16.mxu0 %v4292
        %5355 = vmatpush1.bf16.msra.mxu0 %v4291
        %5356 = vmatprep.subr.bf16.mxu0 %v4284
        %5357 = vmatpush1.bf16.msra.mxu0 %v4283
        %5358 = vmatprep.subr.bf16.mxu0 %v4276
        %5359 = vmatpush1.bf16.msra.mxu0 %v4275
        %5360 = vmatprep.subr.bf16.mxu0 %v4268
        %5361 = vmatpush1.bf16.msra.mxu0 %v4267
        %5362 = vmatprep.subr.bf16.mxu0 %v4260
        %5363 = vmatpush1.bf16.msra.mxu0 %v4259
        %5364 = vmatprep.subr.bf16.mxu0 %v4252
        %5365 = vmatpush1.bf16.msra.mxu0 %v4251
        %5366 = vmatprep.subr.bf16.mxu0 %v4372
        %5367 = vmatpush2.bf16.msra.mxu0 %v4371
        %5368 = vmatprep.subr.bf16.mxu0 %v4364
        %5369 = vmatpush2.bf16.msra.mxu0 %v4363
        %5370 = vmatprep.subr.bf16.mxu0 %v4356
        %5371 = vmatpush2.bf16.msra.mxu0 %v4355
        %5372 = vmatprep.subr.bf16.mxu0 %v4348
        %5373 = vmatpush2.bf16.msra.mxu0 %v4347
        %5374 = vmatprep.subr.bf16.mxu0 %v4340
        %5375 = vmatpush2.bf16.msra.mxu0 %v4339
        %5376 = vmatprep.subr.bf16.mxu0 %v4332
        %5377 = vmatpush2.bf16.msra.mxu0 %v4331
        %5378 = vmatprep.subr.bf16.mxu0 %v4324
        %5379 = vmatpush2.bf16.msra.mxu0 %v4323
        %5380 = vmatprep.subr.bf16.mxu0 %v4316
        %5381 = vmatpush2.bf16.msra.mxu0 %v4315
        %5382 = vmatprep.mubr.bf16.mxu0 %v2572
        %5383 = vmatmul.mubr.bf16.gmra.mxu0 %v2571
        %v5384 = vpop.f32.mrf.mxu0
        %v5385 = vadd.f32 %v5344, %v5384
        %v5386 = vpop.f32.mrf.mxu0
        %v5387 = vadd.f32 %v5346, %v5386
        %v5388 = vpop.f32.mrf.mxu0
        %v5389 = vpop.f32.mrf.mxu0
        %5390 = vdwg.mxu0
        %5391 = vmatprep.subr.bf16.mxu0 %v4436
        %5392 = vmatpush1.bf16.msra.mxu0 %v4435
        %5393 = vmatprep.subr.bf16.mxu0 %v4428
        %5394 = vmatpush1.bf16.msra.mxu0 %v4427
        %5395 = vmatprep.subr.bf16.mxu0 %v4420
        %5396 = vmatpush1.bf16.msra.mxu0 %v4419
        %5397 = vmatprep.subr.bf16.mxu0 %v4412
        %5398 = vmatpush1.bf16.msra.mxu0 %v4411
        %5399 = vmatprep.subr.bf16.mxu0 %v4404
        %5400 = vmatpush1.bf16.msra.mxu0 %v4403
        %5401 = vmatprep.subr.bf16.mxu0 %v4396
        %5402 = vmatpush1.bf16.msra.mxu0 %v4395
        %5403 = vmatprep.subr.bf16.mxu0 %v4388
        %5404 = vmatpush1.bf16.msra.mxu0 %v4387
        %5405 = vmatprep.subr.bf16.mxu0 %v4380
        %5406 = vmatpush1.bf16.msra.mxu0 %v4379
        %5407 = vmatprep.subr.bf16.mxu0 %v4500
        %5408 = vmatpush2.bf16.msra.mxu0 %v4499
        %5409 = vmatprep.subr.bf16.mxu0 %v4492
        %5410 = vmatpush2.bf16.msra.mxu0 %v4491
        %5411 = vmatprep.subr.bf16.mxu0 %v4484
        %5412 = vmatpush2.bf16.msra.mxu0 %v4483
        %5413 = vmatprep.subr.bf16.mxu0 %v4476
        %5414 = vmatpush2.bf16.msra.mxu0 %v4475
        %5415 = vmatprep.subr.bf16.mxu0 %v4468
        %5416 = vmatpush2.bf16.msra.mxu0 %v4467
        %5417 = vmatprep.subr.bf16.mxu0 %v4460
        %5418 = vmatpush2.bf16.msra.mxu0 %v4459
        %5419 = vmatprep.subr.bf16.mxu0 %v4452
        %5420 = vmatpush2.bf16.msra.mxu0 %v4451
        %5421 = vmatprep.subr.bf16.mxu0 %v4444
        %5422 = vmatpush2.bf16.msra.mxu0 %v4443
        %5423 = vmatprep.mubr.bf16.mxu0 %v2574
        %5424 = vmatmul.mubr.bf16.gmra.mxu0 %v2573
        %v5425 = vpop.f32.mrf.mxu0
        %v5426 = vadd.f32 %v5385, %v5425
        %v5427 = vpop.f32.mrf.mxu0
        %v5428 = vadd.f32 %v5387, %v5427
        %v5429 = vpop.f32.mrf.mxu0
        %v5430 = vpop.f32.mrf.mxu0
        %5431 = vdwg.mxu0
        %5432 = vmatprep.subr.bf16.mxu0 %v4564
        %5433 = vmatpush1.bf16.msra.mxu0 %v4563
        %5434 = vmatprep.subr.bf16.mxu0 %v4556
        %5435 = vmatpush1.bf16.msra.mxu0 %v4555
        %5436 = vmatprep.subr.bf16.mxu0 %v4548
        %5437 = vmatpush1.bf16.msra.mxu0 %v4547
        %5438 = vmatprep.subr.bf16.mxu0 %v4540
        %5439 = vmatpush1.bf16.msra.mxu0 %v4539
        %5440 = vmatprep.subr.bf16.mxu0 %v4532
        %5441 = vmatpush1.bf16.msra.mxu0 %v4531
        %5442 = vmatprep.subr.bf16.mxu0 %v4524
        %5443 = vmatpush1.bf16.msra.mxu0 %v4523
        %5444 = vmatprep.subr.bf16.mxu0 %v4516
        %5445 = vmatpush1.bf16.msra.mxu0 %v4515
        %5446 = vmatprep.subr.bf16.mxu0 %v4508
        %5447 = vmatpush1.bf16.msra.mxu0 %v4507
        %5448 = vmatprep.subr.bf16.mxu0 %v4628
        %5449 = vmatpush2.bf16.msra.mxu0 %v4627
        %5450 = vmatprep.subr.bf16.mxu0 %v4620
        %5451 = vmatpush2.bf16.msra.mxu0 %v4619
        %5452 = vmatprep.subr.bf16.mxu0 %v4612
        %5453 = vmatpush2.bf16.msra.mxu0 %v4611
        %5454 = vmatprep.subr.bf16.mxu0 %v4604
        %5455 = vmatpush2.bf16.msra.mxu0 %v4603
        %5456 = vmatprep.subr.bf16.mxu0 %v4596
        %5457 = vmatpush2.bf16.msra.mxu0 %v4595
        %5458 = vmatprep.subr.bf16.mxu0 %v4588
        %5459 = vmatpush2.bf16.msra.mxu0 %v4587
        %5460 = vmatprep.subr.bf16.mxu0 %v4580
        %5461 = vmatpush2.bf16.msra.mxu0 %v4579
        %5462 = vmatprep.subr.bf16.mxu0 %v4572
        %5463 = vmatpush2.bf16.msra.mxu0 %v4571
        %5464 = vmatprep.mubr.bf16.mxu0 %v2576
        %5465 = vmatmul.mubr.bf16.gmra.mxu0 %v2575
        %v5466 = vpop.f32.mrf.mxu0
        %v5467 = vadd.f32 %v5426, %v5466
        %v5468 = vpop.f32.mrf.mxu0
        %v5469 = vadd.f32 %v5428, %v5468
        %v5470 = vpop.f32.mrf.mxu0
        %v5471 = vpop.f32.mrf.mxu0
        %5472 = vdwg.mxu0
        %5473 = vmatprep.subr.bf16.mxu0 %v4182
        %5474 = vmatpush1.bf16.msra.mxu0 %v4181
        %5475 = vmatprep.subr.bf16.mxu0 %v4174
        %5476 = vmatpush1.bf16.msra.mxu0 %v4173
        %5477 = vmatprep.subr.bf16.mxu0 %v4166
        %5478 = vmatpush1.bf16.msra.mxu0 %v4165
        %5479 = vmatprep.subr.bf16.mxu0 %v4158
        %5480 = vmatpush1.bf16.msra.mxu0 %v4157
        %5481 = vmatprep.subr.bf16.mxu0 %v4150
        %5482 = vmatpush1.bf16.msra.mxu0 %v4149
        %5483 = vmatprep.subr.bf16.mxu0 %v4142
        %5484 = vmatpush1.bf16.msra.mxu0 %v4141
        %5485 = vmatprep.subr.bf16.mxu0 %v4134
        %5486 = vmatpush1.bf16.msra.mxu0 %v4133
        %5487 = vmatprep.subr.bf16.mxu0 %v4126
        %5488 = vmatpush1.bf16.msra.mxu0 %v4125
        %5489 = vmatprep.subr.bf16.mxu0 %v4246
        %5490 = vmatpush2.bf16.msra.mxu0 %v4245
        %5491 = vmatprep.subr.bf16.mxu0 %v4238
        %5492 = vmatpush2.bf16.msra.mxu0 %v4237
        %5493 = vmatprep.subr.bf16.mxu0 %v4230
        %5494 = vmatpush2.bf16.msra.mxu0 %v4229
        %5495 = vmatprep.subr.bf16.mxu0 %v4222
        %5496 = vmatpush2.bf16.msra.mxu0 %v4221
        %5497 = vmatprep.subr.bf16.mxu0 %v4214
        %5498 = vmatpush2.bf16.msra.mxu0 %v4213
        %5499 = vmatprep.subr.bf16.mxu0 %v4206
        %5500 = vmatpush2.bf16.msra.mxu0 %v4205
        %5501 = vmatprep.subr.bf16.mxu0 %v4198
        %5502 = vmatpush2.bf16.msra.mxu0 %v4197
        %5503 = vmatprep.subr.bf16.mxu0 %v4190
        %5504 = vmatpush2.bf16.msra.mxu0 %v4189
        %5505 = vmatprep.mubr.bf16.mxu0 %v2570
        %5506 = vmatmul.mubr.bf16.gmra.mxu0 %v2569
        %v5507 = vpop.f32.mrf.mxu0
        %v5508 = vadd.f32 %v2536, %v5507
        %v5509 = vpop.f32.mrf.mxu0
        %v5510 = vadd.f32 %v2540, %v5509
        %v5511 = vpop.f32.mrf.mxu0
        %v5512 = vpop.f32.mrf.mxu0
        %5513 = vdwg.mxu0
        %5514 = vmatprep.subr.bf16.mxu0 %v4310
        %5515 = vmatpush1.bf16.msra.mxu0 %v4309
        %5516 = vmatprep.subr.bf16.mxu0 %v4302
        %5517 = vmatpush1.bf16.msra.mxu0 %v4301
        %5518 = vmatprep.subr.bf16.mxu0 %v4294
        %5519 = vmatpush1.bf16.msra.mxu0 %v4293
        %5520 = vmatprep.subr.bf16.mxu0 %v4286
        %5521 = vmatpush1.bf16.msra.mxu0 %v4285
        %5522 = vmatprep.subr.bf16.mxu0 %v4278
        %5523 = vmatpush1.bf16.msra.mxu0 %v4277
        %5524 = vmatprep.subr.bf16.mxu0 %v4270
        %5525 = vmatpush1.bf16.msra.mxu0 %v4269
        %5526 = vmatprep.subr.bf16.mxu0 %v4262
        %5527 = vmatpush1.bf16.msra.mxu0 %v4261
        %5528 = vmatprep.subr.bf16.mxu0 %v4254
        %5529 = vmatpush1.bf16.msra.mxu0 %v4253
        %5530 = vmatprep.subr.bf16.mxu0 %v4374
        %5531 = vmatpush2.bf16.msra.mxu0 %v4373
        %5532 = vmatprep.subr.bf16.mxu0 %v4366
        %5533 = vmatpush2.bf16.msra.mxu0 %v4365
        %5534 = vmatprep.subr.bf16.mxu0 %v4358
        %5535 = vmatpush2.bf16.msra.mxu0 %v4357
        %5536 = vmatprep.subr.bf16.mxu0 %v4350
        %5537 = vmatpush2.bf16.msra.mxu0 %v4349
        %5538 = vmatprep.subr.bf16.mxu0 %v4342
        %5539 = vmatpush2.bf16.msra.mxu0 %v4341
        %5540 = vmatprep.subr.bf16.mxu0 %v4334
        %5541 = vmatpush2.bf16.msra.mxu0 %v4333
        %5542 = vmatprep.subr.bf16.mxu0 %v4326
        %5543 = vmatpush2.bf16.msra.mxu0 %v4325
        %5544 = vmatprep.subr.bf16.mxu0 %v4318
        %5545 = vmatpush2.bf16.msra.mxu0 %v4317
        %5546 = vmatprep.mubr.bf16.mxu0 %v2572
        %5547 = vmatmul.mubr.bf16.gmra.mxu0 %v2571
        %v5548 = vpop.f32.mrf.mxu0
        %v5549 = vadd.f32 %v5508, %v5548
        %v5550 = vpop.f32.mrf.mxu0
        %v5551 = vadd.f32 %v5510, %v5550
        %v5552 = vpop.f32.mrf.mxu0
        %v5553 = vpop.f32.mrf.mxu0
        %5554 = vdwg.mxu0
        %5555 = vmatprep.subr.bf16.mxu0 %v4438
        %5556 = vmatpush1.bf16.msra.mxu0 %v4437
        %5557 = vmatprep.subr.bf16.mxu0 %v4430
        %5558 = vmatpush1.bf16.msra.mxu0 %v4429
        %5559 = vmatprep.subr.bf16.mxu0 %v4422
        %5560 = vmatpush1.bf16.msra.mxu0 %v4421
        %5561 = vmatprep.subr.bf16.mxu0 %v4414
        %5562 = vmatpush1.bf16.msra.mxu0 %v4413
        %5563 = vmatprep.subr.bf16.mxu0 %v4406
        %5564 = vmatpush1.bf16.msra.mxu0 %v4405
        %5565 = vmatprep.subr.bf16.mxu0 %v4398
        %5566 = vmatpush1.bf16.msra.mxu0 %v4397
        %5567 = vmatprep.subr.bf16.mxu0 %v4390
        %5568 = vmatpush1.bf16.msra.mxu0 %v4389
        %5569 = vmatprep.subr.bf16.mxu0 %v4382
        %5570 = vmatpush1.bf16.msra.mxu0 %v4381
        %5571 = vmatprep.subr.bf16.mxu0 %v4502
        %5572 = vmatpush2.bf16.msra.mxu0 %v4501
        %5573 = vmatprep.subr.bf16.mxu0 %v4494
        %5574 = vmatpush2.bf16.msra.mxu0 %v4493
        %5575 = vmatprep.subr.bf16.mxu0 %v4486
        %5576 = vmatpush2.bf16.msra.mxu0 %v4485
        %5577 = vmatprep.subr.bf16.mxu0 %v4478
        %5578 = vmatpush2.bf16.msra.mxu0 %v4477
        %5579 = vmatprep.subr.bf16.mxu0 %v4470
        %5580 = vmatpush2.bf16.msra.mxu0 %v4469
        %5581 = vmatprep.subr.bf16.mxu0 %v4462
        %5582 = vmatpush2.bf16.msra.mxu0 %v4461
        %5583 = vmatprep.subr.bf16.mxu0 %v4454
        %5584 = vmatpush2.bf16.msra.mxu0 %v4453
        %5585 = vmatprep.subr.bf16.mxu0 %v4446
        %5586 = vmatpush2.bf16.msra.mxu0 %v4445
        %5587 = vmatprep.mubr.bf16.mxu0 %v2574
        %5588 = vmatmul.mubr.bf16.gmra.mxu0 %v2573
        %v5589 = vpop.f32.mrf.mxu0
        %v5590 = vadd.f32 %v5549, %v5589
        %v5591 = vpop.f32.mrf.mxu0
        %v5592 = vadd.f32 %v5551, %v5591
        %v5593 = vpop.f32.mrf.mxu0
        %v5594 = vpop.f32.mrf.mxu0
        %5595 = vdwg.mxu0
        %5596 = vmatprep.subr.bf16.mxu0 %v4566
        %5597 = vmatpush1.bf16.msra.mxu0 %v4565
        %5598 = vmatprep.subr.bf16.mxu0 %v4558
        %5599 = vmatpush1.bf16.msra.mxu0 %v4557
        %5600 = vmatprep.subr.bf16.mxu0 %v4550
        %5601 = vmatpush1.bf16.msra.mxu0 %v4549
        %5602 = vmatprep.subr.bf16.mxu0 %v4542
        %5603 = vmatpush1.bf16.msra.mxu0 %v4541
        %5604 = vmatprep.subr.bf16.mxu0 %v4534
        %5605 = vmatpush1.bf16.msra.mxu0 %v4533
        %5606 = vmatprep.subr.bf16.mxu0 %v4526
        %5607 = vmatpush1.bf16.msra.mxu0 %v4525
        %5608 = vmatprep.subr.bf16.mxu0 %v4518
        %5609 = vmatpush1.bf16.msra.mxu0 %v4517
        %5610 = vmatprep.subr.bf16.mxu0 %v4510
        %5611 = vmatpush1.bf16.msra.mxu0 %v4509
        %5612 = vmatprep.subr.bf16.mxu0 %v4630
        %5613 = vmatpush2.bf16.msra.mxu0 %v4629
        %5614 = vmatprep.subr.bf16.mxu0 %v4622
        %5615 = vmatpush2.bf16.msra.mxu0 %v4621
        %5616 = vmatprep.subr.bf16.mxu0 %v4614
        %5617 = vmatpush2.bf16.msra.mxu0 %v4613
        %5618 = vmatprep.subr.bf16.mxu0 %v4606
        %5619 = vmatpush2.bf16.msra.mxu0 %v4605
        %5620 = vmatprep.subr.bf16.mxu0 %v4598
        %5621 = vmatpush2.bf16.msra.mxu0 %v4597
        %5622 = vmatprep.subr.bf16.mxu0 %v4590
        %5623 = vmatpush2.bf16.msra.mxu0 %v4589
        %5624 = vmatprep.subr.bf16.mxu0 %v4582
        %5625 = vmatpush2.bf16.msra.mxu0 %v4581
        %5626 = vmatprep.subr.bf16.mxu0 %v4574
        %5627 = vmatpush2.bf16.msra.mxu0 %v4573
        %5628 = vmatprep.mubr.bf16.mxu0 %v2576
        %5629 = vmatmul.mubr.bf16.gmra.mxu0 %v2575
        %v5630 = vpop.f32.mrf.mxu0
        %v5631 = vadd.f32 %v5590, %v5630
        %v5632 = vpop.f32.mrf.mxu0
        %v5633 = vadd.f32 %v5592, %v5632
        %v5634 = vpop.f32.mrf.mxu0
        %v5635 = vpop.f32.mrf.mxu0
        %5636 = vdwg.mxu0
        %5637 = vmatprep.subr.bf16.mxu0 %v4184
        %5638 = vmatpush1.bf16.msra.mxu0 %v4183
        %5639 = vmatprep.subr.bf16.mxu0 %v4176
        %5640 = vmatpush1.bf16.msra.mxu0 %v4175
        %5641 = vmatprep.subr.bf16.mxu0 %v4168
        %5642 = vmatpush1.bf16.msra.mxu0 %v4167
        %5643 = vmatprep.subr.bf16.mxu0 %v4160
        %5644 = vmatpush1.bf16.msra.mxu0 %v4159
        %5645 = vmatprep.subr.bf16.mxu0 %v4152
        %5646 = vmatpush1.bf16.msra.mxu0 %v4151
        %5647 = vmatprep.subr.bf16.mxu0 %v4144
        %5648 = vmatpush1.bf16.msra.mxu0 %v4143
        %5649 = vmatprep.subr.bf16.mxu0 %v4136
        %5650 = vmatpush1.bf16.msra.mxu0 %v4135
        %5651 = vmatprep.subr.bf16.mxu0 %v4128
        %5652 = vmatpush1.bf16.msra.mxu0 %v4127
        %5653 = vmatprep.subr.bf16.mxu0 %v4248
        %5654 = vmatpush2.bf16.msra.mxu0 %v4247
        %5655 = vmatprep.subr.bf16.mxu0 %v4240
        %5656 = vmatpush2.bf16.msra.mxu0 %v4239
        %5657 = vmatprep.subr.bf16.mxu0 %v4232
        %5658 = vmatpush2.bf16.msra.mxu0 %v4231
        %5659 = vmatprep.subr.bf16.mxu0 %v4224
        %5660 = vmatpush2.bf16.msra.mxu0 %v4223
        %5661 = vmatprep.subr.bf16.mxu0 %v4216
        %5662 = vmatpush2.bf16.msra.mxu0 %v4215
        %5663 = vmatprep.subr.bf16.mxu0 %v4208
        %5664 = vmatpush2.bf16.msra.mxu0 %v4207
        %5665 = vmatprep.subr.bf16.mxu0 %v4200
        %5666 = vmatpush2.bf16.msra.mxu0 %v4199
        %5667 = vmatprep.subr.bf16.mxu0 %v4192
        %5668 = vmatpush2.bf16.msra.mxu0 %v4191
        %5669 = vmatprep.mubr.bf16.mxu0 %v2570
        %5670 = vmatmul.mubr.bf16.gmra.mxu0 %v2569
        %v5671 = vpop.f32.mrf.mxu0
        %v5672 = vadd.f32 %v2544, %v5671
        %v5673 = vpop.f32.mrf.mxu0
        %v5674 = vadd.f32 %v2548, %v5673
        %v5675 = vpop.f32.mrf.mxu0
        %v5676 = vpop.f32.mrf.mxu0
        %5677 = vdwg.mxu0
        %5678 = vmatprep.subr.bf16.mxu0 %v4312
        %5679 = vmatpush1.bf16.msra.mxu0 %v4311
        %5680 = vmatprep.subr.bf16.mxu0 %v4304
        %5681 = vmatpush1.bf16.msra.mxu0 %v4303
        %5682 = vmatprep.subr.bf16.mxu0 %v4296
        %5683 = vmatpush1.bf16.msra.mxu0 %v4295
        %5684 = vmatprep.subr.bf16.mxu0 %v4288
        %5685 = vmatpush1.bf16.msra.mxu0 %v4287
        %5686 = vmatprep.subr.bf16.mxu0 %v4280
        %5687 = vmatpush1.bf16.msra.mxu0 %v4279
        %5688 = vmatprep.subr.bf16.mxu0 %v4272
        %5689 = vmatpush1.bf16.msra.mxu0 %v4271
        %5690 = vmatprep.subr.bf16.mxu0 %v4264
        %5691 = vmatpush1.bf16.msra.mxu0 %v4263
        %5692 = vmatprep.subr.bf16.mxu0 %v4256
        %5693 = vmatpush1.bf16.msra.mxu0 %v4255
        %5694 = vmatprep.subr.bf16.mxu0 %v4376
        %5695 = vmatpush2.bf16.msra.mxu0 %v4375
        %5696 = vmatprep.subr.bf16.mxu0 %v4368
        %5697 = vmatpush2.bf16.msra.mxu0 %v4367
        %5698 = vmatprep.subr.bf16.mxu0 %v4360
        %5699 = vmatpush2.bf16.msra.mxu0 %v4359
        %5700 = vmatprep.subr.bf16.mxu0 %v4352
        %5701 = vmatpush2.bf16.msra.mxu0 %v4351
        %5702 = vmatprep.subr.bf16.mxu0 %v4344
        %5703 = vmatpush2.bf16.msra.mxu0 %v4343
        %5704 = vmatprep.subr.bf16.mxu0 %v4336
        %5705 = vmatpush2.bf16.msra.mxu0 %v4335
        %5706 = vmatprep.subr.bf16.mxu0 %v4328
        %5707 = vmatpush2.bf16.msra.mxu0 %v4327
        %5708 = vmatprep.subr.bf16.mxu0 %v4320
        %5709 = vmatpush2.bf16.msra.mxu0 %v4319
        %5710 = vmatprep.mubr.bf16.mxu0 %v2572
        %5711 = vmatmul.mubr.bf16.gmra.mxu0 %v2571
        %v5712 = vpop.f32.mrf.mxu0
        %v5713 = vadd.f32 %v5672, %v5712
        %v5714 = vpop.f32.mrf.mxu0
        %v5715 = vadd.f32 %v5674, %v5714
        %v5716 = vpop.f32.mrf.mxu0
        %v5717 = vpop.f32.mrf.mxu0
        %5718 = vdwg.mxu0
        %5719 = vmatprep.subr.bf16.mxu0 %v4440
        %5720 = vmatpush1.bf16.msra.mxu0 %v4439
        %5721 = vmatprep.subr.bf16.mxu0 %v4432
        %5722 = vmatpush1.bf16.msra.mxu0 %v4431
        %5723 = vmatprep.subr.bf16.mxu0 %v4424
        %5724 = vmatpush1.bf16.msra.mxu0 %v4423
        %5725 = vmatprep.subr.bf16.mxu0 %v4416
        %5726 = vmatpush1.bf16.msra.mxu0 %v4415
        %5727 = vmatprep.subr.bf16.mxu0 %v4408
        %5728 = vmatpush1.bf16.msra.mxu0 %v4407
        %5729 = vmatprep.subr.bf16.mxu0 %v4400
        %5730 = vmatpush1.bf16.msra.mxu0 %v4399
        %5731 = vmatprep.subr.bf16.mxu0 %v4392
        %5732 = vmatpush1.bf16.msra.mxu0 %v4391
        %5733 = vmatprep.subr.bf16.mxu0 %v4384
        %5734 = vmatpush1.bf16.msra.mxu0 %v4383
        %5735 = vmatprep.subr.bf16.mxu0 %v4504
        %5736 = vmatpush2.bf16.msra.mxu0 %v4503
        %5737 = vmatprep.subr.bf16.mxu0 %v4496
        %5738 = vmatpush2.bf16.msra.mxu0 %v4495
        %5739 = vmatprep.subr.bf16.mxu0 %v4488
        %5740 = vmatpush2.bf16.msra.mxu0 %v4487
        %5741 = vmatprep.subr.bf16.mxu0 %v4480
        %5742 = vmatpush2.bf16.msra.mxu0 %v4479
        %5743 = vmatprep.subr.bf16.mxu0 %v4472
        %5744 = vmatpush2.bf16.msra.mxu0 %v4471
        %5745 = vmatprep.subr.bf16.mxu0 %v4464
        %5746 = vmatpush2.bf16.msra.mxu0 %v4463
        %5747 = vmatprep.subr.bf16.mxu0 %v4456
        %5748 = vmatpush2.bf16.msra.mxu0 %v4455
        %5749 = vmatprep.subr.bf16.mxu0 %v4448
        %5750 = vmatpush2.bf16.msra.mxu0 %v4447
        %5751 = vmatprep.mubr.bf16.mxu0 %v2574
        %5752 = vmatmul.mubr.bf16.gmra.mxu0 %v2573
        %v5753 = vpop.f32.mrf.mxu0
        %v5754 = vadd.f32 %v5713, %v5753
        %v5755 = vpop.f32.mrf.mxu0
        %v5756 = vadd.f32 %v5715, %v5755
        %v5757 = vpop.f32.mrf.mxu0
        %v5758 = vpop.f32.mrf.mxu0
        %5759 = vdwg.mxu0
        %5760 = vmatprep.subr.bf16.mxu0 %v4568
        %5761 = vmatpush1.bf16.msra.mxu0 %v4567
        %5762 = vmatprep.subr.bf16.mxu0 %v4560
        %5763 = vmatpush1.bf16.msra.mxu0 %v4559
        %5764 = vmatprep.subr.bf16.mxu0 %v4552
        %5765 = vmatpush1.bf16.msra.mxu0 %v4551
        %5766 = vmatprep.subr.bf16.mxu0 %v4544
        %5767 = vmatpush1.bf16.msra.mxu0 %v4543
        %5768 = vmatprep.subr.bf16.mxu0 %v4536
        %5769 = vmatpush1.bf16.msra.mxu0 %v4535
        %5770 = vmatprep.subr.bf16.mxu0 %v4528
        %5771 = vmatpush1.bf16.msra.mxu0 %v4527
        %5772 = vmatprep.subr.bf16.mxu0 %v4520
        %5773 = vmatpush1.bf16.msra.mxu0 %v4519
        %5774 = vmatprep.subr.bf16.mxu0 %v4512
        %5775 = vmatpush1.bf16.msra.mxu0 %v4511
        %5776 = vmatprep.subr.bf16.mxu0 %v4632
        %5777 = vmatpush2.bf16.msra.mxu0 %v4631
        %5778 = vmatprep.subr.bf16.mxu0 %v4624
        %5779 = vmatpush2.bf16.msra.mxu0 %v4623
        %5780 = vmatprep.subr.bf16.mxu0 %v4616
        %5781 = vmatpush2.bf16.msra.mxu0 %v4615
        %5782 = vmatprep.subr.bf16.mxu0 %v4608
        %5783 = vmatpush2.bf16.msra.mxu0 %v4607
        %5784 = vmatprep.subr.bf16.mxu0 %v4600
        %5785 = vmatpush2.bf16.msra.mxu0 %v4599
        %5786 = vmatprep.subr.bf16.mxu0 %v4592
        %5787 = vmatpush2.bf16.msra.mxu0 %v4591
        %5788 = vmatprep.subr.bf16.mxu0 %v4584
        %5789 = vmatpush2.bf16.msra.mxu0 %v4583
        %5790 = vmatprep.subr.bf16.mxu0 %v4576
        %5791 = vmatpush2.bf16.msra.mxu0 %v4575
        %5792 = vmatprep.mubr.bf16.mxu0 %v2576
        %5793 = vmatmul.mubr.bf16.gmra.mxu0 %v2575
        %v5794 = vpop.f32.mrf.mxu0
        %v5795 = vadd.f32 %v5754, %v5794
        %v5796 = vpop.f32.mrf.mxu0
        %v5797 = vadd.f32 %v5756, %v5796
        %v5798 = vpop.f32.mrf.mxu0
        %v5799 = vpop.f32.mrf.mxu0
        %5800 = vdwg.mxu0
        %v5801 = vmax.f32 %v5303, 0.0
        %v5802 = vmax.f32 %v5305, 0.0
        %v5803 = vmax.f32 %v5467, 0.0
        %v5804 = vmax.f32 %v5469, 0.0
        %v5805 = vmax.f32 %v5631, 0.0
        %v5806 = vmax.f32 %v5633, 0.0
        %v5807 = vmax.f32 %v5795, 0.0
        %v5808 = vmax.f32 %v5797, 0.0
        %v5809 = vld [vmem:[#allocation2] sm:$0xff]
        %v5810 = vld [vmem:[#allocation2 + $0x8] sm:$0xff]
        %v5811 = vpack.c.bf16 %v5801, %v5801
        %v5812 = vpack.c.bf16 %v5802, %v5802
        %v5813 = vpack.c.bf16 %v5803, %v5803
        %v5814 = vpack.c.bf16 %v5804, %v5804
        %v5815 = vpack.c.bf16 %v5805, %v5805
        %v5816 = vpack.c.bf16 %v5806, %v5806
        %v5817 = vpack.c.bf16 %v5807, %v5807
        %v5818 = vpack.c.bf16 %v5808, %v5808
        %v5819 = vld [vmem:[%s416] sm:$0xff]
        %v5820 = vld [vmem:[%s416 + $0x8] sm:$0xff]
        %v5821 = vld [vmem:[%s416 + $0x10] sm:$0xff]
        %v5822 = vld [vmem:[%s416 + $0x18] sm:$0xff]
        %v5823 = vld [vmem:[%s416 + $0x20] sm:$0xff]
        %v5824 = vld [vmem:[%s416 + $0x28] sm:$0xff]
        %v5825 = vld [vmem:[%s416 + $0x30] sm:$0xff]
        %v5826 = vld [vmem:[%s416 + $0x38] sm:$0xff]
        %v5827 = vld [vmem:[%s416 + $0x40] sm:$0xff]
        %v5828 = vld [vmem:[%s416 + $0x48] sm:$0xff]
        %v5829 = vld [vmem:[%s416 + $0x50] sm:$0xff]
        %v5830 = vld [vmem:[%s416 + $0x58] sm:$0xff]
        %v5831 = vld [vmem:[%s416 + $0x60] sm:$0xff]
        %v5832 = vld [vmem:[%s416 + $0x68] sm:$0xff]
        %v5833 = vld [vmem:[%s416 + $0x70] sm:$0xff]
        %v5834 = vld [vmem:[%s416 + $0x78] sm:$0xff]
        %v5835 = vld [vmem:[%s416 + $0x80] sm:$0xff]
        %v5836 = vld [vmem:[%s416 + $0x88] sm:$0xff]
        %v5837 = vld [vmem:[%s416 + $0x90] sm:$0xff]
        %v5838 = vld [vmem:[%s416 + $0x98] sm:$0xff]
        %v5839 = vld [vmem:[%s416 + $0xa0] sm:$0xff]
        %v5840 = vld [vmem:[%s416 + $0xa8] sm:$0xff]
        %v5841 = vld [vmem:[%s416 + $0xb0] sm:$0xff]
        %v5842 = vld [vmem:[%s416 + $0xb8] sm:$0xff]
        %v5843 = vld [vmem:[%s416 + $0xc0] sm:$0xff]
        %v5844 = vld [vmem:[%s416 + $0xc8] sm:$0xff]
        %v5845 = vld [vmem:[%s416 + $0xd0] sm:$0xff]
        %v5846 = vld [vmem:[%s416 + $0xd8] sm:$0xff]
        %v5847 = vld [vmem:[%s416 + $0xe0] sm:$0xff]
        %v5848 = vld [vmem:[%s416 + $0xe8] sm:$0xff]
        %v5849 = vld [vmem:[%s416 + $0xf0] sm:$0xff]
        %v5850 = vld [vmem:[%s416 + $0xf8] sm:$0xff]
        %v5851 = vld [vmem:[%s416 + $0x100] sm:$0xff]
        %v5852 = vld [vmem:[%s416 + $0x108] sm:$0xff]
        %v5853 = vld [vmem:[%s416 + $0x110] sm:$0xff]
        %v5854 = vld [vmem:[%s416 + $0x118] sm:$0xff]
        %v5855 = vld [vmem:[%s416 + $0x120] sm:$0xff]
        %v5856 = vld [vmem:[%s416 + $0x128] sm:$0xff]
        %v5857 = vld [vmem:[%s416 + $0x130] sm:$0xff]
        %v5858 = vld [vmem:[%s416 + $0x138] sm:$0xff]
        %v5859 = vld [vmem:[%s416 + $0x140] sm:$0xff]
        %v5860 = vld [vmem:[%s416 + $0x148] sm:$0xff]
        %v5861 = vld [vmem:[%s416 + $0x150] sm:$0xff]
        %v5862 = vld [vmem:[%s416 + $0x158] sm:$0xff]
        %v5863 = vld [vmem:[%s416 + $0x160] sm:$0xff]
        %v5864 = vld [vmem:[%s416 + $0x168] sm:$0xff]
        %v5865 = vld [vmem:[%s416 + $0x170] sm:$0xff]
        %v5866 = vld [vmem:[%s416 + $0x178] sm:$0xff]
        %v5867 = vld [vmem:[%s416 + $0x180] sm:$0xff]
        %v5868 = vld [vmem:[%s416 + $0x188] sm:$0xff]
        %v5869 = vld [vmem:[%s416 + $0x190] sm:$0xff]
        %v5870 = vld [vmem:[%s416 + $0x198] sm:$0xff]
        %v5871 = vld [vmem:[%s416 + $0x1a0] sm:$0xff]
        %v5872 = vld [vmem:[%s416 + $0x1a8] sm:$0xff]
        %v5873 = vld [vmem:[%s416 + $0x1b0] sm:$0xff]
        %v5874 = vld [vmem:[%s416 + $0x1b8] sm:$0xff]
        %v5875 = vld [vmem:[%s416 + $0x1c0] sm:$0xff]
        %v5876 = vld [vmem:[%s416 + $0x1c8] sm:$0xff]
        %v5877 = vld [vmem:[%s416 + $0x1d0] sm:$0xff]
        %v5878 = vld [vmem:[%s416 + $0x1d8] sm:$0xff]
        %v5879 = vld [vmem:[%s416 + $0x1e0] sm:$0xff]
        %v5880 = vld [vmem:[%s416 + $0x1e8] sm:$0xff]
        %v5881 = vld [vmem:[%s416 + $0x1f0] sm:$0xff]
        %v5882 = vld [vmem:[%s416 + $0x1f8] sm:$0xff]
        %v5883 = vld [vmem:[%s416 + $0x200] sm:$0xff]
        %v5884 = vld [vmem:[%s416 + $0x208] sm:$0xff]
        %v5885 = vld [vmem:[%s416 + $0x210] sm:$0xff]
        %v5886 = vld [vmem:[%s416 + $0x218] sm:$0xff]
        %v5887 = vld [vmem:[%s416 + $0x220] sm:$0xff]
        %v5888 = vld [vmem:[%s416 + $0x228] sm:$0xff]
        %v5889 = vld [vmem:[%s416 + $0x230] sm:$0xff]
        %v5890 = vld [vmem:[%s416 + $0x238] sm:$0xff]
        %v5891 = vld [vmem:[%s416 + $0x240] sm:$0xff]
        %v5892 = vld [vmem:[%s416 + $0x248] sm:$0xff]
        %v5893 = vld [vmem:[%s416 + $0x250] sm:$0xff]
        %v5894 = vld [vmem:[%s416 + $0x258] sm:$0xff]
        %v5895 = vld [vmem:[%s416 + $0x260] sm:$0xff]
        %v5896 = vld [vmem:[%s416 + $0x268] sm:$0xff]
        %v5897 = vld [vmem:[%s416 + $0x270] sm:$0xff]
        %v5898 = vld [vmem:[%s416 + $0x278] sm:$0xff]
        %v5899 = vld [vmem:[%s416 + $0x280] sm:$0xff]
        %v5900 = vld [vmem:[%s416 + $0x288] sm:$0xff]
        %v5901 = vld [vmem:[%s416 + $0x290] sm:$0xff]
        %v5902 = vld [vmem:[%s416 + $0x298] sm:$0xff]
        %v5903 = vld [vmem:[%s416 + $0x2a0] sm:$0xff]
        %v5904 = vld [vmem:[%s416 + $0x2a8] sm:$0xff]
        %v5905 = vld [vmem:[%s416 + $0x2b0] sm:$0xff]
        %v5906 = vld [vmem:[%s416 + $0x2b8] sm:$0xff]
        %v5907 = vld [vmem:[%s416 + $0x2c0] sm:$0xff]
        %v5908 = vld [vmem:[%s416 + $0x2c8] sm:$0xff]
        %v5909 = vld [vmem:[%s416 + $0x2d0] sm:$0xff]
        %v5910 = vld [vmem:[%s416 + $0x2d8] sm:$0xff]
        %v5911 = vld [vmem:[%s416 + $0x2e0] sm:$0xff]
        %v5912 = vld [vmem:[%s416 + $0x2e8] sm:$0xff]
        %v5913 = vld [vmem:[%s416 + $0x2f0] sm:$0xff]
        %v5914 = vld [vmem:[%s416 + $0x2f8] sm:$0xff]
        %v5915 = vld [vmem:[%s416 + $0x300] sm:$0xff]
        %v5916 = vld [vmem:[%s416 + $0x308] sm:$0xff]
        %v5917 = vld [vmem:[%s416 + $0x310] sm:$0xff]
        %v5918 = vld [vmem:[%s416 + $0x318] sm:$0xff]
        %v5919 = vld [vmem:[%s416 + $0x320] sm:$0xff]
        %v5920 = vld [vmem:[%s416 + $0x328] sm:$0xff]
        %v5921 = vld [vmem:[%s416 + $0x330] sm:$0xff]
        %v5922 = vld [vmem:[%s416 + $0x338] sm:$0xff]
        %v5923 = vld [vmem:[%s416 + $0x340] sm:$0xff]
        %v5924 = vld [vmem:[%s416 + $0x348] sm:$0xff]
        %v5925 = vld [vmem:[%s416 + $0x350] sm:$0xff]
        %v5926 = vld [vmem:[%s416 + $0x358] sm:$0xff]
        %v5927 = vld [vmem:[%s416 + $0x360] sm:$0xff]
        %v5928 = vld [vmem:[%s416 + $0x368] sm:$0xff]
        %v5929 = vld [vmem:[%s416 + $0x370] sm:$0xff]
        %v5930 = vld [vmem:[%s416 + $0x378] sm:$0xff]
        %v5931 = vld [vmem:[%s416 + $0x380] sm:$0xff]
        %v5932 = vld [vmem:[%s416 + $0x388] sm:$0xff]
        %v5933 = vld [vmem:[%s416 + $0x390] sm:$0xff]
        %v5934 = vld [vmem:[%s416 + $0x398] sm:$0xff]
        %v5935 = vld [vmem:[%s416 + $0x3a0] sm:$0xff]
        %v5936 = vld [vmem:[%s416 + $0x3a8] sm:$0xff]
        %v5937 = vld [vmem:[%s416 + $0x3b0] sm:$0xff]
        %v5938 = vld [vmem:[%s416 + $0x3b8] sm:$0xff]
        %v5939 = vld [vmem:[%s416 + $0x3c0] sm:$0xff]
        %v5940 = vld [vmem:[%s416 + $0x3c8] sm:$0xff]
        %v5941 = vld [vmem:[%s416 + $0x3d0] sm:$0xff]
        %v5942 = vld [vmem:[%s416 + $0x3d8] sm:$0xff]
        %v5943 = vld [vmem:[%s416 + $0x3e0] sm:$0xff]
        %v5944 = vld [vmem:[%s416 + $0x3e8] sm:$0xff]
        %v5945 = vld [vmem:[%s416 + $0x3f0] sm:$0xff]
        %v5946 = vld [vmem:[%s416 + $0x3f8] sm:$0xff]
        %v6075 = vunpack.c.l.b16 %v5819
        %v6076 = vunpack.c.h.b16 %v5819
        %v6077 = vunpack.c.l.b16 %v5820
        %v6078 = vunpack.c.h.b16 %v5820
        %v6079 = vunpack.c.l.b16 %v5821
        %v6080 = vunpack.c.h.b16 %v5821
        %v6081 = vunpack.c.l.b16 %v5822
        %v6082 = vunpack.c.h.b16 %v5822
        %v6083 = vunpack.c.l.b16 %v5823
        %v6084 = vunpack.c.h.b16 %v5823
        %v6085 = vunpack.c.l.b16 %v5824
        %v6086 = vunpack.c.h.b16 %v5824
        %v6087 = vunpack.c.l.b16 %v5825
        %v6088 = vunpack.c.h.b16 %v5825
        %v6089 = vunpack.c.l.b16 %v5826
        %v6090 = vunpack.c.h.b16 %v5826
        %v6091 = vunpack.c.l.b16 %v5827
        %v6092 = vunpack.c.h.b16 %v5827
        %v6093 = vunpack.c.l.b16 %v5828
        %v6094 = vunpack.c.h.b16 %v5828
        %v6095 = vunpack.c.l.b16 %v5829
        %v6096 = vunpack.c.h.b16 %v5829
        %v6097 = vunpack.c.l.b16 %v5830
        %v6098 = vunpack.c.h.b16 %v5830
        %v6099 = vunpack.c.l.b16 %v5831
        %v6100 = vunpack.c.h.b16 %v5831
        %v6101 = vunpack.c.l.b16 %v5832
        %v6102 = vunpack.c.h.b16 %v5832
        %v6103 = vunpack.c.l.b16 %v5833
        %v6104 = vunpack.c.h.b16 %v5833
        %v6105 = vunpack.c.l.b16 %v5834
        %v6106 = vunpack.c.h.b16 %v5834
        %v6107 = vunpack.c.l.b16 %v5835
        %v6108 = vunpack.c.h.b16 %v5835
        %v6109 = vunpack.c.l.b16 %v5836
        %v6110 = vunpack.c.h.b16 %v5836
        %v6111 = vunpack.c.l.b16 %v5837
        %v6112 = vunpack.c.h.b16 %v5837
        %v6113 = vunpack.c.l.b16 %v5838
        %v6114 = vunpack.c.h.b16 %v5838
        %v6115 = vunpack.c.l.b16 %v5839
        %v6116 = vunpack.c.h.b16 %v5839
        %v6117 = vunpack.c.l.b16 %v5840
        %v6118 = vunpack.c.h.b16 %v5840
        %v6119 = vunpack.c.l.b16 %v5841
        %v6120 = vunpack.c.h.b16 %v5841
        %v6121 = vunpack.c.l.b16 %v5842
        %v6122 = vunpack.c.h.b16 %v5842
        %v6123 = vunpack.c.l.b16 %v5843
        %v6124 = vunpack.c.h.b16 %v5843
        %v6125 = vunpack.c.l.b16 %v5844
        %v6126 = vunpack.c.h.b16 %v5844
        %v6127 = vunpack.c.l.b16 %v5845
        %v6128 = vunpack.c.h.b16 %v5845
        %v6129 = vunpack.c.l.b16 %v5846
        %v6130 = vunpack.c.h.b16 %v5846
        %v6131 = vunpack.c.l.b16 %v5847
        %v6132 = vunpack.c.h.b16 %v5847
        %v6133 = vunpack.c.l.b16 %v5848
        %v6134 = vunpack.c.h.b16 %v5848
        %v6135 = vunpack.c.l.b16 %v5849
        %v6136 = vunpack.c.h.b16 %v5849
        %v6137 = vunpack.c.l.b16 %v5850
        %v6138 = vunpack.c.h.b16 %v5850
        %v6139 = vunpack.c.l.b16 %v5851
        %v6140 = vunpack.c.h.b16 %v5851
        %v6141 = vunpack.c.l.b16 %v5852
        %v6142 = vunpack.c.h.b16 %v5852
        %v6143 = vunpack.c.l.b16 %v5853
        %v6144 = vunpack.c.h.b16 %v5853
        %v6145 = vunpack.c.l.b16 %v5854
        %v6146 = vunpack.c.h.b16 %v5854
        %v6147 = vunpack.c.l.b16 %v5855
        %v6148 = vunpack.c.h.b16 %v5855
        %v6149 = vunpack.c.l.b16 %v5856
        %v6150 = vunpack.c.h.b16 %v5856
        %v6151 = vunpack.c.l.b16 %v5857
        %v6152 = vunpack.c.h.b16 %v5857
        %v6153 = vunpack.c.l.b16 %v5858
        %v6154 = vunpack.c.h.b16 %v5858
        %v6155 = vunpack.c.l.b16 %v5859
        %v6156 = vunpack.c.h.b16 %v5859
        %v6157 = vunpack.c.l.b16 %v5860
        %v6158 = vunpack.c.h.b16 %v5860
        %v6159 = vunpack.c.l.b16 %v5861
        %v6160 = vunpack.c.h.b16 %v5861
        %v6161 = vunpack.c.l.b16 %v5862
        %v6162 = vunpack.c.h.b16 %v5862
        %v6163 = vunpack.c.l.b16 %v5863
        %v6164 = vunpack.c.h.b16 %v5863
        %v6165 = vunpack.c.l.b16 %v5864
        %v6166 = vunpack.c.h.b16 %v5864
        %v6167 = vunpack.c.l.b16 %v5865
        %v6168 = vunpack.c.h.b16 %v5865
        %v6169 = vunpack.c.l.b16 %v5866
        %v6170 = vunpack.c.h.b16 %v5866
        %v6171 = vunpack.c.l.b16 %v5867
        %v6172 = vunpack.c.h.b16 %v5867
        %v6173 = vunpack.c.l.b16 %v5868
        %v6174 = vunpack.c.h.b16 %v5868
        %v6175 = vunpack.c.l.b16 %v5869
        %v6176 = vunpack.c.h.b16 %v5869
        %v6177 = vunpack.c.l.b16 %v5870
        %v6178 = vunpack.c.h.b16 %v5870
        %v6179 = vunpack.c.l.b16 %v5871
        %v6180 = vunpack.c.h.b16 %v5871
        %v6181 = vunpack.c.l.b16 %v5872
        %v6182 = vunpack.c.h.b16 %v5872
        %v6183 = vunpack.c.l.b16 %v5873
        %v6184 = vunpack.c.h.b16 %v5873
        %v6185 = vunpack.c.l.b16 %v5874
        %v6186 = vunpack.c.h.b16 %v5874
        %v6187 = vunpack.c.l.b16 %v5875
        %v6188 = vunpack.c.h.b16 %v5875
        %v6189 = vunpack.c.l.b16 %v5876
        %v6190 = vunpack.c.h.b16 %v5876
        %v6191 = vunpack.c.l.b16 %v5877
        %v6192 = vunpack.c.h.b16 %v5877
        %v6193 = vunpack.c.l.b16 %v5878
        %v6194 = vunpack.c.h.b16 %v5878
        %v6195 = vunpack.c.l.b16 %v5879
        %v6196 = vunpack.c.h.b16 %v5879
        %v6197 = vunpack.c.l.b16 %v5880
        %v6198 = vunpack.c.h.b16 %v5880
        %v6199 = vunpack.c.l.b16 %v5881
        %v6200 = vunpack.c.h.b16 %v5881
        %v6201 = vunpack.c.l.b16 %v5882
        %v6202 = vunpack.c.h.b16 %v5882
        %v6203 = vunpack.c.l.b16 %v5883
        %v6204 = vunpack.c.h.b16 %v5883
        %v6205 = vunpack.c.l.b16 %v5884
        %v6206 = vunpack.c.h.b16 %v5884
        %v6207 = vunpack.c.l.b16 %v5885
        %v6208 = vunpack.c.h.b16 %v5885
        %v6209 = vunpack.c.l.b16 %v5886
        %v6210 = vunpack.c.h.b16 %v5886
        %v6211 = vunpack.c.l.b16 %v5887
        %v6212 = vunpack.c.h.b16 %v5887
        %v6213 = vunpack.c.l.b16 %v5888
        %v6214 = vunpack.c.h.b16 %v5888
        %v6215 = vunpack.c.l.b16 %v5889
        %v6216 = vunpack.c.h.b16 %v5889
        %v6217 = vunpack.c.l.b16 %v5890
        %v6218 = vunpack.c.h.b16 %v5890
        %v6219 = vunpack.c.l.b16 %v5891
        %v6220 = vunpack.c.h.b16 %v5891
        %v6221 = vunpack.c.l.b16 %v5892
        %v6222 = vunpack.c.h.b16 %v5892
        %v6223 = vunpack.c.l.b16 %v5893
        %v6224 = vunpack.c.h.b16 %v5893
        %v6225 = vunpack.c.l.b16 %v5894
        %v6226 = vunpack.c.h.b16 %v5894
        %v6227 = vunpack.c.l.b16 %v5895
        %v6228 = vunpack.c.h.b16 %v5895
        %v6229 = vunpack.c.l.b16 %v5896
        %v6230 = vunpack.c.h.b16 %v5896
        %v6231 = vunpack.c.l.b16 %v5897
        %v6232 = vunpack.c.h.b16 %v5897
        %v6233 = vunpack.c.l.b16 %v5898
        %v6234 = vunpack.c.h.b16 %v5898
        %v6235 = vunpack.c.l.b16 %v5899
        %v6236 = vunpack.c.h.b16 %v5899
        %v6237 = vunpack.c.l.b16 %v5900
        %v6238 = vunpack.c.h.b16 %v5900
        %v6239 = vunpack.c.l.b16 %v5901
        %v6240 = vunpack.c.h.b16 %v5901
        %v6241 = vunpack.c.l.b16 %v5902
        %v6242 = vunpack.c.h.b16 %v5902
        %v6243 = vunpack.c.l.b16 %v5903
        %v6244 = vunpack.c.h.b16 %v5903
        %v6245 = vunpack.c.l.b16 %v5904
        %v6246 = vunpack.c.h.b16 %v5904
        %v6247 = vunpack.c.l.b16 %v5905
        %v6248 = vunpack.c.h.b16 %v5905
        %v6249 = vunpack.c.l.b16 %v5906
        %v6250 = vunpack.c.h.b16 %v5906
        %v6251 = vunpack.c.l.b16 %v5907
        %v6252 = vunpack.c.h.b16 %v5907
        %v6253 = vunpack.c.l.b16 %v5908
        %v6254 = vunpack.c.h.b16 %v5908
        %v6255 = vunpack.c.l.b16 %v5909
        %v6256 = vunpack.c.h.b16 %v5909
        %v6257 = vunpack.c.l.b16 %v5910
        %v6258 = vunpack.c.h.b16 %v5910
        %v6259 = vunpack.c.l.b16 %v5911
        %v6260 = vunpack.c.h.b16 %v5911
        %v6261 = vunpack.c.l.b16 %v5912
        %v6262 = vunpack.c.h.b16 %v5912
        %v6263 = vunpack.c.l.b16 %v5913
        %v6264 = vunpack.c.h.b16 %v5913
        %v6265 = vunpack.c.l.b16 %v5914
        %v6266 = vunpack.c.h.b16 %v5914
        %v6267 = vunpack.c.l.b16 %v5915
        %v6268 = vunpack.c.h.b16 %v5915
        %v6269 = vunpack.c.l.b16 %v5916
        %v6270 = vunpack.c.h.b16 %v5916
        %v6271 = vunpack.c.l.b16 %v5917
        %v6272 = vunpack.c.h.b16 %v5917
        %v6273 = vunpack.c.l.b16 %v5918
        %v6274 = vunpack.c.h.b16 %v5918
        %v6275 = vunpack.c.l.b16 %v5919
        %v6276 = vunpack.c.h.b16 %v5919
        %v6277 = vunpack.c.l.b16 %v5920
        %v6278 = vunpack.c.h.b16 %v5920
        %v6279 = vunpack.c.l.b16 %v5921
        %v6280 = vunpack.c.h.b16 %v5921
        %v6281 = vunpack.c.l.b16 %v5922
        %v6282 = vunpack.c.h.b16 %v5922
        %v6283 = vunpack.c.l.b16 %v5923
        %v6284 = vunpack.c.h.b16 %v5923
        %v6285 = vunpack.c.l.b16 %v5924
        %v6286 = vunpack.c.h.b16 %v5924
        %v6287 = vunpack.c.l.b16 %v5925
        %v6288 = vunpack.c.h.b16 %v5925
        %v6289 = vunpack.c.l.b16 %v5926
        %v6290 = vunpack.c.h.b16 %v5926
        %v6291 = vunpack.c.l.b16 %v5927
        %v6292 = vunpack.c.h.b16 %v5927
        %v6293 = vunpack.c.l.b16 %v5928
        %v6294 = vunpack.c.h.b16 %v5928
        %v6295 = vunpack.c.l.b16 %v5929
        %v6296 = vunpack.c.h.b16 %v5929
        %v6297 = vunpack.c.l.b16 %v5930
        %v6298 = vunpack.c.h.b16 %v5930
        %v6299 = vunpack.c.l.b16 %v5931
        %v6300 = vunpack.c.h.b16 %v5931
        %v6301 = vunpack.c.l.b16 %v5932
        %v6302 = vunpack.c.h.b16 %v5932
        %v6303 = vunpack.c.l.b16 %v5933
        %v6304 = vunpack.c.h.b16 %v5933
        %v6305 = vunpack.c.l.b16 %v5934
        %v6306 = vunpack.c.h.b16 %v5934
        %v6307 = vunpack.c.l.b16 %v5935
        %v6308 = vunpack.c.h.b16 %v5935
        %v6309 = vunpack.c.l.b16 %v5936
        %v6310 = vunpack.c.h.b16 %v5936
        %v6311 = vunpack.c.l.b16 %v5937
        %v6312 = vunpack.c.h.b16 %v5937
        %v6313 = vunpack.c.l.b16 %v5938
        %v6314 = vunpack.c.h.b16 %v5938
        %v6315 = vunpack.c.l.b16 %v5939
        %v6316 = vunpack.c.h.b16 %v5939
        %v6317 = vunpack.c.l.b16 %v5940
        %v6318 = vunpack.c.h.b16 %v5940
        %v6319 = vunpack.c.l.b16 %v5941
        %v6320 = vunpack.c.h.b16 %v5941
        %v6321 = vunpack.c.l.b16 %v5942
        %v6322 = vunpack.c.h.b16 %v5942
        %v6323 = vunpack.c.l.b16 %v5943
        %v6324 = vunpack.c.h.b16 %v5943
        %v6325 = vunpack.c.l.b16 %v5944
        %v6326 = vunpack.c.h.b16 %v5944
        %v6327 = vunpack.c.l.b16 %v5945
        %v6328 = vunpack.c.h.b16 %v5945
        %v6329 = vunpack.c.l.b16 %v5946
        %v6330 = vunpack.c.h.b16 %v5946
        %v6331 = vpack.c.b16 %v6077, %v6075
        %v6332 = vpack.c.b16 %v6078, %v6076
        %v6333 = vpack.c.b16 %v6081, %v6079
        %v6334 = vpack.c.b16 %v6082, %v6080
        %v6335 = vpack.c.b16 %v6085, %v6083
        %v6336 = vpack.c.b16 %v6086, %v6084
        %v6337 = vpack.c.b16 %v6089, %v6087
        %v6338 = vpack.c.b16 %v6090, %v6088
        %v6339 = vpack.c.b16 %v6093, %v6091
        %v6340 = vpack.c.b16 %v6094, %v6092
        %v6341 = vpack.c.b16 %v6097, %v6095
        %v6342 = vpack.c.b16 %v6098, %v6096
        %v6343 = vpack.c.b16 %v6101, %v6099
        %v6344 = vpack.c.b16 %v6102, %v6100
        %v6345 = vpack.c.b16 %v6105, %v6103
        %v6346 = vpack.c.b16 %v6106, %v6104
        %v6347 = vpack.c.b16 %v6109, %v6107
        %v6348 = vpack.c.b16 %v6110, %v6108
        %v6349 = vpack.c.b16 %v6113, %v6111
        %v6350 = vpack.c.b16 %v6114, %v6112
        %v6351 = vpack.c.b16 %v6117, %v6115
        %v6352 = vpack.c.b16 %v6118, %v6116
        %v6353 = vpack.c.b16 %v6121, %v6119
        %v6354 = vpack.c.b16 %v6122, %v6120
        %v6355 = vpack.c.b16 %v6125, %v6123
        %v6356 = vpack.c.b16 %v6126, %v6124
        %v6357 = vpack.c.b16 %v6129, %v6127
        %v6358 = vpack.c.b16 %v6130, %v6128
        %v6359 = vpack.c.b16 %v6133, %v6131
        %v6360 = vpack.c.b16 %v6134, %v6132
        %v6361 = vpack.c.b16 %v6137, %v6135
        %v6362 = vpack.c.b16 %v6138, %v6136
        %v6363 = vpack.c.b16 %v6141, %v6139
        %v6364 = vpack.c.b16 %v6142, %v6140
        %v6365 = vpack.c.b16 %v6145, %v6143
        %v6366 = vpack.c.b16 %v6146, %v6144
        %v6367 = vpack.c.b16 %v6149, %v6147
        %v6368 = vpack.c.b16 %v6150, %v6148
        %v6369 = vpack.c.b16 %v6153, %v6151
        %v6370 = vpack.c.b16 %v6154, %v6152
        %v6371 = vpack.c.b16 %v6157, %v6155
        %v6372 = vpack.c.b16 %v6158, %v6156
        %v6373 = vpack.c.b16 %v6161, %v6159
        %v6374 = vpack.c.b16 %v6162, %v6160
        %v6375 = vpack.c.b16 %v6165, %v6163
        %v6376 = vpack.c.b16 %v6166, %v6164
        %v6377 = vpack.c.b16 %v6169, %v6167
        %v6378 = vpack.c.b16 %v6170, %v6168
        %v6379 = vpack.c.b16 %v6173, %v6171
        %v6380 = vpack.c.b16 %v6174, %v6172
        %v6381 = vpack.c.b16 %v6177, %v6175
        %v6382 = vpack.c.b16 %v6178, %v6176
        %v6383 = vpack.c.b16 %v6181, %v6179
        %v6384 = vpack.c.b16 %v6182, %v6180
        %v6385 = vpack.c.b16 %v6185, %v6183
        %v6386 = vpack.c.b16 %v6186, %v6184
        %v6387 = vpack.c.b16 %v6189, %v6187
        %v6388 = vpack.c.b16 %v6190, %v6188
        %v6389 = vpack.c.b16 %v6193, %v6191
        %v6390 = vpack.c.b16 %v6194, %v6192
        %v6391 = vpack.c.b16 %v6197, %v6195
        %v6392 = vpack.c.b16 %v6198, %v6196
        %v6393 = vpack.c.b16 %v6201, %v6199
        %v6394 = vpack.c.b16 %v6202, %v6200
        %v6395 = vpack.c.b16 %v6205, %v6203
        %v6396 = vpack.c.b16 %v6206, %v6204
        %v6397 = vpack.c.b16 %v6209, %v6207
        %v6398 = vpack.c.b16 %v6210, %v6208
        %v6399 = vpack.c.b16 %v6213, %v6211
        %v6400 = vpack.c.b16 %v6214, %v6212
        %v6401 = vpack.c.b16 %v6217, %v6215
        %v6402 = vpack.c.b16 %v6218, %v6216
        %v6403 = vpack.c.b16 %v6221, %v6219
        %v6404 = vpack.c.b16 %v6222, %v6220
        %v6405 = vpack.c.b16 %v6225, %v6223
        %v6406 = vpack.c.b16 %v6226, %v6224
        %v6407 = vpack.c.b16 %v6229, %v6227
        %v6408 = vpack.c.b16 %v6230, %v6228
        %v6409 = vpack.c.b16 %v6233, %v6231
        %v6410 = vpack.c.b16 %v6234, %v6232
        %v6411 = vpack.c.b16 %v6237, %v6235
        %v6412 = vpack.c.b16 %v6238, %v6236
        %v6413 = vpack.c.b16 %v6241, %v6239
        %v6414 = vpack.c.b16 %v6242, %v6240
        %v6415 = vpack.c.b16 %v6245, %v6243
        %v6416 = vpack.c.b16 %v6246, %v6244
        %v6417 = vpack.c.b16 %v6249, %v6247
        %v6418 = vpack.c.b16 %v6250, %v6248
        %v6419 = vpack.c.b16 %v6253, %v6251
        %v6420 = vpack.c.b16 %v6254, %v6252
        %v6421 = vpack.c.b16 %v6257, %v6255
        %v6422 = vpack.c.b16 %v6258, %v6256
        %v6423 = vpack.c.b16 %v6261, %v6259
        %v6424 = vpack.c.b16 %v6262, %v6260
        %v6425 = vpack.c.b16 %v6265, %v6263
        %v6426 = vpack.c.b16 %v6266, %v6264
        %v6427 = vpack.c.b16 %v6269, %v6267
        %v6428 = vpack.c.b16 %v6270, %v6268
        %v6429 = vpack.c.b16 %v6273, %v6271
        %v6430 = vpack.c.b16 %v6274, %v6272
        %v6431 = vpack.c.b16 %v6277, %v6275
        %v6432 = vpack.c.b16 %v6278, %v6276
        %v6433 = vpack.c.b16 %v6281, %v6279
        %v6434 = vpack.c.b16 %v6282, %v6280
        %v6435 = vpack.c.b16 %v6285, %v6283
        %v6436 = vpack.c.b16 %v6286, %v6284
        %v6437 = vpack.c.b16 %v6289, %v6287
        %v6438 = vpack.c.b16 %v6290, %v6288
        %v6439 = vpack.c.b16 %v6293, %v6291
        %v6440 = vpack.c.b16 %v6294, %v6292
        %v6441 = vpack.c.b16 %v6297, %v6295
        %v6442 = vpack.c.b16 %v6298, %v6296
        %v6443 = vpack.c.b16 %v6301, %v6299
        %v6444 = vpack.c.b16 %v6302, %v6300
        %v6445 = vpack.c.b16 %v6305, %v6303
        %v6446 = vpack.c.b16 %v6306, %v6304
        %v6447 = vpack.c.b16 %v6309, %v6307
        %v6448 = vpack.c.b16 %v6310, %v6308
        %v6449 = vpack.c.b16 %v6313, %v6311
        %v6450 = vpack.c.b16 %v6314, %v6312
        %v6451 = vpack.c.b16 %v6317, %v6315
        %v6452 = vpack.c.b16 %v6318, %v6316
        %v6453 = vpack.c.b16 %v6321, %v6319
        %v6454 = vpack.c.b16 %v6322, %v6320
        %v6455 = vpack.c.b16 %v6325, %v6323
        %v6456 = vpack.c.b16 %v6326, %v6324
        %v6457 = vpack.c.b16 %v6329, %v6327
        %v6458 = vpack.c.b16 %v6330, %v6328
        %6587 = vmatprep.subr.bf16.mxu0 %v6346
        %6588 = vmatpush1.bf16.msra.mxu0 %v6345
        %6589 = vmatprep.subr.bf16.mxu0 %v6344
        %6590 = vmatpush1.bf16.msra.mxu0 %v6343
        %6591 = vmatprep.subr.bf16.mxu0 %v6342
        %6592 = vmatpush1.bf16.msra.mxu0 %v6341
        %6593 = vmatprep.subr.bf16.mxu0 %v6340
        %6594 = vmatpush1.bf16.msra.mxu0 %v6339
        %6595 = vmatprep.subr.bf16.mxu0 %v6338
        %6596 = vmatpush1.bf16.msra.mxu0 %v6337
        %6597 = vmatprep.subr.bf16.mxu0 %v6336
        %6598 = vmatpush1.bf16.msra.mxu0 %v6335
        %6599 = vmatprep.subr.bf16.mxu0 %v6334
        %6600 = vmatpush1.bf16.msra.mxu0 %v6333
        %6601 = vmatprep.subr.bf16.mxu0 %v6332
        %6602 = vmatpush1.bf16.msra.mxu0 %v6331
        %6603 = vmatprep.subr.bf16.mxu0 %v6362
        %6604 = vmatpush2.bf16.msra.mxu0 %v6361
        %6605 = vmatprep.subr.bf16.mxu0 %v6360
        %6606 = vmatpush2.bf16.msra.mxu0 %v6359
        %6607 = vmatprep.subr.bf16.mxu0 %v6358
        %6608 = vmatpush2.bf16.msra.mxu0 %v6357
        %6609 = vmatprep.subr.bf16.mxu0 %v6356
        %6610 = vmatpush2.bf16.msra.mxu0 %v6355
        %6611 = vmatprep.subr.bf16.mxu0 %v6354
        %6612 = vmatpush2.bf16.msra.mxu0 %v6353
        %6613 = vmatprep.subr.bf16.mxu0 %v6352
        %6614 = vmatpush2.bf16.msra.mxu0 %v6351
        %6615 = vmatprep.subr.bf16.mxu0 %v6350
        %6616 = vmatpush2.bf16.msra.mxu0 %v6349
        %6617 = vmatprep.subr.bf16.mxu0 %v6348
        %6618 = vmatpush2.bf16.msra.mxu0 %v6347
        %6619 = vmatprep.mubr.bf16.mxu0 %v5812
        %6620 = vmatmul.mubr.bf16.gmra.mxu0 %v5811
        %v6621 = vpop.f32.mrf.mxu0
        %v6622 = vadd.f32 0.0, %v6621
        %v6623 = vpop.f32.mrf.mxu0
        %v6624 = vadd.f32 0.0, %v6623
        %v6625 = vpop.f32.mrf.mxu0
        %v6626 = vpop.f32.mrf.mxu0
        %6627 = vdwg.mxu0
        %6628 = vmatprep.subr.bf16.mxu0 %v6378
        %6629 = vmatpush1.bf16.msra.mxu0 %v6377
        %6630 = vmatprep.subr.bf16.mxu0 %v6376
        %6631 = vmatpush1.bf16.msra.mxu0 %v6375
        %6632 = vmatprep.subr.bf16.mxu0 %v6374
        %6633 = vmatpush1.bf16.msra.mxu0 %v6373
        %6634 = vmatprep.subr.bf16.mxu0 %v6372
        %6635 = vmatpush1.bf16.msra.mxu0 %v6371
        %6636 = vmatprep.subr.bf16.mxu0 %v6370
        %6637 = vmatpush1.bf16.msra.mxu0 %v6369
        %6638 = vmatprep.subr.bf16.mxu0 %v6368
        %6639 = vmatpush1.bf16.msra.mxu0 %v6367
        %6640 = vmatprep.subr.bf16.mxu0 %v6366
        %6641 = vmatpush1.bf16.msra.mxu0 %v6365
        %6642 = vmatprep.subr.bf16.mxu0 %v6364
        %6643 = vmatpush1.bf16.msra.mxu0 %v6363
        %6644 = vmatprep.subr.bf16.mxu0 %v6394
        %6645 = vmatpush2.bf16.msra.mxu0 %v6393
        %6646 = vmatprep.subr.bf16.mxu0 %v6392
        %6647 = vmatpush2.bf16.msra.mxu0 %v6391
        %6648 = vmatprep.subr.bf16.mxu0 %v6390
        %6649 = vmatpush2.bf16.msra.mxu0 %v6389
        %6650 = vmatprep.subr.bf16.mxu0 %v6388
        %6651 = vmatpush2.bf16.msra.mxu0 %v6387
        %6652 = vmatprep.subr.bf16.mxu0 %v6386
        %6653 = vmatpush2.bf16.msra.mxu0 %v6385
        %6654 = vmatprep.subr.bf16.mxu0 %v6384
        %6655 = vmatpush2.bf16.msra.mxu0 %v6383
        %6656 = vmatprep.subr.bf16.mxu0 %v6382
        %6657 = vmatpush2.bf16.msra.mxu0 %v6381
        %6658 = vmatprep.subr.bf16.mxu0 %v6380
        %6659 = vmatpush2.bf16.msra.mxu0 %v6379
        %6660 = vmatprep.mubr.bf16.mxu0 %v5814
        %6661 = vmatmul.mubr.bf16.gmra.mxu0 %v5813
        %v6662 = vpop.f32.mrf.mxu0
        %v6663 = vadd.f32 %v6622, %v6662
        %v6664 = vpop.f32.mrf.mxu0
        %v6665 = vadd.f32 %v6624, %v6664
        %v6666 = vpop.f32.mrf.mxu0
        %v6667 = vpop.f32.mrf.mxu0
        %6668 = vdwg.mxu0
        %6669 = vmatprep.subr.bf16.mxu0 %v6410
        %6670 = vmatpush1.bf16.msra.mxu0 %v6409
        %6671 = vmatprep.subr.bf16.mxu0 %v6408
        %6672 = vmatpush1.bf16.msra.mxu0 %v6407
        %6673 = vmatprep.subr.bf16.mxu0 %v6406
        %6674 = vmatpush1.bf16.msra.mxu0 %v6405
        %6675 = vmatprep.subr.bf16.mxu0 %v6404
        %6676 = vmatpush1.bf16.msra.mxu0 %v6403
        %6677 = vmatprep.subr.bf16.mxu0 %v6402
        %6678 = vmatpush1.bf16.msra.mxu0 %v6401
        %6679 = vmatprep.subr.bf16.mxu0 %v6400
        %6680 = vmatpush1.bf16.msra.mxu0 %v6399
        %6681 = vmatprep.subr.bf16.mxu0 %v6398
        %6682 = vmatpush1.bf16.msra.mxu0 %v6397
        %6683 = vmatprep.subr.bf16.mxu0 %v6396
        %6684 = vmatpush1.bf16.msra.mxu0 %v6395
        %6685 = vmatprep.subr.bf16.mxu0 %v6426
        %6686 = vmatpush2.bf16.msra.mxu0 %v6425
        %6687 = vmatprep.subr.bf16.mxu0 %v6424
        %6688 = vmatpush2.bf16.msra.mxu0 %v6423
        %6689 = vmatprep.subr.bf16.mxu0 %v6422
        %6690 = vmatpush2.bf16.msra.mxu0 %v6421
        %6691 = vmatprep.subr.bf16.mxu0 %v6420
        %6692 = vmatpush2.bf16.msra.mxu0 %v6419
        %6693 = vmatprep.subr.bf16.mxu0 %v6418
        %6694 = vmatpush2.bf16.msra.mxu0 %v6417
        %6695 = vmatprep.subr.bf16.mxu0 %v6416
        %6696 = vmatpush2.bf16.msra.mxu0 %v6415
        %6697 = vmatprep.subr.bf16.mxu0 %v6414
        %6698 = vmatpush2.bf16.msra.mxu0 %v6413
        %6699 = vmatprep.subr.bf16.mxu0 %v6412
        %6700 = vmatpush2.bf16.msra.mxu0 %v6411
        %6701 = vmatprep.mubr.bf16.mxu0 %v5816
        %6702 = vmatmul.mubr.bf16.gmra.mxu0 %v5815
        %v6703 = vpop.f32.mrf.mxu0
        %v6704 = vadd.f32 %v6663, %v6703
        %v6705 = vpop.f32.mrf.mxu0
        %v6706 = vadd.f32 %v6665, %v6705
        %v6707 = vpop.f32.mrf.mxu0
        %v6708 = vpop.f32.mrf.mxu0
        %6709 = vdwg.mxu0
        %6710 = vmatprep.subr.bf16.mxu0 %v6442
        %6711 = vmatpush1.bf16.msra.mxu0 %v6441
        %6712 = vmatprep.subr.bf16.mxu0 %v6440
        %6713 = vmatpush1.bf16.msra.mxu0 %v6439
        %6714 = vmatprep.subr.bf16.mxu0 %v6438
        %6715 = vmatpush1.bf16.msra.mxu0 %v6437
        %6716 = vmatprep.subr.bf16.mxu0 %v6436
        %6717 = vmatpush1.bf16.msra.mxu0 %v6435
        %6718 = vmatprep.subr.bf16.mxu0 %v6434
        %6719 = vmatpush1.bf16.msra.mxu0 %v6433
        %6720 = vmatprep.subr.bf16.mxu0 %v6432
        %6721 = vmatpush1.bf16.msra.mxu0 %v6431
        %6722 = vmatprep.subr.bf16.mxu0 %v6430
        %6723 = vmatpush1.bf16.msra.mxu0 %v6429
        %6724 = vmatprep.subr.bf16.mxu0 %v6428
        %6725 = vmatpush1.bf16.msra.mxu0 %v6427
        %6726 = vmatprep.subr.bf16.mxu0 %v6458
        %6727 = vmatpush2.bf16.msra.mxu0 %v6457
        %6728 = vmatprep.subr.bf16.mxu0 %v6456
        %6729 = vmatpush2.bf16.msra.mxu0 %v6455
        %6730 = vmatprep.subr.bf16.mxu0 %v6454
        %6731 = vmatpush2.bf16.msra.mxu0 %v6453
        %6732 = vmatprep.subr.bf16.mxu0 %v6452
        %6733 = vmatpush2.bf16.msra.mxu0 %v6451
        %6734 = vmatprep.subr.bf16.mxu0 %v6450
        %6735 = vmatpush2.bf16.msra.mxu0 %v6449
        %6736 = vmatprep.subr.bf16.mxu0 %v6448
        %6737 = vmatpush2.bf16.msra.mxu0 %v6447
        %6738 = vmatprep.subr.bf16.mxu0 %v6446
        %6739 = vmatpush2.bf16.msra.mxu0 %v6445
        %6740 = vmatprep.subr.bf16.mxu0 %v6444
        %6741 = vmatpush2.bf16.msra.mxu0 %v6443
        %6742 = vmatprep.mubr.bf16.mxu0 %v5818
        %6743 = vmatmul.mubr.bf16.gmra.mxu0 %v5817
        %v6744 = vpop.f32.mrf.mxu0
        %v6745 = vadd.f32 %v6704, %v6744
        %v6746 = vpop.f32.mrf.mxu0
        %v6747 = vadd.f32 %v6706, %v6746
        %v6748 = vpop.f32.mrf.mxu0
        %v6749 = vpop.f32.mrf.mxu0
        %6750 = vdwg.mxu0
        %v6751 = vadd.f32 %v5809, %v6745
        %v6752 = vadd.f32 %v5810, %v6747
        %6753 = vst [vmem:[#allocation2] sm:$0xff] %v6751
        %6754 = vst [vmem:[#allocation2 + $0x8] sm:$0xff] %v6752
        %p6755 = scmp.eq.s32.totalorder %s30, 1
        // Predicated region
        $region97: #{tpu_custom_call.1} parent=55 // pred_check
          %p6756 = pneg %p6755
        $region98: #{tpu_custom_call.1} parent=55 // pred_check_branch
          %6758 = sbr.rel (%p6756) target = $region100
        $region99: #{tpu_custom_call.1} parent=55 // pred_region
          %v6759 = vld [vmem:[#allocation2] sm:$0xff]
          %v6760 = vld [vmem:[#allocation2 + $0x8] sm:$0xff]
          %v6761 = vld [vmem:[#allocation12] sm:$0x3]
          %v6763 = vlaneseq
          %v6764 = vshrl.u32 %v6763, 7
          %v6765 = vsub.s32 0, %v6764
          %v6766 = vrot.slane %v6761, %v6765
          %v6767 = vlaneseq
          %v6768 = vshrl.u32 %v6767, 7
          %v6769 = vsub.s32 1, %v6768
          %v6770 = vrot.slane %v6761, %v6769
          %v6773 = vadd.f32 %v6759, %v6766
          %v6774 = vadd.f32 %v6760, %v6770
          %v6775 = vmul.f32 %v6773, %v6773
          %v6776 = vmul.f32 %v6774, %v6774
          %v6777 = vadd.f32 %v6775, %v6776
          %6778 = vadd.xlane.f32.xlu0 %v6777
          %v6779 = vpop.xlane.xlu0 %6778
          %v6780 = vmax.f32 %v6779, 1e-24
          %v6781 = vrsqrt.pop %v6780
          %v6782 = vmul.f32 %v6773, %v6781
          %v6783 = vmul.f32 %v6774, %v6781
          %v6784 = vld [vmem:[#allocation3] sm:$0xff]
          %v6785 = vld [vmem:[#allocation3 + $0x8] sm:$0xff]
          %v6786 = vpack.c.bf16 %v6782, %v6782
          %v6787 = vpack.c.bf16 %v6783, %v6783
          %v6788 = vpack.c.bf16 %v6784, %v6784
          %v6789 = vpack.c.bf16 %v6785, %v6785
          %6790 = vmatprep.subr.bf16.mxu0 0
          %6791 = vmatpush1.bf16.xpose.msra.mxu0 0
          %6792 = vmatprep.subr.bf16.mxu0 0
          %6793 = vmatpush1.bf16.xpose.msra.mxu0 0
          %6794 = vmatprep.subr.bf16.mxu0 0
          %6795 = vmatpush1.bf16.xpose.msra.mxu0 0
          %6796 = vmatprep.subr.bf16.mxu0 0
          %6797 = vmatpush1.bf16.xpose.msra.mxu0 0
          %6798 = vmatprep.subr.bf16.mxu0 0
          %6799 = vmatpush1.bf16.xpose.msra.mxu0 0
          %6800 = vmatprep.subr.bf16.mxu0 0
          %6801 = vmatpush1.bf16.xpose.msra.mxu0 0
          %6802 = vmatprep.subr.bf16.mxu0 0
          %6803 = vmatpush1.bf16.xpose.msra.mxu0 0
          %6804 = vmatprep.subr.bf16.mxu0 %v6789
          %6805 = vmatpush1.bf16.xpose.msra.mxu0 %v6788
          %6806 = vmatprep.subr.bf16.mxu0 0
          %6807 = vmatpush2.bf16.xpose.msra.mxu0 0
          %6808 = vmatprep.subr.bf16.mxu0 0
          %6809 = vmatpush2.bf16.xpose.msra.mxu0 0
          %6810 = vmatprep.subr.bf16.mxu0 0
          %6811 = vmatpush2.bf16.xpose.msra.mxu0 0
          %6812 = vmatprep.subr.bf16.mxu0 0
          %6813 = vmatpush2.bf16.xpose.msra.mxu0 0
          %6814 = vmatprep.subr.bf16.mxu0 0
          %6815 = vmatpush2.bf16.xpose.msra.mxu0 0
          %6816 = vmatprep.subr.bf16.mxu0 0
          %6817 = vmatpush2.bf16.xpose.msra.mxu0 0
          %6818 = vmatprep.subr.bf16.mxu0 0
          %6819 = vmatpush2.bf16.xpose.msra.mxu0 0
          %6820 = vmatprep.subr.bf16.mxu0 0
          %6821 = vmatpush2.bf16.xpose.msra.mxu0 0
          %6822 = vmatprep.mubr.bf16.mxu0 %v6787
          %6823 = vmatmul.mubr.bf16.gmra.mxu0 %v6786
          %v6824 = vpop.f32.mrf.mxu0
          %v6825 = vadd.f32 0.0, %v6824
          %v6826 = vpop.f32.mrf.mxu0
          %v6827 = vpop.f32.mrf.mxu0
          %v6828 = vpop.f32.mrf.mxu0
          %6829 = vdwg.mxu0
          %6830 = vmatprep.subr.bf16.mxu0 0
          %6831 = vmatpush1.bf16.xpose.msra.mxu0 0
          %6832 = vmatprep.subr.bf16.mxu0 0
          %6833 = vmatpush1.bf16.xpose.msra.mxu0 0
          %6834 = vmatprep.subr.bf16.mxu0 0
          %6835 = vmatpush1.bf16.xpose.msra.mxu0 0
          %6836 = vmatprep.subr.bf16.mxu0 0
          %6837 = vmatpush1.bf16.xpose.msra.mxu0 0
          %6838 = vmatprep.subr.bf16.mxu0 0
          %6839 = vmatpush1.bf16.xpose.msra.mxu0 0
          %6840 = vmatprep.subr.bf16.mxu0 0
          %6841 = vmatpush1.bf16.xpose.msra.mxu0 0
          %6842 = vmatprep.subr.bf16.mxu0 0
          %6843 = vmatpush1.bf16.xpose.msra.mxu0 0
          %6844 = vmatprep.subr.bf16.mxu0 %v6787
          %6845 = vmatpush1.bf16.xpose.msra.mxu0 %v6786
          %6846 = vmatprep.subr.bf16.mxu0 0
          %6847 = vmatpush2.bf16.xpose.msra.mxu0 0
          %6848 = vmatprep.subr.bf16.mxu0 0
          %6849 = vmatpush2.bf16.xpose.msra.mxu0 0
          %6850 = vmatprep.subr.bf16.mxu0 0
          %6851 = vmatpush2.bf16.xpose.msra.mxu0 0
          %6852 = vmatprep.subr.bf16.mxu0 0
          %6853 = vmatpush2.bf16.xpose.msra.mxu0 0
          %6854 = vmatprep.subr.bf16.mxu0 0
          %6855 = vmatpush2.bf16.xpose.msra.mxu0 0
          %6856 = vmatprep.subr.bf16.mxu0 0
          %6857 = vmatpush2.bf16.xpose.msra.mxu0 0
          %6858 = vmatprep.subr.bf16.mxu0 0
          %6859 = vmatpush2.bf16.xpose.msra.mxu0 0
          %6860 = vmatprep.subr.bf16.mxu0 0
          %6861 = vmatpush2.bf16.xpose.msra.mxu0 0
          %6862 = vmatprep.mubr.bf16.mxu0 %v6787
          %6863 = vmatmul.mubr.bf16.gmra.mxu0 %v6786
          %v6864 = vpop.f32.mrf.mxu0
          %v6865 = vadd.f32 0.0, %v6864
          %v6866 = vpop.f32.mrf.mxu0
          %v6867 = vpop.f32.mrf.mxu0
          %v6868 = vpop.f32.mrf.mxu0
          %6869 = vdwg.mxu0
          %6870 = vmatprep.subr.bf16.mxu0 0
          %6871 = vmatpush1.bf16.xpose.msra.mxu0 0
          %6872 = vmatprep.subr.bf16.mxu0 0
          %6873 = vmatpush1.bf16.xpose.msra.mxu0 0
          %6874 = vmatprep.subr.bf16.mxu0 0
          %6875 = vmatpush1.bf16.xpose.msra.mxu0 0
          %6876 = vmatprep.subr.bf16.mxu0 0
          %6877 = vmatpush1.bf16.xpose.msra.mxu0 0
          %6878 = vmatprep.subr.bf16.mxu0 0
          %6879 = vmatpush1.bf16.xpose.msra.mxu0 0
          %6880 = vmatprep.subr.bf16.mxu0 0
          %6881 = vmatpush1.bf16.xpose.msra.mxu0 0
          %6882 = vmatprep.subr.bf16.mxu0 0
          %6883 = vmatpush1.bf16.xpose.msra.mxu0 0
          %6884 = vmatprep.subr.bf16.mxu0 %v6789
          %6885 = vmatpush1.bf16.xpose.msra.mxu0 %v6788
          %6886 = vmatprep.subr.bf16.mxu0 0
          %6887 = vmatpush2.bf16.xpose.msra.mxu0 0
          %6888 = vmatprep.subr.bf16.mxu0 0
          %6889 = vmatpush2.bf16.xpose.msra.mxu0 0
          %6890 = vmatprep.subr.bf16.mxu0 0
          %6891 = vmatpush2.bf16.xpose.msra.mxu0 0
          %6892 = vmatprep.subr.bf16.mxu0 0
          %6893 = vmatpush2.bf16.xpose.msra.mxu0 0
          %6894 = vmatprep.subr.bf16.mxu0 0
          %6895 = vmatpush2.bf16.xpose.msra.mxu0 0
          %6896 = vmatprep.subr.bf16.mxu0 0
          %6897 = vmatpush2.bf16.xpose.msra.mxu0 0
          %6898 = vmatprep.subr.bf16.mxu0 0
          %6899 = vmatpush2.bf16.xpose.msra.mxu0 0
          %6900 = vmatprep.subr.bf16.mxu0 0
          %6901 = vmatpush2.bf16.xpose.msra.mxu0 0
          %6902 = vmatprep.mubr.bf16.mxu0 %v6789
          %6903 = vmatmul.mubr.bf16.gmra.mxu0 %v6788
          %v6904 = vpop.f32.mrf.mxu0
          %v6905 = vadd.f32 0.0, %v6904
          %v6906 = vpop.f32.mrf.mxu0
          %v6907 = vpop.f32.mrf.mxu0
          %v6908 = vpop.f32.mrf.mxu0
          %6909 = vdwg.mxu0
          %v6910 = vmul.f32 %v6825, 100.0
          %v6911 = vmul.f32 %v6782, %v6784
          %v6912 = vmul.f32 %v6783, %v6785
          %v6913 = vadd.f32 %v6911, %v6912
          %6914 = vadd.xlane.f32.xlu0 %v6913
          %v6915 = vpop.xlane.xlu0 %6914
          %v6916 = vmul.f32 %v6915, 100.0
          %vm6917 = vcmask 64512
          %v6918 = vsel %vm6917, %v6910, -inf
          %6919 = vmax.xlane.f32.xlu0 %v6918
          %v6920 = vpop.xlane.xlu0 %6919
          %v6921 = vsub.f32 %v6910, %v6920
          %v6922 = vmul.f32 %v6921, 1.442695
          %v6923 = vpow.pop %v6922
          %v6924 = vsel %vm6917, %v6923, 0.0
          %6925 = vadd.xlane.f32.xlu0 %v6924
          %v6926 = vpop.xlane.xlu0 %6925
          %v6927 = vlog2.pop %v6926
          %v6928 = vmul.f32 %v6927, 0.6931472
          %v6929 = vadd.f32 %v6920, %v6928
          %v6930 = vrot.slane %v6918, 4
          %v6931 = vmax.f32 %v6918, %v6930
          %v6932 = vrot.slane %v6931, 2
          %v6933 = vmax.f32 %v6931, %v6932
          %v6934 = vrot.slane %v6933, 1
          %v6935 = vmax.f32 %v6933, %v6934
          %v6936 = vsub.f32 %v6910, %v6935
          %v6937 = vmul.f32 %v6936, 1.442695
          %v6938 = vpow.pop %v6937
          %v6939 = vsel %vm6917, %v6938, 0.0
          %v6940 = vrot.slane %v6939, 4
          %v6941 = vadd.f32 %v6939, %v6940
          %v6942 = vrot.slane %v6941, 2
          %v6943 = vadd.f32 %v6941, %v6942
          %v6944 = vrot.slane %v6943, 1
          %v6945 = vadd.f32 %v6943, %v6944
          %v6946 = vlog2.pop %v6945
          %v6947 = vmul.f32 %v6946, 0.6931472
          %v6948 = vadd.f32 %v6935, %v6947
          %vm6949 = vcmask 7168
          %v6950 = vsel %vm6949, %v6929, 0.0
          %6951 = vadd.xlane.f32.xlu0 %v6950
          %v6952 = vpop.xlane.xlu0 %6951
          %v6953 = vrot.slane %v6952, 4
          %v6954 = vadd.f32 %v6952, %v6953
          %v6955 = vrot.slane %v6954, 2
          %v6956 = vadd.f32 %v6954, %v6955
          %v6957 = vrot.slane %v6956, 1
          %v6958 = vadd.f32 %v6956, %v6957
          %s6959 = vtos %v6958
          %v6960 = vrcp.pop 8.0
          %s6961 = vtos %v6960
          %s6962 = smul.f32 %s6959, %s6961
          %vm6963 = vcmask 57344
          %v6964 = vsel %vm6963, %v6948, 0.0
          %6965 = vadd.xlane.f32.xlu0 %v6964
          %v6966 = vpop.xlane.xlu0 %6965
          %v6967 = vrot.slane %v6966, 4
          %v6968 = vadd.f32 %v6966, %v6967
          %v6969 = vrot.slane %v6968, 2
          %v6970 = vadd.f32 %v6968, %v6969
          %v6971 = vrot.slane %v6970, 1
          %v6972 = vadd.f32 %v6970, %v6971
          %s6973 = vtos %v6972
          %v6974 = vrcp.pop 8.0
          %s6975 = vtos %v6974
          %s6976 = smul.f32 %s6973, %s6975
          %s6977 = sadd.f32 %s6962, %s6976
          %s6978 = smul.f32 %s6977, 0.5
          %v6979 = vsel %vm6949, %v6916, 0.0
          %6980 = vadd.xlane.f32.xlu0 %v6979
          %v6981 = vpop.xlane.xlu0 %6980
          %v6982 = vrot.slane %v6981, 4
          %v6983 = vadd.f32 %v6981, %v6982
          %v6984 = vrot.slane %v6983, 2
          %v6985 = vadd.f32 %v6983, %v6984
          %v6986 = vrot.slane %v6985, 1
          %v6987 = vadd.f32 %v6985, %v6986
          %s6988 = vtos %v6987
          %v6989 = vrcp.pop 8.0
          %s6990 = vtos %v6989
          %s6991 = smul.f32 %s6988, %s6990
          %s6992 = ssub.f32 %s6978, %s6991
          %v6993 = vsub.f32 %v6865, %v6905
          %v6994 = vmul.f32 %v6993, %v6993
          %v6995 = vsel %vm6917, %v6994, 0.0
          %6996 = vadd.xlane.f32.xlu0 %v6995
          %v6997 = vpop.xlane.xlu0 %6996
          %v6998 = vrot.slane %v6997, 4
          %v6999 = vadd.f32 %v6997, %v6998
          %v7000 = vrot.slane %v6999, 2
          %v7001 = vadd.f32 %v6999, %v7000
          %v7002 = vrot.slane %v7001, 1
          %v7003 = vadd.f32 %v7001, %v7002
          %s7004 = vtos %v7003
          %v7005 = vrcp.pop 64.0
          %s7006 = vtos %v7005
          %s7007 = smul.f32 %s7004, %s7006
          %s7008 = smul.f32 %s7007, 8.0
          %7009 = vxpose.xlu0.b32.start [1/16] %v6825, 128
          %7010 = vxpose.xlu0.b32.cont [2/16] 0.0, 128
          %7011 = vxpose.xlu0.b32.cont [3/16] 0.0, 128
          %7012 = vxpose.xlu0.b32.cont [4/16] 0.0, 128
          %7013 = vxpose.xlu0.b32.cont [5/16] 0.0, 128
          %7014 = vxpose.xlu0.b32.cont [6/16] 0.0, 128
          %7015 = vxpose.xlu0.b32.cont [7/16] 0.0, 128
          %7016 = vxpose.xlu0.b32.cont [8/16] 0.0, 128
          %7017 = vxpose.xlu0.b32.cont [9/16] 0.0, 128
          %7018 = vxpose.xlu0.b32.cont [10/16] 0.0, 128
          %7019 = vxpose.xlu0.b32.cont [11/16] 0.0, 128
          %7020 = vxpose.xlu0.b32.cont [12/16] 0.0, 128
          %7021 = vxpose.xlu0.b32.cont [13/16] 0.0, 128
          %7022 = vxpose.xlu0.b32.cont [14/16] 0.0, 128
          %7023 = vxpose.xlu0.b32.cont [15/16] 0.0, 128
          %7024 = vxpose.xlu0.b32.end [16/16] 0.0, 128
          %v7025 = vpop.trf.xlu0
          %v7026 = vpop.trf.xlu0
          %v7027 = vpop.trf.xlu0
          %v7028 = vpop.trf.xlu0
          %v7029 = vpop.trf.xlu0
          %v7030 = vpop.trf.xlu0
          %v7031 = vpop.trf.xlu0
          %v7032 = vpop.trf.xlu0
          %v7033 = vpop.trf.xlu0
          %v7034 = vpop.trf.xlu0
          %v7035 = vpop.trf.xlu0
          %v7036 = vpop.trf.xlu0
          %v7037 = vpop.trf.xlu0
          %v7038 = vpop.trf.xlu0
          %v7039 = vpop.trf.xlu0
          %v7040 = vpop.trf.xlu0
          %v7041 = vsub.f32 %v6825, %v7025
          %v7042 = vmul.f32 %v7041, %v7041
          %v7043 = vsel %vm6917, %v7042, 0.0
          %7044 = vadd.xlane.f32.xlu0 %v7043
          %v7045 = vpop.xlane.xlu0 %7044
          %v7046 = vrot.slane %v7045, 4
          %v7047 = vadd.f32 %v7045, %v7046
          %v7048 = vrot.slane %v7047, 2
          %v7049 = vadd.f32 %v7047, %v7048
          %v7050 = vrot.slane %v7049, 1
          %v7051 = vadd.f32 %v7049, %v7050
          %s7052 = vtos %v7051
          %v7053 = vrcp.pop 64.0
          %s7054 = vtos %v7053
          %s7055 = smul.f32 %s7052, %s7054
          %s7056 = smul.f32 %s7055, 8.0
          %s7057 = smul.f32 %s7008, 0.25
          %s7058 = sadd.f32 %s6992, %s7057
          %s7059 = smul.f32 %s7056, 0.25
          %s7060 = sadd.f32 %s7058, %s7059
          %s7061 = scalar_lea.smem [#allocation19], 0
          %7062 = sst [smem:[%s7061]] %s7060
        $region100: #{tpu_custom_call.1} parent=55 // pred_fallthru
          _
        // Predicated region
        $region101: #{tpu_custom_call.1} parent=55 // pred_check
          %p7063 = pneg %p242
        $region102: #{tpu_custom_call.1} parent=55 // pred_check_branch
          %7065 = sbr.rel (%p7063) target = $region104
        $region103: #{tpu_custom_call.1} parent=55 // pred_region
          %s7067 = ssub.s32 16, 16
          %7068 = vsyncadd [#allocation6], %s7067
          %7071 = dma.smem_to_hbm [#allocation19], 16, %s9, [#allocation6]
        $region104: #{tpu_custom_call.1} parent=55 // pred_fallthru
          _
        // Predicated region
        $region105: #{tpu_custom_call.1} parent=55 // pred_check
          %p7072 = pneg %p242
        $region106: #{tpu_custom_call.1} parent=55 // pred_check_branch
          %7074 = sbr.rel (%p7072) target = $region108
        $region107: #{tpu_custom_call.1} parent=55 // pred_region
          %7075 = dma.done [#allocation6], 16
        $region108: #{tpu_custom_call.1} parent=55 // pred_fallthru
          _
        %7076 = sfence
      $region56: #{tpu_custom_call.1} parent=5 // pred_fallthru
        _
      %p7077 = scmp.le.s32.totalorder 2, %s25
      // Predicated region
      $region109: #{tpu_custom_call.1} parent=5 // pred_check
        %p7078 = pneg %p7077
      $region110: #{tpu_custom_call.1} parent=5 // pred_check_branch
        %7080 = sbr.rel (%p7078) target = $region112
      $region111: #{tpu_custom_call.1} parent=5 // pred_region
        %s7081 = ssub.s32 %s25, 2
      $region112: #{tpu_custom_call.1} parent=5 // pred_fallthru
        _
    $region6: #{tpu_custom_call.1} parent=1 // loop_footer
      %s29 = sadd.s32 1, %s25
    $region7: #{tpu_custom_call.1} parent=1 // loop_footer_branch
      %24 = sbr.rel target = $region3
    $region8: #{tpu_custom_call.1} parent=1 // loop_exit
      _
    %7082 = vsyncpa [#allocation5], 1
    %s7083 = scalar_lea.sflag [#allocation5], 1
    %7084 = vsyncpa %s7083, 1
    %7085 = vsyncpa [#allocation8], 1
    %s7086 = scalar_lea.sflag [#allocation8], 1
    %7087 = vsyncpa %s7086, 1
    %7088 = vsyncpa [#allocation11], 1
    %s7089 = scalar_lea.sflag [#allocation11], 1
    %7090 = vsyncpa %s7089, 1
    %7091 = vsyncpa [#allocation14], 1
    %7092 = vsyncpa [#allocation17], 1
    %7093 = vsyncpa [#allocation6], 1
    %s7094 = scalar_lea.sflag [#allocation6], 1
    %7095 = vsyncpa %s7094, 1

</llo_original>
